<compile_context>
chip_gen: v7x
topology: tpu7x:2x2x1
jax: 0.10.0
libtpu: 0.0.40
codegen_flags: <defaults>
</compile_context>

<pallas_src>
import functools

import jax
import jax.numpy as jnp
from jax import lax
from jax.experimental import pallas as pl
from jax.experimental.pallas import tpu as pltpu


def _mhsa_kernel(q_ref, k_ref, v_ref, wq_ref, wk_ref, wv_ref, wf_ref, bf_ref,
                 o_ref, *, heads):
    """One tile of B batch elements per grid step.

    q_ref/k_ref/v_ref : (B, L, E) lane-dense activation tiles.
    wq/wk/wv          : (E, E) block-diagonal per-head projection weights
                        (softmax 1/sqrt(E) scale pre-folded into wq).
    wf                : (E, E) fc_out weight;  bf: (1, E) fc_out bias.
    o_ref             : (B, Lq, E) output tile (fc_out already applied).
    """
    B, Lq, E = q_ref.shape
    Lk = k_ref.shape[1]
    D = E // heads

    # Projections as single (B*L, E) @ (E, E) matmuls: rows amortised over the
    # whole batch tile -> near-full MXU row occupancy instead of L rows/step.
    q = jnp.dot(q_ref[...].reshape(B * Lq, E), wq_ref[...],
                preferred_element_type=jnp.float32).reshape(B, Lq, E)
    k = jnp.dot(k_ref[...].reshape(B * Lk, E), wk_ref[...],
                preferred_element_type=jnp.float32).reshape(B, Lk, E)
    v = jnp.dot(v_ref[...].reshape(B * Lk, E), wv_ref[...],
                preferred_element_type=jnp.float32).reshape(B, Lk, E)

    wf = wf_ref[...]                                            # load once

    # fc_out fused into the head loop: acc starts at the bias, each head adds
    # (att @ v_h) @ wf[h*D:(h+1)*D, :]  -> no concat / lane shuffles.
    acc = jnp.broadcast_to(bf_ref[...], (B * Lq, E)).astype(jnp.float32)

    for h in range(heads):
        sl = slice(h * D, (h + 1) * D)
        qh, kh, vh = q[:, :, sl], k[:, :, sl], v[:, :, sl]      # static lane slices
        # energy[b, q, k] = qh[b, q, :] . kh[b, k, :]   (scale folded into wq)
        energy = lax.dot_general(
            qh, kh,
            dimension_numbers=(((2,), (2,)), ((0,), (0,))),
            preferred_element_type=jnp.float32)                 # (B, Lq, Lk)
        # numerically-stabilised softmax over keys (exact divide, matches torch)
        m = jnp.max(energy, axis=-1, keepdims=True)
        e = jnp.exp(energy - m)
        att = e / jnp.sum(e, axis=-1, keepdims=True)
        ctx = lax.dot_general(
            att, vh,
            dimension_numbers=(((2,), (1,)), ((0,), (0,))),
            preferred_element_type=jnp.float32)                 # (B, Lq, D)
        acc = acc + jnp.dot(ctx.reshape(B * Lq, D), wf[sl, :],
                            preferred_element_type=jnp.float32)

    o_ref[...] = acc.reshape(B, Lq, E)                          # lane-dense store


def _block_diag(w, heads):
    """Repeat a (D, D) per-head weight H times along the diagonal -> (E, E)."""
    d = w.shape[0]
    eye = jnp.eye(heads, dtype=w.dtype)
    return jnp.einsum("ij,kl->ikjl", eye, w).reshape(heads * d, heads * d)


def _pick_batch_tile(n, seq_len, target_rows=256):
    """Smallest divisor of n giving >= target_rows matmul rows per grid step
    (fills the 256-wide MXU on v6e/v7x) while keeping >= 2 grid steps so the
    batch axis can still be sharded across v7x's two TensorCores."""
    best = 1
    for b in range(1, n + 1):
        if n % b:
            continue
        if n // b < 2 and n > 1:        # keep >= 2 steps when possible
            continue
        best = b
        if b * seq_len >= target_rows:
            break
    return best


def multi_head_self_attention(values, keys, queries, params, heads):
    N, Lq, E = queries.shape
    Lk = keys.shape[1]
    Lv = values.shape[1]
    assert (E // heads) * heads == E
    assert Lk == Lv

    scale = 1.0 / (E ** 0.5)            # exact torch scaling: 1/sqrt(embed_size)

    # One-time wrapper-side expansion so the kernel sees lane-dense (E, E)
    # weights; the softmax scale is folded into wq for free.
    wq = _block_diag(params["wq"], heads) * jnp.asarray(scale, params["wq"].dtype)
    wk = _block_diag(params["wk"], heads)
    wv = _block_diag(params["wv"], heads)

    B = _pick_batch_tile(N, Lq)
    grid = (N // B,)

    out = pl.pallas_call(
        functools.partial(_mhsa_kernel, heads=heads),
        out_shape=jax.ShapeDtypeStruct((N, Lq, E), jnp.float32),
        grid=grid,
        in_specs=[
            pl.BlockSpec((B, Lq, E), lambda n: (n, 0, 0)),   # queries
            pl.BlockSpec((B, Lk, E), lambda n: (n, 0, 0)),   # keys
            pl.BlockSpec((B, Lv, E), lambda n: (n, 0, 0)),   # values
            pl.BlockSpec((E, E), lambda n: (0, 0)),          # wq (scaled block-diag)
            pl.BlockSpec((E, E), lambda n: (0, 0)),          # wk (block-diag)
            pl.BlockSpec((E, E), lambda n: (0, 0)),          # wv (block-diag)
            pl.BlockSpec((E, E), lambda n: (0, 0)),          # w_fc
            pl.BlockSpec((1, E), lambda n: (0, 0)),          # b_fc
        ],
        out_specs=pl.BlockSpec((B, Lq, E), lambda n: (n, 0, 0)),
        compiler_params=pltpu.CompilerParams(
            dimension_semantics=("parallel",)),              # batch tiles across TCs
    )(queries, keys, values, wq, wk, wv, params["w_fc"], params["b_fc"])

    return out


def _reference(values, keys, queries, params, heads):
    """Pure-JAX mirror of the (consistent) torch forward, for validation."""
    N, Lq, E = queries.shape
    D = E // heads

    def split(x):
        return x.reshape(x.shape[0], x.shape[1], heads, D)

    v = split(values) @ params["wv"]
    k = split(keys) @ params["wk"]
    q = split(queries) @ params["wq"]
    energy = jnp.einsum("nqhd,nkhd->nhqk", q, k)
    att = jax.nn.softmax(energy / (E ** 0.5), axis=3)
    out = jnp.einsum("nhql,nlhd->nqhd", att, v).reshape(N, Lq, E)
    return out @ params["w_fc"] + params["b_fc"][0]


if __name__ == "__main__":
    # Small shapes consistent with the module (original: N=64, L=10, E=256, H=8).
    # E kept a multiple of 128 and L a multiple of 8 so every tile is lane/
    # sublane-dense (unmasked stores), per perf review.
    embed_size, heads = 128, 4
    N, L = 8, 8
    D = embed_size // heads

    key = jax.random.PRNGKey(0)
    kv, kk, kq, kwv, kwk, kwq, kwf, kbf = jax.random.split(key, 8)

    values = jax.random.uniform(kv, (N, L, embed_size), dtype=jnp.float32)
    keys_in = jax.random.uniform(kk, (N, L, embed_size), dtype=jnp.float32)
    queries = jax.random.uniform(kq, (N, L, embed_size), dtype=jnp.float32)

    # Deterministic parameter init (PyTorch-Linear-style uniform bounds).
    bd = 1.0 / (D ** 0.5)
    be = 1.0 / (embed_size ** 0.5)
    params = {
        "wq": jax.random.uniform(kwq, (D, D), jnp.float32, -bd, bd),
        "wk": jax.random.uniform(kwk, (D, D), jnp.float32, -bd, bd),
        "wv": jax.random.uniform(kwv, (D, D), jnp.float32, -bd, bd),
        "w_fc": jax.random.uniform(kwf, (embed_size, embed_size), jnp.float32, -be, be),
        "b_fc": jax.random.uniform(kbf, (1, embed_size), jnp.float32, -be, be),
    }

    out = multi_head_self_attention(values, keys_in, queries, params, heads)
    out = jax.block_until_ready(out)

    ref = _reference(values, keys_in, queries, params, heads)
    assert out.shape == (N, L, embed_size)
    # Tolerance covers default-precision MXU matmuls in both kernel and reference.
    assert jnp.allclose(out, ref, atol=2e-3, rtol=2e-3), float(
        jnp.max(jnp.abs(out - ref)))
    print("KERNEL_OK")
</pallas_src>

<mosaic_0001>
module attributes {stable_mosaic.version = 11 : i64} {
  func.func @_mhsa_kernel(%arg0: i32, %arg1: memref<4x8x128xf32, #tpu.memory_space<vmem>>, %arg2: memref<4x8x128xf32, #tpu.memory_space<vmem>>, %arg3: memref<4x8x128xf32, #tpu.memory_space<vmem>>, %arg4: memref<128x128xf32, #tpu.memory_space<vmem>>, %arg5: memref<128x128xf32, #tpu.memory_space<vmem>>, %arg6: memref<128x128xf32, #tpu.memory_space<vmem>>, %arg7: memref<128x128xf32, #tpu.memory_space<vmem>>, %arg8: memref<1x128xf32, #tpu.memory_space<vmem>>, %arg9: memref<4x8x128xf32, #tpu.memory_space<vmem>>) attributes {dimension_semantics = [#tpu.dimension_semantics<parallel>], iteration_bounds = array<i64: 2>, scalar_prefetch = 0 : i64, scratch_operands = 0 : i64, tpu.core_type = #tpu.core_type<tc>, window_params = [{transform_indices = @transform_0, window_bounds = array<i64: 4, 8, 128>}, {transform_indices = @transform_1, window_bounds = array<i64: 4, 8, 128>}, {transform_indices = @transform_2, window_bounds = array<i64: 4, 8, 128>}, {pipeline_mode = #tpu.pipeline_mode<synchronous>, transform_indices = @transform_3, window_bounds = array<i64: 128, 128>}, {pipeline_mode = #tpu.pipeline_mode<synchronous>, transform_indices = @transform_4, window_bounds = array<i64: 128, 128>}, {pipeline_mode = #tpu.pipeline_mode<synchronous>, transform_indices = @transform_5, window_bounds = array<i64: 128, 128>}, {pipeline_mode = #tpu.pipeline_mode<synchronous>, transform_indices = @transform_6, window_bounds = array<i64: 128, 128>}, {pipeline_mode = #tpu.pipeline_mode<synchronous>, transform_indices = @transform_7, window_bounds = array<i64: 1, 128>}, {transform_indices = @transform_8, window_bounds = array<i64: 4, 8, 128>}]} {
    %c0 = arith.constant 0 : index
    %c0_0 = arith.constant 0 : index
    %c0_1 = arith.constant 0 : index
    %0 = vector.load %arg1[%c0, %c0_0, %c0_1] : memref<4x8x128xf32, #tpu.memory_space<vmem>>, vector<4x8x128xf32>
    %1 = vector.shape_cast %0 : vector<4x8x128xf32> to vector<32x128xf32>
    %c0_2 = arith.constant 0 : index
    %c0_3 = arith.constant 0 : index
    %2 = vector.load %arg4[%c0_2, %c0_3] : memref<128x128xf32, #tpu.memory_space<vmem>>, vector<128x128xf32>
    %cst = arith.constant dense<0.000000e+00> : vector<32x128xf32>
    %3 = tpu.matmul %1, %2, %cst {dimension_numbers = #tpu.dot_dimension_numbers<[1], [0], [0], [1], [0, 0, 1, 1], [], []>} : vector<32x128xf32>, vector<128x128xf32>, vector<32x128xf32> -> vector<32x128xf32>
    %4 = vector.shape_cast %3 : vector<32x128xf32> to vector<4x8x128xf32>
    %c0_4 = arith.constant 0 : index
    %c0_5 = arith.constant 0 : index
    %c0_6 = arith.constant 0 : index
    %5 = vector.load %arg2[%c0_4, %c0_5, %c0_6] : memref<4x8x128xf32, #tpu.memory_space<vmem>>, vector<4x8x128xf32>
    %6 = vector.shape_cast %5 : vector<4x8x128xf32> to vector<32x128xf32>
    %c0_7 = arith.constant 0 : index
    %c0_8 = arith.constant 0 : index
    %7 = vector.load %arg5[%c0_7, %c0_8] : memref<128x128xf32, #tpu.memory_space<vmem>>, vector<128x128xf32>
    %cst_9 = arith.constant dense<0.000000e+00> : vector<32x128xf32>
    %8 = tpu.matmul %6, %7, %cst_9 {dimension_numbers = #tpu.dot_dimension_numbers<[1], [0], [0], [1], [0, 0, 1, 1], [], []>} : vector<32x128xf32>, vector<128x128xf32>, vector<32x128xf32> -> vector<32x128xf32>
    %9 = vector.shape_cast %8 : vector<32x128xf32> to vector<4x8x128xf32>
    %c0_10 = arith.constant 0 : index
    %c0_11 = arith.constant 0 : index
    %c0_12 = arith.constant 0 : index
    %10 = vector.load %arg3[%c0_10, %c0_11, %c0_12] : memref<4x8x128xf32, #tpu.memory_space<vmem>>, vector<4x8x128xf32>
    %11 = vector.shape_cast %10 : vector<4x8x128xf32> to vector<32x128xf32>
    %c0_13 = arith.constant 0 : index
    %c0_14 = arith.constant 0 : index
    %12 = vector.load %arg6[%c0_13, %c0_14] : memref<128x128xf32, #tpu.memory_space<vmem>>, vector<128x128xf32>
    %cst_15 = arith.constant dense<0.000000e+00> : vector<32x128xf32>
    %13 = tpu.matmul %11, %12, %cst_15 {dimension_numbers = #tpu.dot_dimension_numbers<[1], [0], [0], [1], [0, 0, 1, 1], [], []>} : vector<32x128xf32>, vector<128x128xf32>, vector<32x128xf32> -> vector<32x128xf32>
    %14 = vector.shape_cast %13 : vector<32x128xf32> to vector<4x8x128xf32>
    %c0_16 = arith.constant 0 : index
    %c0_17 = arith.constant 0 : index
    %15 = vector.load %arg7[%c0_16, %c0_17] : memref<128x128xf32, #tpu.memory_space<vmem>>, vector<128x128xf32>
    %c0_18 = arith.constant 0 : index
    %c0_19 = arith.constant 0 : index
    %16 = vector.load %arg8[%c0_18, %c0_19] : memref<1x128xf32, #tpu.memory_space<vmem>>, vector<1x128xf32>
    %17 = vector.shape_cast %16 : vector<1x128xf32> to vector<1x128xf32>
    %18 = vector.broadcast %17 : vector<1x128xf32> to vector<32x128xf32>
    %19 = vector.extract_strided_slice %4 {offsets = [0, 0, 0], sizes = [4, 8, 32], strides = [1, 1, 1]} : vector<4x8x128xf32> to vector<4x8x32xf32>
    %20 = vector.extract_strided_slice %9 {offsets = [0, 0, 0], sizes = [4, 8, 32], strides = [1, 1, 1]} : vector<4x8x128xf32> to vector<4x8x32xf32>
    %21 = vector.extract_strided_slice %14 {offsets = [0, 0, 0], sizes = [4, 8, 32], strides = [1, 1, 1]} : vector<4x8x128xf32> to vector<4x8x32xf32>
    %cst_20 = arith.constant dense<0.000000e+00> : vector<4x8x8xf32>
    %22 = tpu.matmul %19, %20, %cst_20 {dimension_numbers = #tpu.dot_dimension_numbers<[2], [2], [1], [1], [0, 0, 0, 1, 1, 1], [0], [0]>} : vector<4x8x32xf32>, vector<4x8x32xf32>, vector<4x8x8xf32> -> vector<4x8x8xf32>
    %cst_21 = arith.constant dense<0xFF800000> : vector<4x8xf32>
    %23 = vector.multi_reduction <maximumf>, %22, %cst_21 [2] : vector<4x8x8xf32> to vector<4x8xf32>
    %24 = vector.shape_cast %23 : vector<4x8xf32> to vector<4x8x1xf32>
    %25 = vector.broadcast %24 : vector<4x8x1xf32> to vector<4x8x8xf32>
    %26 = arith.subf %22, %25 : vector<4x8x8xf32>
    %27 = math.exp %26 : vector<4x8x8xf32>
    %cst_22 = arith.constant dense<0.000000e+00> : vector<4x8xf32>
    %28 = vector.multi_reduction <add>, %27, %cst_22 [2] : vector<4x8x8xf32> to vector<4x8xf32>
    %29 = vector.shape_cast %28 : vector<4x8xf32> to vector<4x8x1xf32>
    %30 = vector.broadcast %29 : vector<4x8x1xf32> to vector<4x8x8xf32>
    %31 = arith.divf %27, %30 : vector<4x8x8xf32>
    %cst_23 = arith.constant dense<0.000000e+00> : vector<4x8x32xf32>
    %32 = tpu.matmul %31, %21, %cst_23 {dimension_numbers = #tpu.dot_dimension_numbers<[2], [1], [1], [2], [0, 0, 0, 1, 1, 2], [0], [0]>} : vector<4x8x8xf32>, vector<4x8x32xf32>, vector<4x8x32xf32> -> vector<4x8x32xf32>
    %33 = vector.shape_cast %32 : vector<4x8x32xf32> to vector<32x32xf32>
    %34 = vector.extract_strided_slice %15 {offsets = [0, 0], sizes = [32, 128], strides = [1, 1]} : vector<128x128xf32> to vector<32x128xf32>
    %cst_24 = arith.constant dense<0.000000e+00> : vector<32x128xf32>
    %35 = tpu.matmul %33, %34, %cst_24 {dimension_numbers = #tpu.dot_dimension_numbers<[1], [0], [0], [1], [0, 0, 1, 1], [], []>} : vector<32x32xf32>, vector<32x128xf32>, vector<32x128xf32> -> vector<32x128xf32>
    %36 = arith.addf %18, %35 : vector<32x128xf32>
    %37 = vector.extract_strided_slice %4 {offsets = [0, 0, 32], sizes = [4, 8, 32], strides = [1, 1, 1]} : vector<4x8x128xf32> to vector<4x8x32xf32>
    %38 = vector.extract_strided_slice %9 {offsets = [0, 0, 32], sizes = [4, 8, 32], strides = [1, 1, 1]} : vector<4x8x128xf32> to vector<4x8x32xf32>
    %39 = vector.extract_strided_slice %14 {offsets = [0, 0, 32], sizes = [4, 8, 32], strides = [1, 1, 1]} : vector<4x8x128xf32> to vector<4x8x32xf32>
    %cst_25 = arith.constant dense<0.000000e+00> : vector<4x8x8xf32>
    %40 = tpu.matmul %37, %38, %cst_25 {dimension_numbers = #tpu.dot_dimension_numbers<[2], [2], [1], [1], [0, 0, 0, 1, 1, 1], [0], [0]>} : vector<4x8x32xf32>, vector<4x8x32xf32>, vector<4x8x8xf32> -> vector<4x8x8xf32>
    %cst_26 = arith.constant dense<0xFF800000> : vector<4x8xf32>
    %41 = vector.multi_reduction <maximumf>, %40, %cst_26 [2] : vector<4x8x8xf32> to vector<4x8xf32>
    %42 = vector.shape_cast %41 : vector<4x8xf32> to vector<4x8x1xf32>
    %43 = vector.broadcast %42 : vector<4x8x1xf32> to vector<4x8x8xf32>
    %44 = arith.subf %40, %43 : vector<4x8x8xf32>
    %45 = math.exp %44 : vector<4x8x8xf32>
    %cst_27 = arith.constant dense<0.000000e+00> : vector<4x8xf32>
    %46 = vector.multi_reduction <add>, %45, %cst_27 [2] : vector<4x8x8xf32> to vector<4x8xf32>
    %47 = vector.shape_cast %46 : vector<4x8xf32> to vector<4x8x1xf32>
    %48 = vector.broadcast %47 : vector<4x8x1xf32> to vector<4x8x8xf32>
    %49 = arith.divf %45, %48 : vector<4x8x8xf32>
    %cst_28 = arith.constant dense<0.000000e+00> : vector<4x8x32xf32>
    %50 = tpu.matmul %49, %39, %cst_28 {dimension_numbers = #tpu.dot_dimension_numbers<[2], [1], [1], [2], [0, 0, 0, 1, 1, 2], [0], [0]>} : vector<4x8x8xf32>, vector<4x8x32xf32>, vector<4x8x32xf32> -> vector<4x8x32xf32>
    %51 = vector.shape_cast %50 : vector<4x8x32xf32> to vector<32x32xf32>
    %52 = vector.extract_strided_slice %15 {offsets = [32, 0], sizes = [32, 128], strides = [1, 1]} : vector<128x128xf32> to vector<32x128xf32>
    %cst_29 = arith.constant dense<0.000000e+00> : vector<32x128xf32>
    %53 = tpu.matmul %51, %52, %cst_29 {dimension_numbers = #tpu.dot_dimension_numbers<[1], [0], [0], [1], [0, 0, 1, 1], [], []>} : vector<32x32xf32>, vector<32x128xf32>, vector<32x128xf32> -> vector<32x128xf32>
    %54 = arith.addf %36, %53 : vector<32x128xf32>
    %55 = vector.extract_strided_slice %4 {offsets = [0, 0, 64], sizes = [4, 8, 32], strides = [1, 1, 1]} : vector<4x8x128xf32> to vector<4x8x32xf32>
    %56 = vector.extract_strided_slice %9 {offsets = [0, 0, 64], sizes = [4, 8, 32], strides = [1, 1, 1]} : vector<4x8x128xf32> to vector<4x8x32xf32>
    %57 = vector.extract_strided_slice %14 {offsets = [0, 0, 64], sizes = [4, 8, 32], strides = [1, 1, 1]} : vector<4x8x128xf32> to vector<4x8x32xf32>
    %cst_30 = arith.constant dense<0.000000e+00> : vector<4x8x8xf32>
    %58 = tpu.matmul %55, %56, %cst_30 {dimension_numbers = #tpu.dot_dimension_numbers<[2], [2], [1], [1], [0, 0, 0, 1, 1, 1], [0], [0]>} : vector<4x8x32xf32>, vector<4x8x32xf32>, vector<4x8x8xf32> -> vector<4x8x8xf32>
    %cst_31 = arith.constant dense<0xFF800000> : vector<4x8xf32>
    %59 = vector.multi_reduction <maximumf>, %58, %cst_31 [2] : vector<4x8x8xf32> to vector<4x8xf32>
    %60 = vector.shape_cast %59 : vector<4x8xf32> to vector<4x8x1xf32>
    %61 = vector.broadcast %60 : vector<4x8x1xf32> to vector<4x8x8xf32>
    %62 = arith.subf %58, %61 : vector<4x8x8xf32>
    %63 = math.exp %62 : vector<4x8x8xf32>
    %cst_32 = arith.constant dense<0.000000e+00> : vector<4x8xf32>
    %64 = vector.multi_reduction <add>, %63, %cst_32 [2] : vector<4x8x8xf32> to vector<4x8xf32>
    %65 = vector.shape_cast %64 : vector<4x8xf32> to vector<4x8x1xf32>
    %66 = vector.broadcast %65 : vector<4x8x1xf32> to vector<4x8x8xf32>
    %67 = arith.divf %63, %66 : vector<4x8x8xf32>
    %cst_33 = arith.constant dense<0.000000e+00> : vector<4x8x32xf32>
    %68 = tpu.matmul %67, %57, %cst_33 {dimension_numbers = #tpu.dot_dimension_numbers<[2], [1], [1], [2], [0, 0, 0, 1, 1, 2], [0], [0]>} : vector<4x8x8xf32>, vector<4x8x32xf32>, vector<4x8x32xf32> -> vector<4x8x32xf32>
    %69 = vector.shape_cast %68 : vector<4x8x32xf32> to vector<32x32xf32>
    %70 = vector.extract_strided_slice %15 {offsets = [64, 0], sizes = [32, 128], strides = [1, 1]} : vector<128x128xf32> to vector<32x128xf32>
    %cst_34 = arith.constant dense<0.000000e+00> : vector<32x128xf32>
    %71 = tpu.matmul %69, %70, %cst_34 {dimension_numbers = #tpu.dot_dimension_numbers<[1], [0], [0], [1], [0, 0, 1, 1], [], []>} : vector<32x32xf32>, vector<32x128xf32>, vector<32x128xf32> -> vector<32x128xf32>
    %72 = arith.addf %54, %71 : vector<32x128xf32>
    %73 = vector.extract_strided_slice %4 {offsets = [0, 0, 96], sizes = [4, 8, 32], strides = [1, 1, 1]} : vector<4x8x128xf32> to vector<4x8x32xf32>
    %74 = vector.extract_strided_slice %9 {offsets = [0, 0, 96], sizes = [4, 8, 32], strides = [1, 1, 1]} : vector<4x8x128xf32> to vector<4x8x32xf32>
    %75 = vector.extract_strided_slice %14 {offsets = [0, 0, 96], sizes = [4, 8, 32], strides = [1, 1, 1]} : vector<4x8x128xf32> to vector<4x8x32xf32>
    %cst_35 = arith.constant dense<0.000000e+00> : vector<4x8x8xf32>
    %76 = tpu.matmul %73, %74, %cst_35 {dimension_numbers = #tpu.dot_dimension_numbers<[2], [2], [1], [1], [0, 0, 0, 1, 1, 1], [0], [0]>} : vector<4x8x32xf32>, vector<4x8x32xf32>, vector<4x8x8xf32> -> vector<4x8x8xf32>
    %cst_36 = arith.constant dense<0xFF800000> : vector<4x8xf32>
    %77 = vector.multi_reduction <maximumf>, %76, %cst_36 [2] : vector<4x8x8xf32> to vector<4x8xf32>
    %78 = vector.shape_cast %77 : vector<4x8xf32> to vector<4x8x1xf32>
    %79 = vector.broadcast %78 : vector<4x8x1xf32> to vector<4x8x8xf32>
    %80 = arith.subf %76, %79 : vector<4x8x8xf32>
    %81 = math.exp %80 : vector<4x8x8xf32>
    %cst_37 = arith.constant dense<0.000000e+00> : vector<4x8xf32>
    %82 = vector.multi_reduction <add>, %81, %cst_37 [2] : vector<4x8x8xf32> to vector<4x8xf32>
    %83 = vector.shape_cast %82 : vector<4x8xf32> to vector<4x8x1xf32>
    %84 = vector.broadcast %83 : vector<4x8x1xf32> to vector<4x8x8xf32>
    %85 = arith.divf %81, %84 : vector<4x8x8xf32>
    %cst_38 = arith.constant dense<0.000000e+00> : vector<4x8x32xf32>
    %86 = tpu.matmul %85, %75, %cst_38 {dimension_numbers = #tpu.dot_dimension_numbers<[2], [1], [1], [2], [0, 0, 0, 1, 1, 2], [0], [0]>} : vector<4x8x8xf32>, vector<4x8x32xf32>, vector<4x8x32xf32> -> vector<4x8x32xf32>
    %87 = vector.shape_cast %86 : vector<4x8x32xf32> to vector<32x32xf32>
    %88 = vector.extract_strided_slice %15 {offsets = [96, 0], sizes = [32, 128], strides = [1, 1]} : vector<128x128xf32> to vector<32x128xf32>
    %cst_39 = arith.constant dense<0.000000e+00> : vector<32x128xf32>
    %89 = tpu.matmul %87, %88, %cst_39 {dimension_numbers = #tpu.dot_dimension_numbers<[1], [0], [0], [1], [0, 0, 1, 1], [], []>} : vector<32x32xf32>, vector<32x128xf32>, vector<32x128xf32> -> vector<32x128xf32>
    %90 = arith.addf %72, %89 : vector<32x128xf32>
    %91 = vector.shape_cast %90 : vector<32x128xf32> to vector<4x8x128xf32>
    %c0_40 = arith.constant 0 : index
    %c0_41 = arith.constant 0 : index
    %c0_42 = arith.constant 0 : index
    %92 = vector.load %arg9[%c0_40, %c0_41, %c0_42] : memref<4x8x128xf32, #tpu.memory_space<vmem>>, vector<4x8x128xf32>
    tpu.vector_store %arg9[%c0_40, %c0_41, %c0_42], %91 {strides = array<i32>} : memref<4x8x128xf32, #tpu.memory_space<vmem>>, vector<4x8x128xf32>,
    return
  }
  func.func @transform_0(%arg0: i32) -> (i32, i32, i32) {
    %c0_i32 = arith.constant 0 : i32
    %c0_i32_0 = arith.constant 0 : i32
    %c0_i32_1 = arith.constant 0 : i32
    return %arg0, %c0_i32, %c0_i32_0 : i32, i32, i32
  }
  func.func @transform_1(%arg0: i32) -> (i32, i32, i32) {
    %c0_i32 = arith.constant 0 : i32
    %c0_i32_0 = arith.constant 0 : i32
    %c0_i32_1 = arith.constant 0 : i32
    return %arg0, %c0_i32, %c0_i32_0 : i32, i32, i32
  }
  func.func @transform_2(%arg0: i32) -> (i32, i32, i32) {
    %c0_i32 = arith.constant 0 : i32
    %c0_i32_0 = arith.constant 0 : i32
    %c0_i32_1 = arith.constant 0 : i32
    return %arg0, %c0_i32, %c0_i32_0 : i32, i32, i32
  }
  func.func @transform_3(%arg0: i32) -> (i32, i32) {
    %c0_i32 = arith.constant 0 : i32
    %c0_i32_0 = arith.constant 0 : i32
    %c0_i32_1 = arith.constant 0 : i32
    return %c0_i32, %c0_i32_0 : i32, i32
  }
  func.func @transform_4(%arg0: i32) -> (i32, i32) {
    %c0_i32 = arith.constant 0 : i32
    %c0_i32_0 = arith.constant 0 : i32
    %c0_i32_1 = arith.constant 0 : i32
    return %c0_i32, %c0_i32_0 : i32, i32
  }
  func.func @transform_5(%arg0: i32) -> (i32, i32) {
    %c0_i32 = arith.constant 0 : i32
    %c0_i32_0 = arith.constant 0 : i32
    %c0_i32_1 = arith.constant 0 : i32
    return %c0_i32, %c0_i32_0 : i32, i32
  }
  func.func @transform_6(%arg0: i32) -> (i32, i32) {
    %c0_i32 = arith.constant 0 : i32
    %c0_i32_0 = arith.constant 0 : i32
    %c0_i32_1 = arith.constant 0 : i32
    return %c0_i32, %c0_i32_0 : i32, i32
  }
  func.func @transform_7(%arg0: i32) -> (i32, i32) {
    %c0_i32 = arith.constant 0 : i32
    %c0_i32_0 = arith.constant 0 : i32
    %c0_i32_1 = arith.constant 0 : i32
    return %c0_i32, %c0_i32_0 : i32, i32
  }
  func.func @transform_8(%arg0: i32) -> (i32, i32, i32) {
    %c0_i32 = arith.constant 0 : i32
    %c0_i32_0 = arith.constant 0 : i32
    %c0_i32_1 = arith.constant 0 : i32
    return %arg0, %c0_i32, %c0_i32_0 : i32, i32, i32
  }
}

</mosaic_0001>

<llo_original>
// kernel: tpu_custom_call.1
$region0: #{tpu_custom_call.1}
  #allocation0 [shape = 'u32[]', space=smem, size = 0x4, offset = 0x4, fixed_abs, tag = 'smem constant byte address 0x4 - core index']
  #allocation1 [shape = 'u32[144,128]{1,0:T(1,128)}', space=vmem, size = 0x12000, scoped, tag = 'internal scratch']
  %s0 = inlined_call_operand.hbm [shape: f32[8,8,128], index: 0, kind: input, shape index: {}]
  %s1 = inlined_call_operand.hbm [shape: f32[8,8,128], index: 1, kind: input, shape index: {}]
  %s2 = inlined_call_operand.hbm [shape: f32[8,8,128], index: 2, kind: input, shape index: {}]
  %s3 = inlined_call_operand.hbm [shape: f32[128,128], index: 3, kind: input, shape index: {}]
  %s4 = inlined_call_operand.hbm [shape: f32[128,128], index: 4, kind: input, shape index: {}]
  %s5 = inlined_call_operand.hbm [shape: f32[128,128], index: 5, kind: input, shape index: {}]
  %s6 = inlined_call_operand.hbm [shape: f32[128,128], index: 6, kind: input, shape index: {}]
  %s7 = inlined_call_operand.vmem [shape: f32[1,128], index: 7, kind: input, shape index: {}]
  %s8 = inlined_call_operand.hbm [shape: f32[8,8,128], index: 8, kind: output, shape index: {}]
  %s9 = sld [smem:[#allocation0]]
  $region93: #{tpu_custom_call.1} parent=0
    _
  %s11 = ssub.s32 1, %s9
  %s12 = scalar_select 0, %s11, %s9
  $region1: #{tpu_custom_call.1} parent=0
    #allocation2 [shape = 'u8[32768]{0}', space=vmem, size = 0x8000, scoped, tag = 'input window, operand 0']
    #allocation3 [shape = 's32[2]{0}', space=sflag, size = 0x8, scoped, tag = 'scoped memory for tpu_custom_call.1']
    #allocation4 [shape = 's32[2]{0}', space=sflag, size = 0x8, scoped, tag = 'scoped memory for tpu_custom_call.1']
    #allocation5 [shape = 'u8[32768]{0}', space=vmem, size = 0x8000, scoped, tag = 'input window, operand 1']
    #allocation6 [shape = 's32[2]{0}', space=sflag, size = 0x8, scoped, tag = 'scoped memory for tpu_custom_call.1']
    #allocation7 [shape = 'u8[32768]{0}', space=vmem, size = 0x8000, scoped, tag = 'input window, operand 2']
    #allocation8 [shape = 'u8[65536]{0}', space=vmem, size = 0x10000, scoped, tag = 'input window, operand 3, single buffered']
    #allocation9 [shape = 's32[1]{0}', space=sflag, size = 0x4, scoped, tag = 'scoped memory for tpu_custom_call.1']
    #allocation10 [shape = 'u8[65536]{0}', space=vmem, size = 0x10000, scoped, tag = 'input window, operand 4, single buffered']
    #allocation11 [shape = 'u8[65536]{0}', space=vmem, size = 0x10000, scoped, tag = 'input window, operand 5, single buffered']
    #allocation12 [shape = 's32[1]{0}', space=sflag, size = 0x4, scoped, tag = 'scoped memory for tpu_custom_call.1']
    #allocation13 [shape = 'u8[65536]{0}', space=vmem, size = 0x10000, scoped, tag = 'input window, operand 6, single buffered']
    #allocation14 [shape = 'u8[32768]{0}', space=vmem, size = 0x8000, scoped, tag = 'output window, operand 0']
    %13 = vsyncpa [#allocation3], 0
    %s14 = scalar_lea.sflag [#allocation3], 1
    %15 = vsyncpa %s14, 0
    %16 = vsyncpa [#allocation6], 0
    %s17 = scalar_lea.sflag [#allocation6], 1
    %18 = vsyncpa %s17, 0
    %19 = vsyncpa [#allocation9], 0
    %20 = vsyncpa [#allocation12], 0
    %21 = vsyncpa [#allocation4], 0
    %s22 = scalar_lea.sflag [#allocation4], 1
    %23 = vsyncpa %s22, 0
    loop: start=0, step=1, limit=4
    $region2: #{tpu_custom_call.1} parent=1 // loop_pre_header
      _
    $region3: #{tpu_custom_call.1} parent=1 // loop_header
      %s25 = sphi 0, %s29
      %p26 = scmp.ge.s32.totalorder %s25, 4
      %s35 = sphi 0, %s37
      %s38 = sphi 0, %s35
      %s39 = sphi 0, %s38
      %s55 = sphi 0, %s39
      %s61 = sphi 0, %s63
      %s64 = sphi 0, %s61
      %s65 = sphi 0, %s64
      %s81 = sphi 0, %s65
      %s87 = sphi 0, %s89
      %s90 = sphi 0, %s87
      %s91 = sphi 0, %s90
      %s107 = sphi 0, %s91
      %s111 = sphi 0, %s111
      %s113 = sphi 0, %s111
      %s114 = sphi 0, %s113
      %s128 = sphi 0, %s114
      %s132 = sphi 0, %s132
      %s134 = sphi 0, %s132
      %s135 = sphi 0, %s134
      %s149 = sphi 0, %s135
      %s153 = sphi 0, %s153
      %s155 = sphi 0, %s153
      %s156 = sphi 0, %s155
      %s170 = sphi 0, %s156
      %s174 = sphi 0, %s174
      %s176 = sphi 0, %s174
      %s177 = sphi 0, %s176
      %s191 = sphi 0, %s177
      %s195 = sphi 0, %s195
      %s197 = sphi 0, %s195
      %s198 = sphi 0, %s197
      %s212 = sphi 0, %s198
      %s218 = sphi 0, %s220
      %s221 = sphi 0, %s218
      %s222 = sphi 0, %s221
      %s238 = sphi 0, %s222
    $region4: #{tpu_custom_call.1} parent=1 // loop_header_branch
      %28 = sbr.rel (%p26) target = $region8
    $region5: #{tpu_custom_call.1} parent=1 // loop_body
      %s30 = ssub.s32 %s25, 1
      %s31 = ssub.s32 %s25, 2
      %s32 = sadd.s32 %s25, 1
      %s33 = ssub.s32 %s25, %s32
      %p34 = scmp.eq.s32.totalorder %s33, 0
      %s36 = sadd.s32 %s35, 1
      %s37 = scalar_select %p34, %s35, %s36
      %p40 = pneg %p34
      %p41 = scmp.eq.s32.totalorder %s25, 1
      %p42 = por %p40, %p41
      %p43 = scmp.ne.s32.totalorder %s35, %s38
      %p44 = scmp.eq.s32.totalorder %s25, 0
      %p45 = por %p43, %p44
      %p46 = scmp.ne.s32.totalorder %s35, %s38
      %p47 = scmp.eq.s32.totalorder %s30, 1
      %p48 = por %p46, %p47
      %p49 = scmp.ne.s32.totalorder %s38, %s39
      %p50 = scmp.eq.s32.totalorder %s30, 0
      %p51 = por %p49, %p50
      %p52 = scmp.ne.s32.totalorder %s38, %s39
      %p53 = scmp.eq.s32.totalorder %s31, 1
      %p54 = por %p52, %p53
      %p56 = scmp.ne.s32.totalorder %s39, %s55
      %p57 = scmp.eq.s32.totalorder %s31, 0
      %p58 = por %p56, %p57
      %s59 = ssub.s32 %s25, %s32
      %p60 = scmp.eq.s32.totalorder %s59, 0
      %s62 = sadd.s32 %s61, 1
      %s63 = scalar_select %p60, %s61, %s62
      %p66 = pneg %p60
      %p67 = scmp.eq.s32.totalorder %s25, 1
      %p68 = por %p66, %p67
      %p69 = scmp.ne.s32.totalorder %s61, %s64
      %p70 = scmp.eq.s32.totalorder %s25, 0
      %p71 = por %p69, %p70
      %p72 = scmp.ne.s32.totalorder %s61, %s64
      %p73 = scmp.eq.s32.totalorder %s30, 1
      %p74 = por %p72, %p73
      %p75 = scmp.ne.s32.totalorder %s64, %s65
      %p76 = scmp.eq.s32.totalorder %s30, 0
      %p77 = por %p75, %p76
      %p78 = scmp.ne.s32.totalorder %s64, %s65
      %p79 = scmp.eq.s32.totalorder %s31, 1
      %p80 = por %p78, %p79
      %p82 = scmp.ne.s32.totalorder %s65, %s81
      %p83 = scmp.eq.s32.totalorder %s31, 0
      %p84 = por %p82, %p83
      %s85 = ssub.s32 %s25, %s32
      %p86 = scmp.eq.s32.totalorder %s85, 0
      %s88 = sadd.s32 %s87, 1
      %s89 = scalar_select %p86, %s87, %s88
      %p92 = pneg %p86
      %p93 = scmp.eq.s32.totalorder %s25, 1
      %p94 = por %p92, %p93
      %p95 = scmp.ne.s32.totalorder %s87, %s90
      %p96 = scmp.eq.s32.totalorder %s25, 0
      %p97 = por %p95, %p96
      %p98 = scmp.ne.s32.totalorder %s87, %s90
      %p99 = scmp.eq.s32.totalorder %s30, 1
      %p100 = por %p98, %p99
      %p101 = scmp.ne.s32.totalorder %s90, %s91
      %p102 = scmp.eq.s32.totalorder %s30, 0
      %p103 = por %p101, %p102
      %p104 = scmp.ne.s32.totalorder %s90, %s91
      %p105 = scmp.eq.s32.totalorder %s31, 1
      %p106 = por %p104, %p105
      %p108 = scmp.ne.s32.totalorder %s91, %s107
      %p109 = scmp.eq.s32.totalorder %s31, 0
      %p110 = por %p108, %p109
      %s112 = sadd.s32 %s111, 1
      %p115 = scmp.eq.s32.totalorder %s25, 1
      %p116 = scmp.ne.s32.totalorder %s111, %s113
      %p117 = scmp.eq.s32.totalorder %s25, 0
      %p118 = por %p116, %p117
      %p119 = scmp.ne.s32.totalorder %s111, %s113
      %p120 = scmp.eq.s32.totalorder %s30, 1
      %p121 = por %p119, %p120
      %p122 = scmp.ne.s32.totalorder %s113, %s114
      %p123 = scmp.eq.s32.totalorder %s30, 0
      %p124 = por %p122, %p123
      %p125 = scmp.ne.s32.totalorder %s113, %s114
      %p126 = scmp.eq.s32.totalorder %s31, 1
      %p127 = por %p125, %p126
      %p129 = scmp.ne.s32.totalorder %s114, %s128
      %p130 = scmp.eq.s32.totalorder %s31, 0
      %p131 = por %p129, %p130
      %s133 = sadd.s32 %s132, 1
      %p136 = scmp.eq.s32.totalorder %s25, 1
      %p137 = scmp.ne.s32.totalorder %s132, %s134
      %p138 = scmp.eq.s32.totalorder %s25, 0
      %p139 = por %p137, %p138
      %p140 = scmp.ne.s32.totalorder %s132, %s134
      %p141 = scmp.eq.s32.totalorder %s30, 1
      %p142 = por %p140, %p141
      %p143 = scmp.ne.s32.totalorder %s134, %s135
      %p144 = scmp.eq.s32.totalorder %s30, 0
      %p145 = por %p143, %p144
      %p146 = scmp.ne.s32.totalorder %s134, %s135
      %p147 = scmp.eq.s32.totalorder %s31, 1
      %p148 = por %p146, %p147
      %p150 = scmp.ne.s32.totalorder %s135, %s149
      %p151 = scmp.eq.s32.totalorder %s31, 0
      %p152 = por %p150, %p151
      %s154 = sadd.s32 %s153, 1
      %p157 = scmp.eq.s32.totalorder %s25, 1
      %p158 = scmp.ne.s32.totalorder %s153, %s155
      %p159 = scmp.eq.s32.totalorder %s25, 0
      %p160 = por %p158, %p159
      %p161 = scmp.ne.s32.totalorder %s153, %s155
      %p162 = scmp.eq.s32.totalorder %s30, 1
      %p163 = por %p161, %p162
      %p164 = scmp.ne.s32.totalorder %s155, %s156
      %p165 = scmp.eq.s32.totalorder %s30, 0
      %p166 = por %p164, %p165
      %p167 = scmp.ne.s32.totalorder %s155, %s156
      %p168 = scmp.eq.s32.totalorder %s31, 1
      %p169 = por %p167, %p168
      %p171 = scmp.ne.s32.totalorder %s156, %s170
      %p172 = scmp.eq.s32.totalorder %s31, 0
      %p173 = por %p171, %p172
      %s175 = sadd.s32 %s174, 1
      %p178 = scmp.eq.s32.totalorder %s25, 1
      %p179 = scmp.ne.s32.totalorder %s174, %s176
      %p180 = scmp.eq.s32.totalorder %s25, 0
      %p181 = por %p179, %p180
      %p182 = scmp.ne.s32.totalorder %s174, %s176
      %p183 = scmp.eq.s32.totalorder %s30, 1
      %p184 = por %p182, %p183
      %p185 = scmp.ne.s32.totalorder %s176, %s177
      %p186 = scmp.eq.s32.totalorder %s30, 0
      %p187 = por %p185, %p186
      %p188 = scmp.ne.s32.totalorder %s176, %s177
      %p189 = scmp.eq.s32.totalorder %s31, 1
      %p190 = por %p188, %p189
      %p192 = scmp.ne.s32.totalorder %s177, %s191
      %p193 = scmp.eq.s32.totalorder %s31, 0
      %p194 = por %p192, %p193
      %s196 = sadd.s32 %s195, 1
      %p199 = scmp.eq.s32.totalorder %s25, 1
      %p200 = scmp.ne.s32.totalorder %s195, %s197
      %p201 = scmp.eq.s32.totalorder %s25, 0
      %p202 = por %p200, %p201
      %p203 = scmp.ne.s32.totalorder %s195, %s197
      %p204 = scmp.eq.s32.totalorder %s30, 1
      %p205 = por %p203, %p204
      %p206 = scmp.ne.s32.totalorder %s197, %s198
      %p207 = scmp.eq.s32.totalorder %s30, 0
      %p208 = por %p206, %p207
      %p209 = scmp.ne.s32.totalorder %s197, %s198
      %p210 = scmp.eq.s32.totalorder %s31, 1
      %p211 = por %p209, %p210
      %p213 = scmp.ne.s32.totalorder %s198, %s212
      %p214 = scmp.eq.s32.totalorder %s31, 0
      %p215 = por %p213, %p214
      %s216 = ssub.s32 %s25, %s32
      %p217 = scmp.eq.s32.totalorder %s216, 0
      %s219 = sadd.s32 %s218, 1
      %s220 = scalar_select %p217, %s218, %s219
      %p223 = pneg %p217
      %p224 = scmp.eq.s32.totalorder %s25, 1
      %p225 = por %p223, %p224
      %p226 = scmp.ne.s32.totalorder %s218, %s221
      %p227 = scmp.eq.s32.totalorder %s25, 0
      %p228 = por %p226, %p227
      %p229 = scmp.ne.s32.totalorder %s218, %s221
      %p230 = scmp.eq.s32.totalorder %s30, 1
      %p231 = por %p229, %p230
      %p232 = scmp.ne.s32.totalorder %s221, %s222
      %p233 = scmp.eq.s32.totalorder %s30, 0
      %p234 = por %p232, %p233
      %p235 = scmp.ne.s32.totalorder %s221, %s222
      %p236 = scmp.eq.s32.totalorder %s31, 1
      %p237 = por %p235, %p236
      %p239 = scmp.ne.s32.totalorder %s222, %s238
      %p240 = scmp.eq.s32.totalorder %s31, 0
      %p241 = por %p239, %p240
      %p242 = scmp.le.s32.totalorder 1, %s25
      %p243 = scmp.lt.s32.totalorder %s25, 3
      %p244 = pnand %p242, %p243
      %p245 = pneg %p244
      // Predicated region
      $region9: #{tpu_custom_call.1} parent=5 // pred_check
        _
      $region10: #{tpu_custom_call.1} parent=5 // pred_check_branch
        %247 = sbr.rel (%p244) target = $region12
      $region11: #{tpu_custom_call.1} parent=5 // pred_region
        %s248 = ssub.s32 %s25, 1
        // Predicated region
        $region13: #{tpu_custom_call.1} parent=11 // pred_check
          %p249 = pneg %p124
        $region14: #{tpu_custom_call.1} parent=11 // pred_check_branch
          %251 = sbr.rel (%p249) target = $region16
        $region15: #{tpu_custom_call.1} parent=11 // pred_region
          %s253 = ssub.s32 2048, 2048
          %254 = vsyncadd [#allocation9], %s253
          %s255 = sshll.u32 [#allocation8], 4
          %s256 = int_to_ptr.vmem [resolvable:$true] %s255
          %261 = dma.hbm_to_vmem [thread:$0]  %s3, 2048, %s256, [#allocation9], 128, 128, 8
        $region16: #{tpu_custom_call.1} parent=11 // pred_fallthru
          _
        // Predicated region
        $region17: #{tpu_custom_call.1} parent=11 // pred_check
          %p262 = pneg %p145
        $region18: #{tpu_custom_call.1} parent=11 // pred_check_branch
          %264 = sbr.rel (%p262) target = $region20
        $region19: #{tpu_custom_call.1} parent=11 // pred_region
          %s266 = ssub.s32 2048, 2048
          %267 = vsyncadd [#allocation9], %s266
          %s268 = sshll.u32 [#allocation10], 4
          %s269 = int_to_ptr.vmem [resolvable:$true] %s268
          %274 = dma.hbm_to_vmem [thread:$0]  %s4, 2048, %s269, [#allocation9], 128, 128, 8
        $region20: #{tpu_custom_call.1} parent=11 // pred_fallthru
          _
        // Predicated region
        $region21: #{tpu_custom_call.1} parent=11 // pred_check
          %p275 = pneg %p166
        $region22: #{tpu_custom_call.1} parent=11 // pred_check_branch
          %277 = sbr.rel (%p275) target = $region24
        $region23: #{tpu_custom_call.1} parent=11 // pred_region
          %s279 = ssub.s32 2048, 2048
          %280 = vsyncadd [#allocation12], %s279
          %s281 = sshll.u32 [#allocation11], 4
          %s282 = int_to_ptr.vmem [resolvable:$true] %s281
          %287 = dma.hbm_to_vmem [thread:$0]  %s5, 2048, %s282, [#allocation12], 128, 128, 8
        $region24: #{tpu_custom_call.1} parent=11 // pred_fallthru
          _
        // Predicated region
        $region25: #{tpu_custom_call.1} parent=11 // pred_check
          %p288 = pneg %p187
        $region26: #{tpu_custom_call.1} parent=11 // pred_check_branch
          %290 = sbr.rel (%p288) target = $region28
        $region27: #{tpu_custom_call.1} parent=11 // pred_region
          %s292 = ssub.s32 2048, 2048
          %293 = vsyncadd [#allocation12], %s292
          %s294 = sshll.u32 [#allocation13], 4
          %s295 = int_to_ptr.vmem [resolvable:$true] %s294
          %300 = dma.hbm_to_vmem [thread:$0]  %s6, 2048, %s295, [#allocation12], 128, 128, 8
        $region28: #{tpu_custom_call.1} parent=11 // pred_fallthru
          _
        // Predicated region
        $region29: #{tpu_custom_call.1} parent=11 // pred_check
          %p301 = pneg %p208
        $region30: #{tpu_custom_call.1} parent=11 // pred_check_branch
          %303 = sbr.rel (%p301) target = $region32
        $region31: #{tpu_custom_call.1} parent=11 // pred_region
          _
        $region32: #{tpu_custom_call.1} parent=11 // pred_fallthru
          _
      $region12: #{tpu_custom_call.1} parent=5 // pred_fallthru
        _
      %p304 = scmp.lt.s32.totalorder %s25, 2
      // Predicated region
      $region33: #{tpu_custom_call.1} parent=5 // pred_check
        %p305 = pneg %p304
      $region34: #{tpu_custom_call.1} parent=5 // pred_check_branch
        %307 = sbr.rel (%p305) target = $region36
      $region35: #{tpu_custom_call.1} parent=5 // pred_region
        // Predicated region
        $region37: #{tpu_custom_call.1} parent=35 // pred_check
          %p308 = pneg %p45
        $region38: #{tpu_custom_call.1} parent=35 // pred_check_branch
          %310 = sbr.rel (%p308) target = $region40
        $region39: #{tpu_custom_call.1} parent=35 // pred_region
          %s311 = sand.u32 %s35, 1
          %s312 = scalar_lea.sflag [#allocation3], %s311
          %s313 = sand.u32 %s35, 1
          %s314 = smul.addr %s313, 32
          %s315 = scalar_lea.vmem [#allocation2], %s314
          %s316 = smul.u32 4, %s25
          %s318 = ssub.s32 512, 512
          %319 = vsyncadd %s312, %s318
          %s320 = smul.addr %s316, 128
          %s321 = scalar_lea.hbm %s0, %s320
          %s322 = sshll.u32 %s315, 4
          %s323 = int_to_ptr.vmem [resolvable:$true] %s322
          %328 = dma.hbm_to_vmem [thread:$0]  %s321, 512, %s323, %s312, 128, 128, 8
        $region40: #{tpu_custom_call.1} parent=35 // pred_fallthru
          _
        // Predicated region
        $region41: #{tpu_custom_call.1} parent=35 // pred_check
          %p329 = pneg %p71
        $region42: #{tpu_custom_call.1} parent=35 // pred_check_branch
          %331 = sbr.rel (%p329) target = $region44
        $region43: #{tpu_custom_call.1} parent=35 // pred_region
          %s332 = sand.u32 %s25, 1
          %s333 = scalar_lea.sflag [#allocation6], %s332
          %s334 = sand.u32 %s61, 1
          %s335 = smul.addr %s334, 32
          %s336 = scalar_lea.vmem [#allocation5], %s335
          %s337 = smul.u32 4, %s25
          %s339 = ssub.s32 512, 512
          %340 = vsyncadd %s333, %s339
          %s341 = smul.addr %s337, 128
          %s342 = scalar_lea.hbm %s1, %s341
          %s343 = sshll.u32 %s336, 4
          %s344 = int_to_ptr.vmem [resolvable:$true] %s343
          %349 = dma.hbm_to_vmem [thread:$0]  %s342, 512, %s344, %s333, 128, 128, 8
        $region44: #{tpu_custom_call.1} parent=35 // pred_fallthru
          _
        // Predicated region
        $region45: #{tpu_custom_call.1} parent=35 // pred_check
          %p350 = pneg %p97
        $region46: #{tpu_custom_call.1} parent=35 // pred_check_branch
          %352 = sbr.rel (%p350) target = $region48
        $region47: #{tpu_custom_call.1} parent=35 // pred_region
          %s353 = sand.u32 %s25, 1
          %s354 = scalar_lea.sflag [#allocation6], %s353
          %s355 = sand.u32 %s87, 1
          %s356 = smul.addr %s355, 32
          %s357 = scalar_lea.vmem [#allocation7], %s356
          %s358 = smul.u32 4, %s25
          %s360 = ssub.s32 512, 512
          %361 = vsyncadd %s354, %s360
          %s362 = smul.addr %s358, 128
          %s363 = scalar_lea.hbm %s2, %s362
          %s364 = sshll.u32 %s357, 4
          %s365 = int_to_ptr.vmem [resolvable:$true] %s364
          %370 = dma.hbm_to_vmem [thread:$0]  %s363, 512, %s365, %s354, 128, 128, 8
        $region48: #{tpu_custom_call.1} parent=35 // pred_fallthru
          _
      $region36: #{tpu_custom_call.1} parent=5 // pred_fallthru
        _
      %p371 = scmp.le.s32.totalorder 1, %s25
      %p372 = scmp.lt.s32.totalorder %s25, 3
      %p373 = pnand %p371, %p372
      %p374 = pneg %p373
      // Predicated region
      $region49: #{tpu_custom_call.1} parent=5 // pred_check
        _
      $region50: #{tpu_custom_call.1} parent=5 // pred_check_branch
        %376 = sbr.rel (%p373) target = $region52
      $region51: #{tpu_custom_call.1} parent=5 // pred_region
        %s377 = ssub.s32 %s25, 1
        %s378 = sand.u32 %s38, 1
        %s379 = scalar_lea.sflag [#allocation3], %s378
        %s380 = sand.u32 %s38, 1
        %s381 = smul.addr %s380, 32
        %s382 = scalar_lea.vmem [#allocation2], %s381
        // Predicated region
        $region53: #{tpu_custom_call.1} parent=51 // pred_check
          %p383 = pneg %p51
        $region54: #{tpu_custom_call.1} parent=51 // pred_check_branch
          %385 = sbr.rel (%p383) target = $region56
        $region55: #{tpu_custom_call.1} parent=51 // pred_region
          %386 = dma.done %s379, 512
        $region56: #{tpu_custom_call.1} parent=51 // pred_fallthru
          _
        %s387 = sand.u32 %s30, 1
        %s388 = scalar_lea.sflag [#allocation6], %s387
        %s389 = sand.u32 %s64, 1
        %s390 = smul.addr %s389, 32
        %s391 = scalar_lea.vmem [#allocation5], %s390
        // Predicated region
        $region57: #{tpu_custom_call.1} parent=51 // pred_check
          %p392 = pneg %p77
        $region58: #{tpu_custom_call.1} parent=51 // pred_check_branch
          %394 = sbr.rel (%p392) target = $region60
        $region59: #{tpu_custom_call.1} parent=51 // pred_region
          %395 = dma.done %s388, 512
        $region60: #{tpu_custom_call.1} parent=51 // pred_fallthru
          _
        %s396 = sand.u32 %s30, 1
        %s397 = scalar_lea.sflag [#allocation6], %s396
        %s398 = sand.u32 %s90, 1
        %s399 = smul.addr %s398, 32
        %s400 = scalar_lea.vmem [#allocation7], %s399
        // Predicated region
        $region61: #{tpu_custom_call.1} parent=51 // pred_check
          %p401 = pneg %p103
        $region62: #{tpu_custom_call.1} parent=51 // pred_check_branch
          %403 = sbr.rel (%p401) target = $region64
        $region63: #{tpu_custom_call.1} parent=51 // pred_region
          %404 = dma.done %s397, 512
        $region64: #{tpu_custom_call.1} parent=51 // pred_fallthru
          _
        // Predicated region
        $region65: #{tpu_custom_call.1} parent=51 // pred_check
          %p405 = pneg %p124
        $region66: #{tpu_custom_call.1} parent=51 // pred_check_branch
          %407 = sbr.rel (%p405) target = $region68
        $region67: #{tpu_custom_call.1} parent=51 // pred_region
          %408 = dma.done [#allocation9], 2048
        $region68: #{tpu_custom_call.1} parent=51 // pred_fallthru
          _
        // Predicated region
        $region69: #{tpu_custom_call.1} parent=51 // pred_check
          %p409 = pneg %p145
        $region70: #{tpu_custom_call.1} parent=51 // pred_check_branch
          %411 = sbr.rel (%p409) target = $region72
        $region71: #{tpu_custom_call.1} parent=51 // pred_region
          %412 = dma.done [#allocation9], 2048
        $region72: #{tpu_custom_call.1} parent=51 // pred_fallthru
          _
        // Predicated region
        $region73: #{tpu_custom_call.1} parent=51 // pred_check
          %p413 = pneg %p166
        $region74: #{tpu_custom_call.1} parent=51 // pred_check_branch
          %415 = sbr.rel (%p413) target = $region76
        $region75: #{tpu_custom_call.1} parent=51 // pred_region
          %416 = dma.done [#allocation12], 2048
        $region76: #{tpu_custom_call.1} parent=51 // pred_fallthru
          _
        // Predicated region
        $region77: #{tpu_custom_call.1} parent=51 // pred_check
          %p417 = pneg %p187
        $region78: #{tpu_custom_call.1} parent=51 // pred_check_branch
          %419 = sbr.rel (%p417) target = $region80
        $region79: #{tpu_custom_call.1} parent=51 // pred_region
          %420 = dma.done [#allocation12], 2048
        $region80: #{tpu_custom_call.1} parent=51 // pred_fallthru
          _
        %s421 = sand.u32 %s38, 1
        %s422 = scalar_lea.sflag [#allocation3], %s421
        %s423 = sand.u32 %s38, 1
        %s424 = smul.addr %s423, 32
        %s425 = scalar_lea.vmem [#allocation2], %s424
        %p426 = pneg %p51
        %p427 = pneg %p48
        %s428 = sand.u32 %s30, 1
        %s429 = scalar_lea.sflag [#allocation6], %s428
        %s430 = sand.u32 %s64, 1
        %s431 = smul.addr %s430, 32
        %s432 = scalar_lea.vmem [#allocation5], %s431
        %p433 = pneg %p77
        %p434 = pneg %p74
        %s435 = sand.u32 %s30, 1
        %s436 = scalar_lea.sflag [#allocation6], %s435
        %s437 = sand.u32 %s90, 1
        %s438 = smul.addr %s437, 32
        %s439 = scalar_lea.vmem [#allocation7], %s438
        %p440 = pneg %p103
        %p441 = pneg %p100
        %p442 = pneg %p124
        %p443 = pneg %p121
        %p444 = pneg %p145
        %p445 = pneg %p142
        %p446 = pneg %p166
        %p447 = pneg %p163
        %p448 = pneg %p187
        %p449 = pneg %p184
        %p450 = pneg %p208
        %p451 = pneg %p205
        %p452 = pneg %p234
        %p453 = pneg %p231
        %s454 = sand.u32 %s221, 1
        %s455 = scalar_lea.sflag [#allocation4], %s454
        %s456 = sand.u32 %s221, 1
        %s457 = smul.addr %s456, 32
        %s458 = scalar_lea.vmem [#allocation14], %s457
        %s459 = smul.u32 4, %s30
        %s460 = smul.u32 4, %s30
        %s461 = smul.u32 4, %s30
        %s462 = smul.u32 4, %s30
        %v463 = vld [vmem:[%s382] sm:$0xff]
        %v464 = vld [vmem:[%s382 + $0x8] sm:$0xff]
        %v465 = vld [vmem:[%s382 + $0x10] sm:$0xff]
        %v466 = vld [vmem:[%s382 + $0x18] sm:$0xff]
        %v467 = vld [vmem:[#allocation8] sm:$0xff]
        %v468 = vld [vmem:[#allocation8 + $0x8] sm:$0xff]
        %v469 = vld [vmem:[#allocation8 + $0x10] sm:$0xff]
        %v470 = vld [vmem:[#allocation8 + $0x18] sm:$0xff]
        %v471 = vld [vmem:[#allocation8 + $0x20] sm:$0xff]
        %v472 = vld [vmem:[#allocation8 + $0x28] sm:$0xff]
        %v473 = vld [vmem:[#allocation8 + $0x30] sm:$0xff]
        %v474 = vld [vmem:[#allocation8 + $0x38] sm:$0xff]
        %v475 = vld [vmem:[#allocation8 + $0x40] sm:$0xff]
        %v476 = vld [vmem:[#allocation8 + $0x48] sm:$0xff]
        %v477 = vld [vmem:[#allocation8 + $0x50] sm:$0xff]
        %v478 = vld [vmem:[#allocation8 + $0x58] sm:$0xff]
        %v479 = vld [vmem:[#allocation8 + $0x60] sm:$0xff]
        %v480 = vld [vmem:[#allocation8 + $0x68] sm:$0xff]
        %v481 = vld [vmem:[#allocation8 + $0x70] sm:$0xff]
        %v482 = vld [vmem:[#allocation8 + $0x78] sm:$0xff]
        %483 = vmatprep.subr.mxu0 0.0
        %484 = vmatpush1.msra.mxu0 %v467
        %485 = vmatprep.subr.mxu0 0.0
        %486 = vmatpush1.msra.mxu0 %v468
        %487 = vmatprep.subr.mxu0 0.0
        %488 = vmatpush1.msra.mxu0 %v469
        %489 = vmatprep.subr.mxu0 0.0
        %490 = vmatpush1.msra.mxu0 %v470
        %491 = vmatprep.subr.mxu0 0.0
        %492 = vmatpush1.msra.mxu0 %v471
        %493 = vmatprep.subr.mxu0 0.0
        %494 = vmatpush1.msra.mxu0 %v472
        %495 = vmatprep.subr.mxu0 0.0
        %496 = vmatpush1.msra.mxu0 %v473
        %497 = vmatprep.subr.mxu0 0.0
        %498 = vmatpush1.msra.mxu0 %v474
        %499 = vmatprep.subr.mxu0 0.0
        %500 = vmatpush1.msra.mxu0 %v475
        %501 = vmatprep.subr.mxu0 0.0
        %502 = vmatpush1.msra.mxu0 %v476
        %503 = vmatprep.subr.mxu0 0.0
        %504 = vmatpush1.msra.mxu0 %v477
        %505 = vmatprep.subr.mxu0 0.0
        %506 = vmatpush1.msra.mxu0 %v478
        %507 = vmatprep.subr.mxu0 0.0
        %508 = vmatpush1.msra.mxu0 %v479
        %509 = vmatprep.subr.mxu0 0.0
        %510 = vmatpush1.msra.mxu0 %v480
        %511 = vmatprep.subr.mxu0 0.0
        %512 = vmatpush1.msra.mxu0 %v481
        %513 = vmatprep.subr.mxu0 0.0
        %514 = vmatpush1.msra.mxu0 %v482
        %515 = vmatprep.subr.mxu0 0.0
        %516 = vmatpush1.msra.mxu0 0.0
        %517 = vmatprep.subr.mxu0 0.0
        %518 = vmatpush1.msra.mxu0 0.0
        %519 = vmatprep.subr.mxu0 0.0
        %520 = vmatpush1.msra.mxu0 0.0
        %521 = vmatprep.subr.mxu0 0.0
        %522 = vmatpush1.msra.mxu0 0.0
        %523 = vmatprep.subr.mxu0 0.0
        %524 = vmatpush1.msra.mxu0 0.0
        %525 = vmatprep.subr.mxu0 0.0
        %526 = vmatpush1.msra.mxu0 0.0
        %527 = vmatprep.subr.mxu0 0.0
        %528 = vmatpush1.msra.mxu0 0.0
        %529 = vmatprep.subr.mxu0 0.0
        %530 = vmatpush1.msra.mxu0 0.0
        %531 = vmatprep.subr.mxu0 0.0
        %532 = vmatpush1.msra.mxu0 0.0
        %533 = vmatprep.subr.mxu0 0.0
        %534 = vmatpush1.msra.mxu0 0.0
        %535 = vmatprep.subr.mxu0 0.0
        %536 = vmatpush1.msra.mxu0 0.0
        %537 = vmatprep.subr.mxu0 0.0
        %538 = vmatpush1.msra.mxu0 0.0
        %539 = vmatprep.subr.mxu0 0.0
        %540 = vmatpush1.msra.mxu0 0.0
        %541 = vmatprep.subr.mxu0 0.0
        %542 = vmatpush1.msra.mxu0 0.0
        %543 = vmatprep.subr.mxu0 0.0
        %544 = vmatpush1.msra.mxu0 0.0
        %545 = vmatprep.subr.mxu0 0.0
        %546 = vmatpush1.msra.mxu0 0.0
        %547 = vmatprep.mubr.f32.mxu0 0.0
        %548 = vmatmul.mubr.f32.gmra.mrb[0].mxu0 %v463
        %v549 = vpop.f32.mrb[0].mxu0
        %v550 = vadd.f32 0.0, %v549
        %v551 = vpop.f32.mrb[0].mxu0
        %552 = vmatprep.mubr.f32.mxu0 0.0
        %553 = vmatmul.mubr.f32.gmra.mrb[0].mxu0 %v464
        %v554 = vpop.f32.mrb[0].mxu0
        %v555 = vadd.f32 0.0, %v554
        %v556 = vpop.f32.mrb[0].mxu0
        %557 = vmatprep.mubr.f32.mxu0 0.0
        %558 = vmatmul.mubr.f32.gmra.mrb[0].mxu0 %v465
        %v559 = vpop.f32.mrb[0].mxu0
        %v560 = vadd.f32 0.0, %v559
        %v561 = vpop.f32.mrb[0].mxu0
        %562 = vmatprep.mubr.f32.mxu0 0.0
        %563 = vmatmul.mubr.f32.gmra.mrb[0].mxu0 %v466
        %v564 = vpop.f32.mrb[0].mxu0
        %v565 = vadd.f32 0.0, %v564
        %v566 = vpop.f32.mrb[0].mxu0
        %567 = vdwg.mxu0
        %v568 = vld [vmem:[%s391] sm:$0xff]
        %v569 = vld [vmem:[%s391 + $0x8] sm:$0xff]
        %v570 = vld [vmem:[%s391 + $0x10] sm:$0xff]
        %v571 = vld [vmem:[%s391 + $0x18] sm:$0xff]
        %v572 = vld [vmem:[#allocation10] sm:$0xff]
        %v573 = vld [vmem:[#allocation10 + $0x8] sm:$0xff]
        %v574 = vld [vmem:[#allocation10 + $0x10] sm:$0xff]
        %v575 = vld [vmem:[#allocation10 + $0x18] sm:$0xff]
        %v576 = vld [vmem:[#allocation10 + $0x20] sm:$0xff]
        %v577 = vld [vmem:[#allocation10 + $0x28] sm:$0xff]
        %v578 = vld [vmem:[#allocation10 + $0x30] sm:$0xff]
        %v579 = vld [vmem:[#allocation10 + $0x38] sm:$0xff]
        %v580 = vld [vmem:[#allocation10 + $0x40] sm:$0xff]
        %v581 = vld [vmem:[#allocation10 + $0x48] sm:$0xff]
        %v582 = vld [vmem:[#allocation10 + $0x50] sm:$0xff]
        %v583 = vld [vmem:[#allocation10 + $0x58] sm:$0xff]
        %v584 = vld [vmem:[#allocation10 + $0x60] sm:$0xff]
        %v585 = vld [vmem:[#allocation10 + $0x68] sm:$0xff]
        %v586 = vld [vmem:[#allocation10 + $0x70] sm:$0xff]
        %v587 = vld [vmem:[#allocation10 + $0x78] sm:$0xff]
        %588 = vmatprep.subr.mxu0 0.0
        %589 = vmatpush1.msra.mxu0 %v572
        %590 = vmatprep.subr.mxu0 0.0
        %591 = vmatpush1.msra.mxu0 %v573
        %592 = vmatprep.subr.mxu0 0.0
        %593 = vmatpush1.msra.mxu0 %v574
        %594 = vmatprep.subr.mxu0 0.0
        %595 = vmatpush1.msra.mxu0 %v575
        %596 = vmatprep.subr.mxu0 0.0
        %597 = vmatpush1.msra.mxu0 %v576
        %598 = vmatprep.subr.mxu0 0.0
        %599 = vmatpush1.msra.mxu0 %v577
        %600 = vmatprep.subr.mxu0 0.0
        %601 = vmatpush1.msra.mxu0 %v578
        %602 = vmatprep.subr.mxu0 0.0
        %603 = vmatpush1.msra.mxu0 %v579
        %604 = vmatprep.subr.mxu0 0.0
        %605 = vmatpush1.msra.mxu0 %v580
        %606 = vmatprep.subr.mxu0 0.0
        %607 = vmatpush1.msra.mxu0 %v581
        %608 = vmatprep.subr.mxu0 0.0
        %609 = vmatpush1.msra.mxu0 %v582
        %610 = vmatprep.subr.mxu0 0.0
        %611 = vmatpush1.msra.mxu0 %v583
        %612 = vmatprep.subr.mxu0 0.0
        %613 = vmatpush1.msra.mxu0 %v584
        %614 = vmatprep.subr.mxu0 0.0
        %615 = vmatpush1.msra.mxu0 %v585
        %616 = vmatprep.subr.mxu0 0.0
        %617 = vmatpush1.msra.mxu0 %v586
        %618 = vmatprep.subr.mxu0 0.0
        %619 = vmatpush1.msra.mxu0 %v587
        %620 = vmatprep.subr.mxu0 0.0
        %621 = vmatpush1.msra.mxu0 0.0
        %622 = vmatprep.subr.mxu0 0.0
        %623 = vmatpush1.msra.mxu0 0.0
        %624 = vmatprep.subr.mxu0 0.0
        %625 = vmatpush1.msra.mxu0 0.0
        %626 = vmatprep.subr.mxu0 0.0
        %627 = vmatpush1.msra.mxu0 0.0
        %628 = vmatprep.subr.mxu0 0.0
        %629 = vmatpush1.msra.mxu0 0.0
        %630 = vmatprep.subr.mxu0 0.0
        %631 = vmatpush1.msra.mxu0 0.0
        %632 = vmatprep.subr.mxu0 0.0
        %633 = vmatpush1.msra.mxu0 0.0
        %634 = vmatprep.subr.mxu0 0.0
        %635 = vmatpush1.msra.mxu0 0.0
        %636 = vmatprep.subr.mxu0 0.0
        %637 = vmatpush1.msra.mxu0 0.0
        %638 = vmatprep.subr.mxu0 0.0
        %639 = vmatpush1.msra.mxu0 0.0
        %640 = vmatprep.subr.mxu0 0.0
        %641 = vmatpush1.msra.mxu0 0.0
        %642 = vmatprep.subr.mxu0 0.0
        %643 = vmatpush1.msra.mxu0 0.0
        %644 = vmatprep.subr.mxu0 0.0
        %645 = vmatpush1.msra.mxu0 0.0
        %646 = vmatprep.subr.mxu0 0.0
        %647 = vmatpush1.msra.mxu0 0.0
        %648 = vmatprep.subr.mxu0 0.0
        %649 = vmatpush1.msra.mxu0 0.0
        %650 = vmatprep.subr.mxu0 0.0
        %651 = vmatpush1.msra.mxu0 0.0
        %652 = vmatprep.mubr.f32.mxu0 0.0
        %653 = vmatmul.mubr.f32.gmra.mrb[0].mxu0 %v568
        %v654 = vpop.f32.mrb[0].mxu0
        %v655 = vadd.f32 0.0, %v654
        %v656 = vpop.f32.mrb[0].mxu0
        %657 = vmatprep.mubr.f32.mxu0 0.0
        %658 = vmatmul.mubr.f32.gmra.mrb[0].mxu0 %v569
        %v659 = vpop.f32.mrb[0].mxu0
        %v660 = vadd.f32 0.0, %v659
        %v661 = vpop.f32.mrb[0].mxu0
        %662 = vmatprep.mubr.f32.mxu0 0.0
        %663 = vmatmul.mubr.f32.gmra.mrb[0].mxu0 %v570
        %v664 = vpop.f32.mrb[0].mxu0
        %v665 = vadd.f32 0.0, %v664
        %v666 = vpop.f32.mrb[0].mxu0
        %667 = vmatprep.mubr.f32.mxu0 0.0
        %668 = vmatmul.mubr.f32.gmra.mrb[0].mxu0 %v571
        %v669 = vpop.f32.mrb[0].mxu0
        %v670 = vadd.f32 0.0, %v669
        %v671 = vpop.f32.mrb[0].mxu0
        %672 = vdwg.mxu0
        %v673 = vld [vmem:[%s400] sm:$0xff]
        %v674 = vld [vmem:[%s400 + $0x8] sm:$0xff]
        %v675 = vld [vmem:[%s400 + $0x10] sm:$0xff]
        %v676 = vld [vmem:[%s400 + $0x18] sm:$0xff]
        %v677 = vld [vmem:[#allocation11] sm:$0xff]
        %v678 = vld [vmem:[#allocation11 + $0x8] sm:$0xff]
        %v679 = vld [vmem:[#allocation11 + $0x10] sm:$0xff]
        %v680 = vld [vmem:[#allocation11 + $0x18] sm:$0xff]
        %v681 = vld [vmem:[#allocation11 + $0x20] sm:$0xff]
        %v682 = vld [vmem:[#allocation11 + $0x28] sm:$0xff]
        %v683 = vld [vmem:[#allocation11 + $0x30] sm:$0xff]
        %v684 = vld [vmem:[#allocation11 + $0x38] sm:$0xff]
        %v685 = vld [vmem:[#allocation11 + $0x40] sm:$0xff]
        %v686 = vld [vmem:[#allocation11 + $0x48] sm:$0xff]
        %v687 = vld [vmem:[#allocation11 + $0x50] sm:$0xff]
        %v688 = vld [vmem:[#allocation11 + $0x58] sm:$0xff]
        %v689 = vld [vmem:[#allocation11 + $0x60] sm:$0xff]
        %v690 = vld [vmem:[#allocation11 + $0x68] sm:$0xff]
        %v691 = vld [vmem:[#allocation11 + $0x70] sm:$0xff]
        %v692 = vld [vmem:[#allocation11 + $0x78] sm:$0xff]
        %693 = vmatprep.subr.mxu0 0.0
        %694 = vmatpush1.msra.mxu0 %v677
        %695 = vmatprep.subr.mxu0 0.0
        %696 = vmatpush1.msra.mxu0 %v678
        %697 = vmatprep.subr.mxu0 0.0
        %698 = vmatpush1.msra.mxu0 %v679
        %699 = vmatprep.subr.mxu0 0.0
        %700 = vmatpush1.msra.mxu0 %v680
        %701 = vmatprep.subr.mxu0 0.0
        %702 = vmatpush1.msra.mxu0 %v681
        %703 = vmatprep.subr.mxu0 0.0
        %704 = vmatpush1.msra.mxu0 %v682
        %705 = vmatprep.subr.mxu0 0.0
        %706 = vmatpush1.msra.mxu0 %v683
        %707 = vmatprep.subr.mxu0 0.0
        %708 = vmatpush1.msra.mxu0 %v684
        %709 = vmatprep.subr.mxu0 0.0
        %710 = vmatpush1.msra.mxu0 %v685
        %711 = vmatprep.subr.mxu0 0.0
        %712 = vmatpush1.msra.mxu0 %v686
        %713 = vmatprep.subr.mxu0 0.0
        %714 = vmatpush1.msra.mxu0 %v687
        %715 = vmatprep.subr.mxu0 0.0
        %716 = vmatpush1.msra.mxu0 %v688
        %717 = vmatprep.subr.mxu0 0.0
        %718 = vmatpush1.msra.mxu0 %v689
        %719 = vmatprep.subr.mxu0 0.0
        %720 = vmatpush1.msra.mxu0 %v690
        %721 = vmatprep.subr.mxu0 0.0
        %722 = vmatpush1.msra.mxu0 %v691
        %723 = vmatprep.subr.mxu0 0.0
        %724 = vmatpush1.msra.mxu0 %v692
        %725 = vmatprep.subr.mxu0 0.0
        %726 = vmatpush1.msra.mxu0 0.0
        %727 = vmatprep.subr.mxu0 0.0
        %728 = vmatpush1.msra.mxu0 0.0
        %729 = vmatprep.subr.mxu0 0.0
        %730 = vmatpush1.msra.mxu0 0.0
        %731 = vmatprep.subr.mxu0 0.0
        %732 = vmatpush1.msra.mxu0 0.0
        %733 = vmatprep.subr.mxu0 0.0
        %734 = vmatpush1.msra.mxu0 0.0
        %735 = vmatprep.subr.mxu0 0.0
        %736 = vmatpush1.msra.mxu0 0.0
        %737 = vmatprep.subr.mxu0 0.0
        %738 = vmatpush1.msra.mxu0 0.0
        %739 = vmatprep.subr.mxu0 0.0
        %740 = vmatpush1.msra.mxu0 0.0
        %741 = vmatprep.subr.mxu0 0.0
        %742 = vmatpush1.msra.mxu0 0.0
        %743 = vmatprep.subr.mxu0 0.0
        %744 = vmatpush1.msra.mxu0 0.0
        %745 = vmatprep.subr.mxu0 0.0
        %746 = vmatpush1.msra.mxu0 0.0
        %747 = vmatprep.subr.mxu0 0.0
        %748 = vmatpush1.msra.mxu0 0.0
        %749 = vmatprep.subr.mxu0 0.0
        %750 = vmatpush1.msra.mxu0 0.0
        %751 = vmatprep.subr.mxu0 0.0
        %752 = vmatpush1.msra.mxu0 0.0
        %753 = vmatprep.subr.mxu0 0.0
        %754 = vmatpush1.msra.mxu0 0.0
        %755 = vmatprep.subr.mxu0 0.0
        %756 = vmatpush1.msra.mxu0 0.0
        %757 = vmatprep.mubr.f32.mxu0 0.0
        %758 = vmatmul.mubr.f32.gmra.mrb[0].mxu0 %v673
        %v759 = vpop.f32.mrb[0].mxu0
        %v760 = vadd.f32 0.0, %v759
        %v761 = vpop.f32.mrb[0].mxu0
        %762 = vmatprep.mubr.f32.mxu0 0.0
        %763 = vmatmul.mubr.f32.gmra.mrb[0].mxu0 %v674
        %v764 = vpop.f32.mrb[0].mxu0
        %v765 = vadd.f32 0.0, %v764
        %v766 = vpop.f32.mrb[0].mxu0
        %767 = vmatprep.mubr.f32.mxu0 0.0
        %768 = vmatmul.mubr.f32.gmra.mrb[0].mxu0 %v675
        %v769 = vpop.f32.mrb[0].mxu0
        %v770 = vadd.f32 0.0, %v769
        %v771 = vpop.f32.mrb[0].mxu0
        %772 = vmatprep.mubr.f32.mxu0 0.0
        %773 = vmatmul.mubr.f32.gmra.mrb[0].mxu0 %v676
        %v774 = vpop.f32.mrb[0].mxu0
        %v775 = vadd.f32 0.0, %v774
        %v776 = vpop.f32.mrb[0].mxu0
        %777 = vdwg.mxu0
        %v778 = vld [vmem:[#allocation13] sm:$0xff]
        %v779 = vld [vmem:[#allocation13 + $0x8] sm:$0xff]
        %v780 = vld [vmem:[#allocation13 + $0x10] sm:$0xff]
        %v781 = vld [vmem:[#allocation13 + $0x18] sm:$0xff]
        %v782 = vld [vmem:[#allocation13 + $0x20] sm:$0xff]
        %v783 = vld [vmem:[#allocation13 + $0x28] sm:$0xff]
        %v784 = vld [vmem:[#allocation13 + $0x30] sm:$0xff]
        %v785 = vld [vmem:[#allocation13 + $0x38] sm:$0xff]
        %v786 = vld [vmem:[#allocation13 + $0x40] sm:$0xff]
        %v787 = vld [vmem:[#allocation13 + $0x48] sm:$0xff]
        %v788 = vld [vmem:[#allocation13 + $0x50] sm:$0xff]
        %v789 = vld [vmem:[#allocation13 + $0x58] sm:$0xff]
        %v790 = vld [vmem:[#allocation13 + $0x60] sm:$0xff]
        %v791 = vld [vmem:[#allocation13 + $0x68] sm:$0xff]
        %v792 = vld [vmem:[#allocation13 + $0x70] sm:$0xff]
        %v793 = vld [vmem:[#allocation13 + $0x78] sm:$0xff]
        %v794 = vld [vmem:[%s7] sm:$0x1]
        %v796 = vlaneseq
        %v797 = vshrl.u32 %v796, 7
        %v798 = vsub.s32 0, %v797
        %v799 = vrot.slane %v794, %v798
        %vm801 = vcmask 261120
        %v803 = vsel %vm801, %v550, 0
        %v806 = vsel %vm801, %v655, 0
        %808 = vmatprep.subr.mxu0 0.0
        %809 = vmatpush1.xpose.msra.mxu0 %v806
        %810 = vmatprep.subr.mxu0 0.0
        %811 = vmatpush1.xpose.msra.mxu0 0.0
        %812 = vmatprep.subr.mxu0 0.0
        %813 = vmatpush1.xpose.msra.mxu0 0.0
        %814 = vmatprep.subr.mxu0 0.0
        %815 = vmatpush1.xpose.msra.mxu0 0.0
        %816 = vmatprep.subr.mxu0 0.0
        %817 = vmatpush1.xpose.msra.mxu0 0.0
        %818 = vmatprep.subr.mxu0 0.0
        %819 = vmatpush1.xpose.msra.mxu0 0.0
        %820 = vmatprep.subr.mxu0 0.0
        %821 = vmatpush1.xpose.msra.mxu0 0.0
        %822 = vmatprep.subr.mxu0 0.0
        %823 = vmatpush1.xpose.msra.mxu0 0.0
        %824 = vmatprep.subr.mxu0 0.0
        %825 = vmatpush1.xpose.msra.mxu0 0.0
        %826 = vmatprep.subr.mxu0 0.0
        %827 = vmatpush1.xpose.msra.mxu0 0.0
        %828 = vmatprep.subr.mxu0 0.0
        %829 = vmatpush1.xpose.msra.mxu0 0.0
        %830 = vmatprep.subr.mxu0 0.0
        %831 = vmatpush1.xpose.msra.mxu0 0.0
        %832 = vmatprep.subr.mxu0 0.0
        %833 = vmatpush1.xpose.msra.mxu0 0.0
        %834 = vmatprep.subr.mxu0 0.0
        %835 = vmatpush1.xpose.msra.mxu0 0.0
        %836 = vmatprep.subr.mxu0 0.0
        %837 = vmatpush1.xpose.msra.mxu0 0.0
        %838 = vmatprep.subr.mxu0 0.0
        %839 = vmatpush1.xpose.msra.mxu0 0.0
        %840 = vmatprep.subr.mxu0 0.0
        %841 = vmatpush1.xpose.msra.mxu0 0.0
        %842 = vmatprep.subr.mxu0 0.0
        %843 = vmatpush1.xpose.msra.mxu0 0.0
        %844 = vmatprep.subr.mxu0 0.0
        %845 = vmatpush1.xpose.msra.mxu0 0.0
        %846 = vmatprep.subr.mxu0 0.0
        %847 = vmatpush1.xpose.msra.mxu0 0.0
        %848 = vmatprep.subr.mxu0 0.0
        %849 = vmatpush1.xpose.msra.mxu0 0.0
        %850 = vmatprep.subr.mxu0 0.0
        %851 = vmatpush1.xpose.msra.mxu0 0.0
        %852 = vmatprep.subr.mxu0 0.0
        %853 = vmatpush1.xpose.msra.mxu0 0.0
        %854 = vmatprep.subr.mxu0 0.0
        %855 = vmatpush1.xpose.msra.mxu0 0.0
        %856 = vmatprep.subr.mxu0 0.0
        %857 = vmatpush1.xpose.msra.mxu0 0.0
        %858 = vmatprep.subr.mxu0 0.0
        %859 = vmatpush1.xpose.msra.mxu0 0.0
        %860 = vmatprep.subr.mxu0 0.0
        %861 = vmatpush1.xpose.msra.mxu0 0.0
        %862 = vmatprep.subr.mxu0 0.0
        %863 = vmatpush1.xpose.msra.mxu0 0.0
        %864 = vmatprep.subr.mxu0 0.0
        %865 = vmatpush1.xpose.msra.mxu0 0.0
        %866 = vmatprep.subr.mxu0 0.0
        %867 = vmatpush1.xpose.msra.mxu0 0.0
        %868 = vmatprep.subr.mxu0 0.0
        %869 = vmatpush1.xpose.msra.mxu0 0.0
        %870 = vmatprep.subr.mxu0 0.0
        %871 = vmatpush1.xpose.msra.mxu0 0.0
        %872 = vmatprep.mubr.f32.mxu0 0.0
        %873 = vmatmul.mubr.f32.gmra.mrb[0].mxu0 %v803
        %v874 = vpop.f32.mrb[0].mxu0
        %v875 = vadd.f32 0.0, %v874
        %v876 = vpop.f32.mrb[0].mxu0
        %877 = vdwg.mxu0
        %v879 = vsel %vm801, %v555, 0
        %v882 = vsel %vm801, %v660, 0
        %884 = vmatprep.subr.mxu0 0.0
        %885 = vmatpush1.xpose.msra.mxu0 %v882
        %886 = vmatprep.subr.mxu0 0.0
        %887 = vmatpush1.xpose.msra.mxu0 0.0
        %888 = vmatprep.subr.mxu0 0.0
        %889 = vmatpush1.xpose.msra.mxu0 0.0
        %890 = vmatprep.subr.mxu0 0.0
        %891 = vmatpush1.xpose.msra.mxu0 0.0
        %892 = vmatprep.subr.mxu0 0.0
        %893 = vmatpush1.xpose.msra.mxu0 0.0
        %894 = vmatprep.subr.mxu0 0.0
        %895 = vmatpush1.xpose.msra.mxu0 0.0
        %896 = vmatprep.subr.mxu0 0.0
        %897 = vmatpush1.xpose.msra.mxu0 0.0
        %898 = vmatprep.subr.mxu0 0.0
        %899 = vmatpush1.xpose.msra.mxu0 0.0
        %900 = vmatprep.subr.mxu0 0.0
        %901 = vmatpush1.xpose.msra.mxu0 0.0
        %902 = vmatprep.subr.mxu0 0.0
        %903 = vmatpush1.xpose.msra.mxu0 0.0
        %904 = vmatprep.subr.mxu0 0.0
        %905 = vmatpush1.xpose.msra.mxu0 0.0
        %906 = vmatprep.subr.mxu0 0.0
        %907 = vmatpush1.xpose.msra.mxu0 0.0
        %908 = vmatprep.subr.mxu0 0.0
        %909 = vmatpush1.xpose.msra.mxu0 0.0
        %910 = vmatprep.subr.mxu0 0.0
        %911 = vmatpush1.xpose.msra.mxu0 0.0
        %912 = vmatprep.subr.mxu0 0.0
        %913 = vmatpush1.xpose.msra.mxu0 0.0
        %914 = vmatprep.subr.mxu0 0.0
        %915 = vmatpush1.xpose.msra.mxu0 0.0
        %916 = vmatprep.subr.mxu0 0.0
        %917 = vmatpush1.xpose.msra.mxu0 0.0
        %918 = vmatprep.subr.mxu0 0.0
        %919 = vmatpush1.xpose.msra.mxu0 0.0
        %920 = vmatprep.subr.mxu0 0.0
        %921 = vmatpush1.xpose.msra.mxu0 0.0
        %922 = vmatprep.subr.mxu0 0.0
        %923 = vmatpush1.xpose.msra.mxu0 0.0
        %924 = vmatprep.subr.mxu0 0.0
        %925 = vmatpush1.xpose.msra.mxu0 0.0
        %926 = vmatprep.subr.mxu0 0.0
        %927 = vmatpush1.xpose.msra.mxu0 0.0
        %928 = vmatprep.subr.mxu0 0.0
        %929 = vmatpush1.xpose.msra.mxu0 0.0
        %930 = vmatprep.subr.mxu0 0.0
        %931 = vmatpush1.xpose.msra.mxu0 0.0
        %932 = vmatprep.subr.mxu0 0.0
        %933 = vmatpush1.xpose.msra.mxu0 0.0
        %934 = vmatprep.subr.mxu0 0.0
        %935 = vmatpush1.xpose.msra.mxu0 0.0
        %936 = vmatprep.subr.mxu0 0.0
        %937 = vmatpush1.xpose.msra.mxu0 0.0
        %938 = vmatprep.subr.mxu0 0.0
        %939 = vmatpush1.xpose.msra.mxu0 0.0
        %940 = vmatprep.subr.mxu0 0.0
        %941 = vmatpush1.xpose.msra.mxu0 0.0
        %942 = vmatprep.subr.mxu0 0.0
        %943 = vmatpush1.xpose.msra.mxu0 0.0
        %944 = vmatprep.subr.mxu0 0.0
        %945 = vmatpush1.xpose.msra.mxu0 0.0
        %946 = vmatprep.subr.mxu0 0.0
        %947 = vmatpush1.xpose.msra.mxu0 0.0
        %948 = vmatprep.mubr.f32.mxu0 0.0
        %949 = vmatmul.mubr.f32.gmra.mrb[0].mxu0 %v879
        %v950 = vpop.f32.mrb[0].mxu0
        %v951 = vadd.f32 0.0, %v950
        %v952 = vpop.f32.mrb[0].mxu0
        %953 = vdwg.mxu0
        %v955 = vsel %vm801, %v560, 0
        %v958 = vsel %vm801, %v665, 0
        %960 = vmatprep.subr.mxu0 0.0
        %961 = vmatpush1.xpose.msra.mxu0 %v958
        %962 = vmatprep.subr.mxu0 0.0
        %963 = vmatpush1.xpose.msra.mxu0 0.0
        %964 = vmatprep.subr.mxu0 0.0
        %965 = vmatpush1.xpose.msra.mxu0 0.0
        %966 = vmatprep.subr.mxu0 0.0
        %967 = vmatpush1.xpose.msra.mxu0 0.0
        %968 = vmatprep.subr.mxu0 0.0
        %969 = vmatpush1.xpose.msra.mxu0 0.0
        %970 = vmatprep.subr.mxu0 0.0
        %971 = vmatpush1.xpose.msra.mxu0 0.0
        %972 = vmatprep.subr.mxu0 0.0
        %973 = vmatpush1.xpose.msra.mxu0 0.0
        %974 = vmatprep.subr.mxu0 0.0
        %975 = vmatpush1.xpose.msra.mxu0 0.0
        %976 = vmatprep.subr.mxu0 0.0
        %977 = vmatpush1.xpose.msra.mxu0 0.0
        %978 = vmatprep.subr.mxu0 0.0
        %979 = vmatpush1.xpose.msra.mxu0 0.0
        %980 = vmatprep.subr.mxu0 0.0
        %981 = vmatpush1.xpose.msra.mxu0 0.0
        %982 = vmatprep.subr.mxu0 0.0
        %983 = vmatpush1.xpose.msra.mxu0 0.0
        %984 = vmatprep.subr.mxu0 0.0
        %985 = vmatpush1.xpose.msra.mxu0 0.0
        %986 = vmatprep.subr.mxu0 0.0
        %987 = vmatpush1.xpose.msra.mxu0 0.0
        %988 = vmatprep.subr.mxu0 0.0
        %989 = vmatpush1.xpose.msra.mxu0 0.0
        %990 = vmatprep.subr.mxu0 0.0
        %991 = vmatpush1.xpose.msra.mxu0 0.0
        %992 = vmatprep.subr.mxu0 0.0
        %993 = vmatpush1.xpose.msra.mxu0 0.0
        %994 = vmatprep.subr.mxu0 0.0
        %995 = vmatpush1.xpose.msra.mxu0 0.0
        %996 = vmatprep.subr.mxu0 0.0
        %997 = vmatpush1.xpose.msra.mxu0 0.0
        %998 = vmatprep.subr.mxu0 0.0
        %999 = vmatpush1.xpose.msra.mxu0 0.0
        %1000 = vmatprep.subr.mxu0 0.0
        %1001 = vmatpush1.xpose.msra.mxu0 0.0
        %1002 = vmatprep.subr.mxu0 0.0
        %1003 = vmatpush1.xpose.msra.mxu0 0.0
        %1004 = vmatprep.subr.mxu0 0.0
        %1005 = vmatpush1.xpose.msra.mxu0 0.0
        %1006 = vmatprep.subr.mxu0 0.0
        %1007 = vmatpush1.xpose.msra.mxu0 0.0
        %1008 = vmatprep.subr.mxu0 0.0
        %1009 = vmatpush1.xpose.msra.mxu0 0.0
        %1010 = vmatprep.subr.mxu0 0.0
        %1011 = vmatpush1.xpose.msra.mxu0 0.0
        %1012 = vmatprep.subr.mxu0 0.0
        %1013 = vmatpush1.xpose.msra.mxu0 0.0
        %1014 = vmatprep.subr.mxu0 0.0
        %1015 = vmatpush1.xpose.msra.mxu0 0.0
        %1016 = vmatprep.subr.mxu0 0.0
        %1017 = vmatpush1.xpose.msra.mxu0 0.0
        %1018 = vmatprep.subr.mxu0 0.0
        %1019 = vmatpush1.xpose.msra.mxu0 0.0
        %1020 = vmatprep.subr.mxu0 0.0
        %1021 = vmatpush1.xpose.msra.mxu0 0.0
        %1022 = vmatprep.subr.mxu0 0.0
        %1023 = vmatpush1.xpose.msra.mxu0 0.0
        %1024 = vmatprep.mubr.f32.mxu0 0.0
        %1025 = vmatmul.mubr.f32.gmra.mrb[0].mxu0 %v955
        %v1026 = vpop.f32.mrb[0].mxu0
        %v1027 = vadd.f32 0.0, %v1026
        %v1028 = vpop.f32.mrb[0].mxu0
        %1029 = vdwg.mxu0
        %v1031 = vsel %vm801, %v565, 0
        %v1034 = vsel %vm801, %v670, 0
        %1036 = vmatprep.subr.mxu0 0.0
        %1037 = vmatpush1.xpose.msra.mxu0 %v1034
        %1038 = vmatprep.subr.mxu0 0.0
        %1039 = vmatpush1.xpose.msra.mxu0 0.0
        %1040 = vmatprep.subr.mxu0 0.0
        %1041 = vmatpush1.xpose.msra.mxu0 0.0
        %1042 = vmatprep.subr.mxu0 0.0
        %1043 = vmatpush1.xpose.msra.mxu0 0.0
        %1044 = vmatprep.subr.mxu0 0.0
        %1045 = vmatpush1.xpose.msra.mxu0 0.0
        %1046 = vmatprep.subr.mxu0 0.0
        %1047 = vmatpush1.xpose.msra.mxu0 0.0
        %1048 = vmatprep.subr.mxu0 0.0
        %1049 = vmatpush1.xpose.msra.mxu0 0.0
        %1050 = vmatprep.subr.mxu0 0.0
        %1051 = vmatpush1.xpose.msra.mxu0 0.0
        %1052 = vmatprep.subr.mxu0 0.0
        %1053 = vmatpush1.xpose.msra.mxu0 0.0
        %1054 = vmatprep.subr.mxu0 0.0
        %1055 = vmatpush1.xpose.msra.mxu0 0.0
        %1056 = vmatprep.subr.mxu0 0.0
        %1057 = vmatpush1.xpose.msra.mxu0 0.0
        %1058 = vmatprep.subr.mxu0 0.0
        %1059 = vmatpush1.xpose.msra.mxu0 0.0
        %1060 = vmatprep.subr.mxu0 0.0
        %1061 = vmatpush1.xpose.msra.mxu0 0.0
        %1062 = vmatprep.subr.mxu0 0.0
        %1063 = vmatpush1.xpose.msra.mxu0 0.0
        %1064 = vmatprep.subr.mxu0 0.0
        %1065 = vmatpush1.xpose.msra.mxu0 0.0
        %1066 = vmatprep.subr.mxu0 0.0
        %1067 = vmatpush1.xpose.msra.mxu0 0.0
        %1068 = vmatprep.subr.mxu0 0.0
        %1069 = vmatpush1.xpose.msra.mxu0 0.0
        %1070 = vmatprep.subr.mxu0 0.0
        %1071 = vmatpush1.xpose.msra.mxu0 0.0
        %1072 = vmatprep.subr.mxu0 0.0
        %1073 = vmatpush1.xpose.msra.mxu0 0.0
        %1074 = vmatprep.subr.mxu0 0.0
        %1075 = vmatpush1.xpose.msra.mxu0 0.0
        %1076 = vmatprep.subr.mxu0 0.0
        %1077 = vmatpush1.xpose.msra.mxu0 0.0
        %1078 = vmatprep.subr.mxu0 0.0
        %1079 = vmatpush1.xpose.msra.mxu0 0.0
        %1080 = vmatprep.subr.mxu0 0.0
        %1081 = vmatpush1.xpose.msra.mxu0 0.0
        %1082 = vmatprep.subr.mxu0 0.0
        %1083 = vmatpush1.xpose.msra.mxu0 0.0
        %1084 = vmatprep.subr.mxu0 0.0
        %1085 = vmatpush1.xpose.msra.mxu0 0.0
        %1086 = vmatprep.subr.mxu0 0.0
        %1087 = vmatpush1.xpose.msra.mxu0 0.0
        %1088 = vmatprep.subr.mxu0 0.0
        %1089 = vmatpush1.xpose.msra.mxu0 0.0
        %1090 = vmatprep.subr.mxu0 0.0
        %1091 = vmatpush1.xpose.msra.mxu0 0.0
        %1092 = vmatprep.subr.mxu0 0.0
        %1093 = vmatpush1.xpose.msra.mxu0 0.0
        %1094 = vmatprep.subr.mxu0 0.0
        %1095 = vmatpush1.xpose.msra.mxu0 0.0
        %1096 = vmatprep.subr.mxu0 0.0
        %1097 = vmatpush1.xpose.msra.mxu0 0.0
        %1098 = vmatprep.subr.mxu0 0.0
        %1099 = vmatpush1.xpose.msra.mxu0 0.0
        %1100 = vmatprep.mubr.f32.mxu0 0.0
        %1101 = vmatmul.mubr.f32.gmra.mrb[0].mxu0 %v1031
        %v1102 = vpop.f32.mrb[0].mxu0
        %v1103 = vadd.f32 0.0, %v1102
        %v1104 = vpop.f32.mrb[0].mxu0
        %1105 = vdwg.mxu0
        %vm1106 = vcmask 64512
        %v1107 = vsel %vm1106, %v875, -inf
        %1108 = vmax.xlane.f32.xlu0 %v1107
        %v1109 = vpop.xlane.xlu0 %1108
        %v1110 = vsel %vm1106, %v951, -inf
        %1111 = vmax.xlane.f32.xlu0 %v1110
        %v1112 = vpop.xlane.xlu0 %1111
        %v1113 = vsel %vm1106, %v1027, -inf
        %1114 = vmax.xlane.f32.xlu0 %v1113
        %v1115 = vpop.xlane.xlu0 %1114
        %v1116 = vsel %vm1106, %v1103, -inf
        %1117 = vmax.xlane.f32.xlu0 %v1116
        %v1118 = vpop.xlane.xlu0 %1117
        %v1119 = vsub.f32 %v875, %v1109
        %v1120 = vsub.f32 %v951, %v1112
        %v1121 = vsub.f32 %v1027, %v1115
        %v1122 = vsub.f32 %v1103, %v1118
        %v1123 = vmul.f32 %v1119, 1.442695
        %v1124 = vpow.pop %v1123
        %v1125 = vmul.f32 %v1120, 1.442695
        %v1126 = vpow.pop %v1125
        %v1127 = vmul.f32 %v1121, 1.442695
        %v1128 = vpow.pop %v1127
        %v1129 = vmul.f32 %v1122, 1.442695
        %v1130 = vpow.pop %v1129
        %v1131 = vsel %vm1106, %v1124, 0.0
        %1132 = vadd.xlane.f32.xlu0 %v1131
        %v1133 = vpop.xlane.xlu0 %1132
        %v1134 = vsel %vm1106, %v1126, 0.0
        %1135 = vadd.xlane.f32.xlu0 %v1134
        %v1136 = vpop.xlane.xlu0 %1135
        %v1137 = vsel %vm1106, %v1128, 0.0
        %1138 = vadd.xlane.f32.xlu0 %v1137
        %v1139 = vpop.xlane.xlu0 %1138
        %v1140 = vsel %vm1106, %v1130, 0.0
        %1141 = vadd.xlane.f32.xlu0 %v1140
        %v1142 = vpop.xlane.xlu0 %1141
        %v1143 = vrcp.pop %v1133
        %v1144 = vmul.f32 %v1124, %v1143
        %v1145 = vrcp.pop %v1136
        %v1146 = vmul.f32 %v1126, %v1145
        %v1147 = vrcp.pop %v1139
        %v1148 = vmul.f32 %v1128, %v1147
        %v1149 = vrcp.pop %v1142
        %v1150 = vmul.f32 %v1130, %v1149
        %v1152 = vsel %vm1106, %v1144, 0
        %1154 = vmatprep.subr.mxu0 0.0
        %1155 = vmatpush1.msra.mxu0 %v760
        %1156 = vmatprep.subr.mxu0 0.0
        %1157 = vmatpush1.msra.mxu0 0.0
        %1158 = vmatprep.subr.mxu0 0.0
        %1159 = vmatpush1.msra.mxu0 0.0
        %1160 = vmatprep.subr.mxu0 0.0
        %1161 = vmatpush1.msra.mxu0 0.0
        %1162 = vmatprep.subr.mxu0 0.0
        %1163 = vmatpush1.msra.mxu0 0.0
        %1164 = vmatprep.subr.mxu0 0.0
        %1165 = vmatpush1.msra.mxu0 0.0
        %1166 = vmatprep.subr.mxu0 0.0
        %1167 = vmatpush1.msra.mxu0 0.0
        %1168 = vmatprep.subr.mxu0 0.0
        %1169 = vmatpush1.msra.mxu0 0.0
        %1170 = vmatprep.subr.mxu0 0.0
        %1171 = vmatpush1.msra.mxu0 0.0
        %1172 = vmatprep.subr.mxu0 0.0
        %1173 = vmatpush1.msra.mxu0 0.0
        %1174 = vmatprep.subr.mxu0 0.0
        %1175 = vmatpush1.msra.mxu0 0.0
        %1176 = vmatprep.subr.mxu0 0.0
        %1177 = vmatpush1.msra.mxu0 0.0
        %1178 = vmatprep.subr.mxu0 0.0
        %1179 = vmatpush1.msra.mxu0 0.0
        %1180 = vmatprep.subr.mxu0 0.0
        %1181 = vmatpush1.msra.mxu0 0.0
        %1182 = vmatprep.subr.mxu0 0.0
        %1183 = vmatpush1.msra.mxu0 0.0
        %1184 = vmatprep.subr.mxu0 0.0
        %1185 = vmatpush1.msra.mxu0 0.0
        %1186 = vmatprep.subr.mxu0 0.0
        %1187 = vmatpush1.msra.mxu0 0.0
        %1188 = vmatprep.subr.mxu0 0.0
        %1189 = vmatpush1.msra.mxu0 0.0
        %1190 = vmatprep.subr.mxu0 0.0
        %1191 = vmatpush1.msra.mxu0 0.0
        %1192 = vmatprep.subr.mxu0 0.0
        %1193 = vmatpush1.msra.mxu0 0.0
        %1194 = vmatprep.subr.mxu0 0.0
        %1195 = vmatpush1.msra.mxu0 0.0
        %1196 = vmatprep.subr.mxu0 0.0
        %1197 = vmatpush1.msra.mxu0 0.0
        %1198 = vmatprep.subr.mxu0 0.0
        %1199 = vmatpush1.msra.mxu0 0.0
        %1200 = vmatprep.subr.mxu0 0.0
        %1201 = vmatpush1.msra.mxu0 0.0
        %1202 = vmatprep.subr.mxu0 0.0
        %1203 = vmatpush1.msra.mxu0 0.0
        %1204 = vmatprep.subr.mxu0 0.0
        %1205 = vmatpush1.msra.mxu0 0.0
        %1206 = vmatprep.subr.mxu0 0.0
        %1207 = vmatpush1.msra.mxu0 0.0
        %1208 = vmatprep.subr.mxu0 0.0
        %1209 = vmatpush1.msra.mxu0 0.0
        %1210 = vmatprep.subr.mxu0 0.0
        %1211 = vmatpush1.msra.mxu0 0.0
        %1212 = vmatprep.subr.mxu0 0.0
        %1213 = vmatpush1.msra.mxu0 0.0
        %1214 = vmatprep.subr.mxu0 0.0
        %1215 = vmatpush1.msra.mxu0 0.0
        %1216 = vmatprep.subr.mxu0 0.0
        %1217 = vmatpush1.msra.mxu0 0.0
        %1218 = vmatprep.mubr.f32.mxu0 0.0
        %1219 = vmatmul.mubr.f32.gmra.mrb[0].mxu0 %v1152
        %v1220 = vpop.f32.mrb[0].mxu0
        %v1221 = vadd.f32 0.0, %v1220
        %v1222 = vpop.f32.mrb[0].mxu0
        %1223 = vdwg.mxu0
        %v1225 = vsel %vm1106, %v1146, 0
        %1227 = vmatprep.subr.mxu0 0.0
        %1228 = vmatpush1.msra.mxu0 %v765
        %1229 = vmatprep.subr.mxu0 0.0
        %1230 = vmatpush1.msra.mxu0 0.0
        %1231 = vmatprep.subr.mxu0 0.0
        %1232 = vmatpush1.msra.mxu0 0.0
        %1233 = vmatprep.subr.mxu0 0.0
        %1234 = vmatpush1.msra.mxu0 0.0
        %1235 = vmatprep.subr.mxu0 0.0
        %1236 = vmatpush1.msra.mxu0 0.0
        %1237 = vmatprep.subr.mxu0 0.0
        %1238 = vmatpush1.msra.mxu0 0.0
        %1239 = vmatprep.subr.mxu0 0.0
        %1240 = vmatpush1.msra.mxu0 0.0
        %1241 = vmatprep.subr.mxu0 0.0
        %1242 = vmatpush1.msra.mxu0 0.0
        %1243 = vmatprep.subr.mxu0 0.0
        %1244 = vmatpush1.msra.mxu0 0.0
        %1245 = vmatprep.subr.mxu0 0.0
        %1246 = vmatpush1.msra.mxu0 0.0
        %1247 = vmatprep.subr.mxu0 0.0
        %1248 = vmatpush1.msra.mxu0 0.0
        %1249 = vmatprep.subr.mxu0 0.0
        %1250 = vmatpush1.msra.mxu0 0.0
        %1251 = vmatprep.subr.mxu0 0.0
        %1252 = vmatpush1.msra.mxu0 0.0
        %1253 = vmatprep.subr.mxu0 0.0
        %1254 = vmatpush1.msra.mxu0 0.0
        %1255 = vmatprep.subr.mxu0 0.0
        %1256 = vmatpush1.msra.mxu0 0.0
        %1257 = vmatprep.subr.mxu0 0.0
        %1258 = vmatpush1.msra.mxu0 0.0
        %1259 = vmatprep.subr.mxu0 0.0
        %1260 = vmatpush1.msra.mxu0 0.0
        %1261 = vmatprep.subr.mxu0 0.0
        %1262 = vmatpush1.msra.mxu0 0.0
        %1263 = vmatprep.subr.mxu0 0.0
        %1264 = vmatpush1.msra.mxu0 0.0
        %1265 = vmatprep.subr.mxu0 0.0
        %1266 = vmatpush1.msra.mxu0 0.0
        %1267 = vmatprep.subr.mxu0 0.0
        %1268 = vmatpush1.msra.mxu0 0.0
        %1269 = vmatprep.subr.mxu0 0.0
        %1270 = vmatpush1.msra.mxu0 0.0
        %1271 = vmatprep.subr.mxu0 0.0
        %1272 = vmatpush1.msra.mxu0 0.0
        %1273 = vmatprep.subr.mxu0 0.0
        %1274 = vmatpush1.msra.mxu0 0.0
        %1275 = vmatprep.subr.mxu0 0.0
        %1276 = vmatpush1.msra.mxu0 0.0
        %1277 = vmatprep.subr.mxu0 0.0
        %1278 = vmatpush1.msra.mxu0 0.0
        %1279 = vmatprep.subr.mxu0 0.0
        %1280 = vmatpush1.msra.mxu0 0.0
        %1281 = vmatprep.subr.mxu0 0.0
        %1282 = vmatpush1.msra.mxu0 0.0
        %1283 = vmatprep.subr.mxu0 0.0
        %1284 = vmatpush1.msra.mxu0 0.0
        %1285 = vmatprep.subr.mxu0 0.0
        %1286 = vmatpush1.msra.mxu0 0.0
        %1287 = vmatprep.subr.mxu0 0.0
        %1288 = vmatpush1.msra.mxu0 0.0
        %1289 = vmatprep.subr.mxu0 0.0
        %1290 = vmatpush1.msra.mxu0 0.0
        %1291 = vmatprep.mubr.f32.mxu0 0.0
        %1292 = vmatmul.mubr.f32.gmra.mrb[0].mxu0 %v1225
        %v1293 = vpop.f32.mrb[0].mxu0
        %v1294 = vadd.f32 0.0, %v1293
        %v1295 = vpop.f32.mrb[0].mxu0
        %1296 = vdwg.mxu0
        %v1298 = vsel %vm1106, %v1148, 0
        %1300 = vmatprep.subr.mxu0 0.0
        %1301 = vmatpush1.msra.mxu0 %v770
        %1302 = vmatprep.subr.mxu0 0.0
        %1303 = vmatpush1.msra.mxu0 0.0
        %1304 = vmatprep.subr.mxu0 0.0
        %1305 = vmatpush1.msra.mxu0 0.0
        %1306 = vmatprep.subr.mxu0 0.0
        %1307 = vmatpush1.msra.mxu0 0.0
        %1308 = vmatprep.subr.mxu0 0.0
        %1309 = vmatpush1.msra.mxu0 0.0
        %1310 = vmatprep.subr.mxu0 0.0
        %1311 = vmatpush1.msra.mxu0 0.0
        %1312 = vmatprep.subr.mxu0 0.0
        %1313 = vmatpush1.msra.mxu0 0.0
        %1314 = vmatprep.subr.mxu0 0.0
        %1315 = vmatpush1.msra.mxu0 0.0
        %1316 = vmatprep.subr.mxu0 0.0
        %1317 = vmatpush1.msra.mxu0 0.0
        %1318 = vmatprep.subr.mxu0 0.0
        %1319 = vmatpush1.msra.mxu0 0.0
        %1320 = vmatprep.subr.mxu0 0.0
        %1321 = vmatpush1.msra.mxu0 0.0
        %1322 = vmatprep.subr.mxu0 0.0
        %1323 = vmatpush1.msra.mxu0 0.0
        %1324 = vmatprep.subr.mxu0 0.0
        %1325 = vmatpush1.msra.mxu0 0.0
        %1326 = vmatprep.subr.mxu0 0.0
        %1327 = vmatpush1.msra.mxu0 0.0
        %1328 = vmatprep.subr.mxu0 0.0
        %1329 = vmatpush1.msra.mxu0 0.0
        %1330 = vmatprep.subr.mxu0 0.0
        %1331 = vmatpush1.msra.mxu0 0.0
        %1332 = vmatprep.subr.mxu0 0.0
        %1333 = vmatpush1.msra.mxu0 0.0
        %1334 = vmatprep.subr.mxu0 0.0
        %1335 = vmatpush1.msra.mxu0 0.0
        %1336 = vmatprep.subr.mxu0 0.0
        %1337 = vmatpush1.msra.mxu0 0.0
        %1338 = vmatprep.subr.mxu0 0.0
        %1339 = vmatpush1.msra.mxu0 0.0
        %1340 = vmatprep.subr.mxu0 0.0
        %1341 = vmatpush1.msra.mxu0 0.0
        %1342 = vmatprep.subr.mxu0 0.0
        %1343 = vmatpush1.msra.mxu0 0.0
        %1344 = vmatprep.subr.mxu0 0.0
        %1345 = vmatpush1.msra.mxu0 0.0
        %1346 = vmatprep.subr.mxu0 0.0
        %1347 = vmatpush1.msra.mxu0 0.0
        %1348 = vmatprep.subr.mxu0 0.0
        %1349 = vmatpush1.msra.mxu0 0.0
        %1350 = vmatprep.subr.mxu0 0.0
        %1351 = vmatpush1.msra.mxu0 0.0
        %1352 = vmatprep.subr.mxu0 0.0
        %1353 = vmatpush1.msra.mxu0 0.0
        %1354 = vmatprep.subr.mxu0 0.0
        %1355 = vmatpush1.msra.mxu0 0.0
        %1356 = vmatprep.subr.mxu0 0.0
        %1357 = vmatpush1.msra.mxu0 0.0
        %1358 = vmatprep.subr.mxu0 0.0
        %1359 = vmatpush1.msra.mxu0 0.0
        %1360 = vmatprep.subr.mxu0 0.0
        %1361 = vmatpush1.msra.mxu0 0.0
        %1362 = vmatprep.subr.mxu0 0.0
        %1363 = vmatpush1.msra.mxu0 0.0
        %1364 = vmatprep.mubr.f32.mxu0 0.0
        %1365 = vmatmul.mubr.f32.gmra.mrb[0].mxu0 %v1298
        %v1366 = vpop.f32.mrb[0].mxu0
        %v1367 = vadd.f32 0.0, %v1366
        %v1368 = vpop.f32.mrb[0].mxu0
        %1369 = vdwg.mxu0
        %v1371 = vsel %vm1106, %v1150, 0
        %1373 = vmatprep.subr.mxu0 0.0
        %1374 = vmatpush1.msra.mxu0 %v775
        %1375 = vmatprep.subr.mxu0 0.0
        %1376 = vmatpush1.msra.mxu0 0.0
        %1377 = vmatprep.subr.mxu0 0.0
        %1378 = vmatpush1.msra.mxu0 0.0
        %1379 = vmatprep.subr.mxu0 0.0
        %1380 = vmatpush1.msra.mxu0 0.0
        %1381 = vmatprep.subr.mxu0 0.0
        %1382 = vmatpush1.msra.mxu0 0.0
        %1383 = vmatprep.subr.mxu0 0.0
        %1384 = vmatpush1.msra.mxu0 0.0
        %1385 = vmatprep.subr.mxu0 0.0
        %1386 = vmatpush1.msra.mxu0 0.0
        %1387 = vmatprep.subr.mxu0 0.0
        %1388 = vmatpush1.msra.mxu0 0.0
        %1389 = vmatprep.subr.mxu0 0.0
        %1390 = vmatpush1.msra.mxu0 0.0
        %1391 = vmatprep.subr.mxu0 0.0
        %1392 = vmatpush1.msra.mxu0 0.0
        %1393 = vmatprep.subr.mxu0 0.0
        %1394 = vmatpush1.msra.mxu0 0.0
        %1395 = vmatprep.subr.mxu0 0.0
        %1396 = vmatpush1.msra.mxu0 0.0
        %1397 = vmatprep.subr.mxu0 0.0
        %1398 = vmatpush1.msra.mxu0 0.0
        %1399 = vmatprep.subr.mxu0 0.0
        %1400 = vmatpush1.msra.mxu0 0.0
        %1401 = vmatprep.subr.mxu0 0.0
        %1402 = vmatpush1.msra.mxu0 0.0
        %1403 = vmatprep.subr.mxu0 0.0
        %1404 = vmatpush1.msra.mxu0 0.0
        %1405 = vmatprep.subr.mxu0 0.0
        %1406 = vmatpush1.msra.mxu0 0.0
        %1407 = vmatprep.subr.mxu0 0.0
        %1408 = vmatpush1.msra.mxu0 0.0
        %1409 = vmatprep.subr.mxu0 0.0
        %1410 = vmatpush1.msra.mxu0 0.0
        %1411 = vmatprep.subr.mxu0 0.0
        %1412 = vmatpush1.msra.mxu0 0.0
        %1413 = vmatprep.subr.mxu0 0.0
        %1414 = vmatpush1.msra.mxu0 0.0
        %1415 = vmatprep.subr.mxu0 0.0
        %1416 = vmatpush1.msra.mxu0 0.0
        %1417 = vmatprep.subr.mxu0 0.0
        %1418 = vmatpush1.msra.mxu0 0.0
        %1419 = vmatprep.subr.mxu0 0.0
        %1420 = vmatpush1.msra.mxu0 0.0
        %1421 = vmatprep.subr.mxu0 0.0
        %1422 = vmatpush1.msra.mxu0 0.0
        %1423 = vmatprep.subr.mxu0 0.0
        %1424 = vmatpush1.msra.mxu0 0.0
        %1425 = vmatprep.subr.mxu0 0.0
        %1426 = vmatpush1.msra.mxu0 0.0
        %1427 = vmatprep.subr.mxu0 0.0
        %1428 = vmatpush1.msra.mxu0 0.0
        %1429 = vmatprep.subr.mxu0 0.0
        %1430 = vmatpush1.msra.mxu0 0.0
        %1431 = vmatprep.subr.mxu0 0.0
        %1432 = vmatpush1.msra.mxu0 0.0
        %1433 = vmatprep.subr.mxu0 0.0
        %1434 = vmatpush1.msra.mxu0 0.0
        %1435 = vmatprep.subr.mxu0 0.0
        %1436 = vmatpush1.msra.mxu0 0.0
        %1437 = vmatprep.mubr.f32.mxu0 0.0
        %1438 = vmatmul.mubr.f32.gmra.mrb[0].mxu0 %v1371
        %v1439 = vpop.f32.mrb[0].mxu0
        %v1440 = vadd.f32 0.0, %v1439
        %v1441 = vpop.f32.mrb[0].mxu0
        %1442 = vdwg.mxu0
        %v1444 = vsel %vm801, %v1221, 0
        %v1447 = vsel %vm801, %v1294, 0
        %v1450 = vsel %vm801, %v1367, 0
        %v1453 = vsel %vm801, %v1440, 0
        %1455 = vmatprep.subr.mxu0 0.0
        %1456 = vmatpush1.msra.mxu0 %v778
        %1457 = vmatprep.subr.mxu0 0.0
        %1458 = vmatpush1.msra.mxu0 %v779
        %1459 = vmatprep.subr.mxu0 0.0
        %1460 = vmatpush1.msra.mxu0 %v780
        %1461 = vmatprep.subr.mxu0 0.0
        %1462 = vmatpush1.msra.mxu0 %v781
        %1463 = vmatprep.subr.mxu0 0.0
        %1464 = vmatpush1.msra.mxu0 0.0
        %1465 = vmatprep.subr.mxu0 0.0
        %1466 = vmatpush1.msra.mxu0 0.0
        %1467 = vmatprep.subr.mxu0 0.0
        %1468 = vmatpush1.msra.mxu0 0.0
        %1469 = vmatprep.subr.mxu0 0.0
        %1470 = vmatpush1.msra.mxu0 0.0
        %1471 = vmatprep.subr.mxu0 0.0
        %1472 = vmatpush1.msra.mxu0 0.0
        %1473 = vmatprep.subr.mxu0 0.0
        %1474 = vmatpush1.msra.mxu0 0.0
        %1475 = vmatprep.subr.mxu0 0.0
        %1476 = vmatpush1.msra.mxu0 0.0
        %1477 = vmatprep.subr.mxu0 0.0
        %1478 = vmatpush1.msra.mxu0 0.0
        %1479 = vmatprep.subr.mxu0 0.0
        %1480 = vmatpush1.msra.mxu0 0.0
        %1481 = vmatprep.subr.mxu0 0.0
        %1482 = vmatpush1.msra.mxu0 0.0
        %1483 = vmatprep.subr.mxu0 0.0
        %1484 = vmatpush1.msra.mxu0 0.0
        %1485 = vmatprep.subr.mxu0 0.0
        %1486 = vmatpush1.msra.mxu0 0.0
        %1487 = vmatprep.subr.mxu0 0.0
        %1488 = vmatpush1.msra.mxu0 0.0
        %1489 = vmatprep.subr.mxu0 0.0
        %1490 = vmatpush1.msra.mxu0 0.0
        %1491 = vmatprep.subr.mxu0 0.0
        %1492 = vmatpush1.msra.mxu0 0.0
        %1493 = vmatprep.subr.mxu0 0.0
        %1494 = vmatpush1.msra.mxu0 0.0
        %1495 = vmatprep.subr.mxu0 0.0
        %1496 = vmatpush1.msra.mxu0 0.0
        %1497 = vmatprep.subr.mxu0 0.0
        %1498 = vmatpush1.msra.mxu0 0.0
        %1499 = vmatprep.subr.mxu0 0.0
        %1500 = vmatpush1.msra.mxu0 0.0
        %1501 = vmatprep.subr.mxu0 0.0
        %1502 = vmatpush1.msra.mxu0 0.0
        %1503 = vmatprep.subr.mxu0 0.0
        %1504 = vmatpush1.msra.mxu0 0.0
        %1505 = vmatprep.subr.mxu0 0.0
        %1506 = vmatpush1.msra.mxu0 0.0
        %1507 = vmatprep.subr.mxu0 0.0
        %1508 = vmatpush1.msra.mxu0 0.0
        %1509 = vmatprep.subr.mxu0 0.0
        %1510 = vmatpush1.msra.mxu0 0.0
        %1511 = vmatprep.subr.mxu0 0.0
        %1512 = vmatpush1.msra.mxu0 0.0
        %1513 = vmatprep.subr.mxu0 0.0
        %1514 = vmatpush1.msra.mxu0 0.0
        %1515 = vmatprep.subr.mxu0 0.0
        %1516 = vmatpush1.msra.mxu0 0.0
        %1517 = vmatprep.subr.mxu0 0.0
        %1518 = vmatpush1.msra.mxu0 0.0
        %1519 = vmatprep.mubr.f32.mxu0 0.0
        %1520 = vmatmul.mubr.f32.gmra.mrb[0].mxu0 %v1444
        %v1521 = vpop.f32.mrb[0].mxu0
        %v1522 = vadd.f32 0.0, %v1521
        %v1523 = vpop.f32.mrb[0].mxu0
        %1524 = vmatprep.mubr.f32.mxu0 0.0
        %1525 = vmatmul.mubr.f32.gmra.mrb[0].mxu0 %v1447
        %v1526 = vpop.f32.mrb[0].mxu0
        %v1527 = vadd.f32 0.0, %v1526
        %v1528 = vpop.f32.mrb[0].mxu0
        %1529 = vmatprep.mubr.f32.mxu0 0.0
        %1530 = vmatmul.mubr.f32.gmra.mrb[0].mxu0 %v1450
        %v1531 = vpop.f32.mrb[0].mxu0
        %v1532 = vadd.f32 0.0, %v1531
        %v1533 = vpop.f32.mrb[0].mxu0
        %1534 = vmatprep.mubr.f32.mxu0 0.0
        %1535 = vmatmul.mubr.f32.gmra.mrb[0].mxu0 %v1453
        %v1536 = vpop.f32.mrb[0].mxu0
        %v1537 = vadd.f32 0.0, %v1536
        %v1538 = vpop.f32.mrb[0].mxu0
        %1539 = vdwg.mxu0
        %v1540 = vadd.f32 %v799, %v1522
        %v1541 = vadd.f32 %v799, %v1527
        %v1542 = vadd.f32 %v799, %v1532
        %v1543 = vadd.f32 %v799, %v1537
        %1544 = vrot.lane.b32.xlu0 %v550, 96
        %v1545 = vpop.permute.xlu0 %1544
        %1546 = vrot.lane.b32.xlu0 %v655, 96
        %v1547 = vpop.permute.xlu0 %1546
        %v1548 = vsel %vm801, %v1545, 0
        %v1550 = vsel %vm801, %v1547, 0
        %1552 = vmatprep.subr.mxu0 0.0
        %1553 = vmatpush1.xpose.msra.mxu0 %v1550
        %1554 = vmatprep.subr.mxu0 0.0
        %1555 = vmatpush1.xpose.msra.mxu0 0.0
        %1556 = vmatprep.subr.mxu0 0.0
        %1557 = vmatpush1.xpose.msra.mxu0 0.0
        %1558 = vmatprep.subr.mxu0 0.0
        %1559 = vmatpush1.xpose.msra.mxu0 0.0
        %1560 = vmatprep.subr.mxu0 0.0
        %1561 = vmatpush1.xpose.msra.mxu0 0.0
        %1562 = vmatprep.subr.mxu0 0.0
        %1563 = vmatpush1.xpose.msra.mxu0 0.0
        %1564 = vmatprep.subr.mxu0 0.0
        %1565 = vmatpush1.xpose.msra.mxu0 0.0
        %1566 = vmatprep.subr.mxu0 0.0
        %1567 = vmatpush1.xpose.msra.mxu0 0.0
        %1568 = vmatprep.subr.mxu0 0.0
        %1569 = vmatpush1.xpose.msra.mxu0 0.0
        %1570 = vmatprep.subr.mxu0 0.0
        %1571 = vmatpush1.xpose.msra.mxu0 0.0
        %1572 = vmatprep.subr.mxu0 0.0
        %1573 = vmatpush1.xpose.msra.mxu0 0.0
        %1574 = vmatprep.subr.mxu0 0.0
        %1575 = vmatpush1.xpose.msra.mxu0 0.0
        %1576 = vmatprep.subr.mxu0 0.0
        %1577 = vmatpush1.xpose.msra.mxu0 0.0
        %1578 = vmatprep.subr.mxu0 0.0
        %1579 = vmatpush1.xpose.msra.mxu0 0.0
        %1580 = vmatprep.subr.mxu0 0.0
        %1581 = vmatpush1.xpose.msra.mxu0 0.0
        %1582 = vmatprep.subr.mxu0 0.0
        %1583 = vmatpush1.xpose.msra.mxu0 0.0
        %1584 = vmatprep.subr.mxu0 0.0
        %1585 = vmatpush1.xpose.msra.mxu0 0.0
        %1586 = vmatprep.subr.mxu0 0.0
        %1587 = vmatpush1.xpose.msra.mxu0 0.0
        %1588 = vmatprep.subr.mxu0 0.0
        %1589 = vmatpush1.xpose.msra.mxu0 0.0
        %1590 = vmatprep.subr.mxu0 0.0
        %1591 = vmatpush1.xpose.msra.mxu0 0.0
        %1592 = vmatprep.subr.mxu0 0.0
        %1593 = vmatpush1.xpose.msra.mxu0 0.0
        %1594 = vmatprep.subr.mxu0 0.0
        %1595 = vmatpush1.xpose.msra.mxu0 0.0
        %1596 = vmatprep.subr.mxu0 0.0
        %1597 = vmatpush1.xpose.msra.mxu0 0.0
        %1598 = vmatprep.subr.mxu0 0.0
        %1599 = vmatpush1.xpose.msra.mxu0 0.0
        %1600 = vmatprep.subr.mxu0 0.0
        %1601 = vmatpush1.xpose.msra.mxu0 0.0
        %1602 = vmatprep.subr.mxu0 0.0
        %1603 = vmatpush1.xpose.msra.mxu0 0.0
        %1604 = vmatprep.subr.mxu0 0.0
        %1605 = vmatpush1.xpose.msra.mxu0 0.0
        %1606 = vmatprep.subr.mxu0 0.0
        %1607 = vmatpush1.xpose.msra.mxu0 0.0
        %1608 = vmatprep.subr.mxu0 0.0
        %1609 = vmatpush1.xpose.msra.mxu0 0.0
        %1610 = vmatprep.subr.mxu0 0.0
        %1611 = vmatpush1.xpose.msra.mxu0 0.0
        %1612 = vmatprep.subr.mxu0 0.0
        %1613 = vmatpush1.xpose.msra.mxu0 0.0
        %1614 = vmatprep.subr.mxu0 0.0
        %1615 = vmatpush1.xpose.msra.mxu0 0.0
        %1616 = vmatprep.mubr.f32.mxu0 0.0
        %1617 = vmatmul.mubr.f32.gmra.mrb[0].mxu0 %v1548
        %v1618 = vpop.f32.mrb[0].mxu0
        %v1619 = vadd.f32 0.0, %v1618
        %v1620 = vpop.f32.mrb[0].mxu0
        %1621 = vdwg.mxu0
        %1622 = vrot.lane.b32.xlu0 %v555, 96
        %v1623 = vpop.permute.xlu0 %1622
        %1624 = vrot.lane.b32.xlu0 %v660, 96
        %v1625 = vpop.permute.xlu0 %1624
        %v1626 = vsel %vm801, %v1623, 0
        %v1628 = vsel %vm801, %v1625, 0
        %1630 = vmatprep.subr.mxu0 0.0
        %1631 = vmatpush1.xpose.msra.mxu0 %v1628
        %1632 = vmatprep.subr.mxu0 0.0
        %1633 = vmatpush1.xpose.msra.mxu0 0.0
        %1634 = vmatprep.subr.mxu0 0.0
        %1635 = vmatpush1.xpose.msra.mxu0 0.0
        %1636 = vmatprep.subr.mxu0 0.0
        %1637 = vmatpush1.xpose.msra.mxu0 0.0
        %1638 = vmatprep.subr.mxu0 0.0
        %1639 = vmatpush1.xpose.msra.mxu0 0.0
        %1640 = vmatprep.subr.mxu0 0.0
        %1641 = vmatpush1.xpose.msra.mxu0 0.0
        %1642 = vmatprep.subr.mxu0 0.0
        %1643 = vmatpush1.xpose.msra.mxu0 0.0
        %1644 = vmatprep.subr.mxu0 0.0
        %1645 = vmatpush1.xpose.msra.mxu0 0.0
        %1646 = vmatprep.subr.mxu0 0.0
        %1647 = vmatpush1.xpose.msra.mxu0 0.0
        %1648 = vmatprep.subr.mxu0 0.0
        %1649 = vmatpush1.xpose.msra.mxu0 0.0
        %1650 = vmatprep.subr.mxu0 0.0
        %1651 = vmatpush1.xpose.msra.mxu0 0.0
        %1652 = vmatprep.subr.mxu0 0.0
        %1653 = vmatpush1.xpose.msra.mxu0 0.0
        %1654 = vmatprep.subr.mxu0 0.0
        %1655 = vmatpush1.xpose.msra.mxu0 0.0
        %1656 = vmatprep.subr.mxu0 0.0
        %1657 = vmatpush1.xpose.msra.mxu0 0.0
        %1658 = vmatprep.subr.mxu0 0.0
        %1659 = vmatpush1.xpose.msra.mxu0 0.0
        %1660 = vmatprep.subr.mxu0 0.0
        %1661 = vmatpush1.xpose.msra.mxu0 0.0
        %1662 = vmatprep.subr.mxu0 0.0
        %1663 = vmatpush1.xpose.msra.mxu0 0.0
        %1664 = vmatprep.subr.mxu0 0.0
        %1665 = vmatpush1.xpose.msra.mxu0 0.0
        %1666 = vmatprep.subr.mxu0 0.0
        %1667 = vmatpush1.xpose.msra.mxu0 0.0
        %1668 = vmatprep.subr.mxu0 0.0
        %1669 = vmatpush1.xpose.msra.mxu0 0.0
        %1670 = vmatprep.subr.mxu0 0.0
        %1671 = vmatpush1.xpose.msra.mxu0 0.0
        %1672 = vmatprep.subr.mxu0 0.0
        %1673 = vmatpush1.xpose.msra.mxu0 0.0
        %1674 = vmatprep.subr.mxu0 0.0
        %1675 = vmatpush1.xpose.msra.mxu0 0.0
        %1676 = vmatprep.subr.mxu0 0.0
        %1677 = vmatpush1.xpose.msra.mxu0 0.0
        %1678 = vmatprep.subr.mxu0 0.0
        %1679 = vmatpush1.xpose.msra.mxu0 0.0
        %1680 = vmatprep.subr.mxu0 0.0
        %1681 = vmatpush1.xpose.msra.mxu0 0.0
        %1682 = vmatprep.subr.mxu0 0.0
        %1683 = vmatpush1.xpose.msra.mxu0 0.0
        %1684 = vmatprep.subr.mxu0 0.0
        %1685 = vmatpush1.xpose.msra.mxu0 0.0
        %1686 = vmatprep.subr.mxu0 0.0
        %1687 = vmatpush1.xpose.msra.mxu0 0.0
        %1688 = vmatprep.subr.mxu0 0.0
        %1689 = vmatpush1.xpose.msra.mxu0 0.0
        %1690 = vmatprep.subr.mxu0 0.0
        %1691 = vmatpush1.xpose.msra.mxu0 0.0
        %1692 = vmatprep.subr.mxu0 0.0
        %1693 = vmatpush1.xpose.msra.mxu0 0.0
        %1694 = vmatprep.mubr.f32.mxu0 0.0
        %1695 = vmatmul.mubr.f32.gmra.mrb[0].mxu0 %v1626
        %v1696 = vpop.f32.mrb[0].mxu0
        %v1697 = vadd.f32 0.0, %v1696
        %v1698 = vpop.f32.mrb[0].mxu0
        %1699 = vdwg.mxu0
        %1700 = vrot.lane.b32.xlu0 %v560, 96
        %v1701 = vpop.permute.xlu0 %1700
        %1702 = vrot.lane.b32.xlu0 %v665, 96
        %v1703 = vpop.permute.xlu0 %1702
        %v1704 = vsel %vm801, %v1701, 0
        %v1706 = vsel %vm801, %v1703, 0
        %1708 = vmatprep.subr.mxu0 0.0
        %1709 = vmatpush1.xpose.msra.mxu0 %v1706
        %1710 = vmatprep.subr.mxu0 0.0
        %1711 = vmatpush1.xpose.msra.mxu0 0.0
        %1712 = vmatprep.subr.mxu0 0.0
        %1713 = vmatpush1.xpose.msra.mxu0 0.0
        %1714 = vmatprep.subr.mxu0 0.0
        %1715 = vmatpush1.xpose.msra.mxu0 0.0
        %1716 = vmatprep.subr.mxu0 0.0
        %1717 = vmatpush1.xpose.msra.mxu0 0.0
        %1718 = vmatprep.subr.mxu0 0.0
        %1719 = vmatpush1.xpose.msra.mxu0 0.0
        %1720 = vmatprep.subr.mxu0 0.0
        %1721 = vmatpush1.xpose.msra.mxu0 0.0
        %1722 = vmatprep.subr.mxu0 0.0
        %1723 = vmatpush1.xpose.msra.mxu0 0.0
        %1724 = vmatprep.subr.mxu0 0.0
        %1725 = vmatpush1.xpose.msra.mxu0 0.0
        %1726 = vmatprep.subr.mxu0 0.0
        %1727 = vmatpush1.xpose.msra.mxu0 0.0
        %1728 = vmatprep.subr.mxu0 0.0
        %1729 = vmatpush1.xpose.msra.mxu0 0.0
        %1730 = vmatprep.subr.mxu0 0.0
        %1731 = vmatpush1.xpose.msra.mxu0 0.0
        %1732 = vmatprep.subr.mxu0 0.0
        %1733 = vmatpush1.xpose.msra.mxu0 0.0
        %1734 = vmatprep.subr.mxu0 0.0
        %1735 = vmatpush1.xpose.msra.mxu0 0.0
        %1736 = vmatprep.subr.mxu0 0.0
        %1737 = vmatpush1.xpose.msra.mxu0 0.0
        %1738 = vmatprep.subr.mxu0 0.0
        %1739 = vmatpush1.xpose.msra.mxu0 0.0
        %1740 = vmatprep.subr.mxu0 0.0
        %1741 = vmatpush1.xpose.msra.mxu0 0.0
        %1742 = vmatprep.subr.mxu0 0.0
        %1743 = vmatpush1.xpose.msra.mxu0 0.0
        %1744 = vmatprep.subr.mxu0 0.0
        %1745 = vmatpush1.xpose.msra.mxu0 0.0
        %1746 = vmatprep.subr.mxu0 0.0
        %1747 = vmatpush1.xpose.msra.mxu0 0.0
        %1748 = vmatprep.subr.mxu0 0.0
        %1749 = vmatpush1.xpose.msra.mxu0 0.0
        %1750 = vmatprep.subr.mxu0 0.0
        %1751 = vmatpush1.xpose.msra.mxu0 0.0
        %1752 = vmatprep.subr.mxu0 0.0
        %1753 = vmatpush1.xpose.msra.mxu0 0.0
        %1754 = vmatprep.subr.mxu0 0.0
        %1755 = vmatpush1.xpose.msra.mxu0 0.0
        %1756 = vmatprep.subr.mxu0 0.0
        %1757 = vmatpush1.xpose.msra.mxu0 0.0
        %1758 = vmatprep.subr.mxu0 0.0
        %1759 = vmatpush1.xpose.msra.mxu0 0.0
        %1760 = vmatprep.subr.mxu0 0.0
        %1761 = vmatpush1.xpose.msra.mxu0 0.0
        %1762 = vmatprep.subr.mxu0 0.0
        %1763 = vmatpush1.xpose.msra.mxu0 0.0
        %1764 = vmatprep.subr.mxu0 0.0
        %1765 = vmatpush1.xpose.msra.mxu0 0.0
        %1766 = vmatprep.subr.mxu0 0.0
        %1767 = vmatpush1.xpose.msra.mxu0 0.0
        %1768 = vmatprep.subr.mxu0 0.0
        %1769 = vmatpush1.xpose.msra.mxu0 0.0
        %1770 = vmatprep.subr.mxu0 0.0
        %1771 = vmatpush1.xpose.msra.mxu0 0.0
        %1772 = vmatprep.mubr.f32.mxu0 0.0
        %1773 = vmatmul.mubr.f32.gmra.mrb[0].mxu0 %v1704
        %v1774 = vpop.f32.mrb[0].mxu0
        %v1775 = vadd.f32 0.0, %v1774
        %v1776 = vpop.f32.mrb[0].mxu0
        %1777 = vdwg.mxu0
        %1778 = vrot.lane.b32.xlu0 %v565, 96
        %v1779 = vpop.permute.xlu0 %1778
        %1780 = vrot.lane.b32.xlu0 %v670, 96
        %v1781 = vpop.permute.xlu0 %1780
        %v1782 = vsel %vm801, %v1779, 0
        %v1784 = vsel %vm801, %v1781, 0
        %1786 = vmatprep.subr.mxu0 0.0
        %1787 = vmatpush1.xpose.msra.mxu0 %v1784
        %1788 = vmatprep.subr.mxu0 0.0
        %1789 = vmatpush1.xpose.msra.mxu0 0.0
        %1790 = vmatprep.subr.mxu0 0.0
        %1791 = vmatpush1.xpose.msra.mxu0 0.0
        %1792 = vmatprep.subr.mxu0 0.0
        %1793 = vmatpush1.xpose.msra.mxu0 0.0
        %1794 = vmatprep.subr.mxu0 0.0
        %1795 = vmatpush1.xpose.msra.mxu0 0.0
        %1796 = vmatprep.subr.mxu0 0.0
        %1797 = vmatpush1.xpose.msra.mxu0 0.0
        %1798 = vmatprep.subr.mxu0 0.0
        %1799 = vmatpush1.xpose.msra.mxu0 0.0
        %1800 = vmatprep.subr.mxu0 0.0
        %1801 = vmatpush1.xpose.msra.mxu0 0.0
        %1802 = vmatprep.subr.mxu0 0.0
        %1803 = vmatpush1.xpose.msra.mxu0 0.0
        %1804 = vmatprep.subr.mxu0 0.0
        %1805 = vmatpush1.xpose.msra.mxu0 0.0
        %1806 = vmatprep.subr.mxu0 0.0
        %1807 = vmatpush1.xpose.msra.mxu0 0.0
        %1808 = vmatprep.subr.mxu0 0.0
        %1809 = vmatpush1.xpose.msra.mxu0 0.0
        %1810 = vmatprep.subr.mxu0 0.0
        %1811 = vmatpush1.xpose.msra.mxu0 0.0
        %1812 = vmatprep.subr.mxu0 0.0
        %1813 = vmatpush1.xpose.msra.mxu0 0.0
        %1814 = vmatprep.subr.mxu0 0.0
        %1815 = vmatpush1.xpose.msra.mxu0 0.0
        %1816 = vmatprep.subr.mxu0 0.0
        %1817 = vmatpush1.xpose.msra.mxu0 0.0
        %1818 = vmatprep.subr.mxu0 0.0
        %1819 = vmatpush1.xpose.msra.mxu0 0.0
        %1820 = vmatprep.subr.mxu0 0.0
        %1821 = vmatpush1.xpose.msra.mxu0 0.0
        %1822 = vmatprep.subr.mxu0 0.0
        %1823 = vmatpush1.xpose.msra.mxu0 0.0
        %1824 = vmatprep.subr.mxu0 0.0
        %1825 = vmatpush1.xpose.msra.mxu0 0.0
        %1826 = vmatprep.subr.mxu0 0.0
        %1827 = vmatpush1.xpose.msra.mxu0 0.0
        %1828 = vmatprep.subr.mxu0 0.0
        %1829 = vmatpush1.xpose.msra.mxu0 0.0
        %1830 = vmatprep.subr.mxu0 0.0
        %1831 = vmatpush1.xpose.msra.mxu0 0.0
        %1832 = vmatprep.subr.mxu0 0.0
        %1833 = vmatpush1.xpose.msra.mxu0 0.0
        %1834 = vmatprep.subr.mxu0 0.0
        %1835 = vmatpush1.xpose.msra.mxu0 0.0
        %1836 = vmatprep.subr.mxu0 0.0
        %1837 = vmatpush1.xpose.msra.mxu0 0.0
        %1838 = vmatprep.subr.mxu0 0.0
        %1839 = vmatpush1.xpose.msra.mxu0 0.0
        %1840 = vmatprep.subr.mxu0 0.0
        %1841 = vmatpush1.xpose.msra.mxu0 0.0
        %1842 = vmatprep.subr.mxu0 0.0
        %1843 = vmatpush1.xpose.msra.mxu0 0.0
        %1844 = vmatprep.subr.mxu0 0.0
        %1845 = vmatpush1.xpose.msra.mxu0 0.0
        %1846 = vmatprep.subr.mxu0 0.0
        %1847 = vmatpush1.xpose.msra.mxu0 0.0
        %1848 = vmatprep.subr.mxu0 0.0
        %1849 = vmatpush1.xpose.msra.mxu0 0.0
        %1850 = vmatprep.mubr.f32.mxu0 0.0
        %1851 = vmatmul.mubr.f32.gmra.mrb[0].mxu0 %v1782
        %v1852 = vpop.f32.mrb[0].mxu0
        %v1853 = vadd.f32 0.0, %v1852
        %v1854 = vpop.f32.mrb[0].mxu0
        %1855 = vdwg.mxu0
        %v1856 = vsel %vm1106, %v1619, -inf
        %1857 = vmax.xlane.f32.xlu0 %v1856
        %v1858 = vpop.xlane.xlu0 %1857
        %v1859 = vsel %vm1106, %v1697, -inf
        %1860 = vmax.xlane.f32.xlu0 %v1859
        %v1861 = vpop.xlane.xlu0 %1860
        %v1862 = vsel %vm1106, %v1775, -inf
        %1863 = vmax.xlane.f32.xlu0 %v1862
        %v1864 = vpop.xlane.xlu0 %1863
        %v1865 = vsel %vm1106, %v1853, -inf
        %1866 = vmax.xlane.f32.xlu0 %v1865
        %v1867 = vpop.xlane.xlu0 %1866
        %v1868 = vsub.f32 %v1619, %v1858
        %v1869 = vsub.f32 %v1697, %v1861
        %v1870 = vsub.f32 %v1775, %v1864
        %v1871 = vsub.f32 %v1853, %v1867
        %v1872 = vmul.f32 %v1868, 1.442695
        %v1873 = vpow.pop %v1872
        %v1874 = vmul.f32 %v1869, 1.442695
        %v1875 = vpow.pop %v1874
        %v1876 = vmul.f32 %v1870, 1.442695
        %v1877 = vpow.pop %v1876
        %v1878 = vmul.f32 %v1871, 1.442695
        %v1879 = vpow.pop %v1878
        %v1880 = vsel %vm1106, %v1873, 0.0
        %1881 = vadd.xlane.f32.xlu0 %v1880
        %v1882 = vpop.xlane.xlu0 %1881
        %v1883 = vsel %vm1106, %v1875, 0.0
        %1884 = vadd.xlane.f32.xlu0 %v1883
        %v1885 = vpop.xlane.xlu0 %1884
        %v1886 = vsel %vm1106, %v1877, 0.0
        %1887 = vadd.xlane.f32.xlu0 %v1886
        %v1888 = vpop.xlane.xlu0 %1887
        %v1889 = vsel %vm1106, %v1879, 0.0
        %1890 = vadd.xlane.f32.xlu0 %v1889
        %v1891 = vpop.xlane.xlu0 %1890
        %v1892 = vrcp.pop %v1882
        %v1893 = vmul.f32 %v1873, %v1892
        %v1894 = vrcp.pop %v1885
        %v1895 = vmul.f32 %v1875, %v1894
        %v1896 = vrcp.pop %v1888
        %v1897 = vmul.f32 %v1877, %v1896
        %v1898 = vrcp.pop %v1891
        %v1899 = vmul.f32 %v1879, %v1898
        %1901 = vrot.lane.b32.xlu0 %v760, 96
        %v1902 = vpop.permute.xlu0 %1901
        %v1905 = vsel %vm1106, %v1893, 0
        %1907 = vmatprep.subr.mxu0 0.0
        %1908 = vmatpush1.msra.mxu0 %v1902
        %1909 = vmatprep.subr.mxu0 0.0
        %1910 = vmatpush1.msra.mxu0 0.0
        %1911 = vmatprep.subr.mxu0 0.0
        %1912 = vmatpush1.msra.mxu0 0.0
        %1913 = vmatprep.subr.mxu0 0.0
        %1914 = vmatpush1.msra.mxu0 0.0
        %1915 = vmatprep.subr.mxu0 0.0
        %1916 = vmatpush1.msra.mxu0 0.0
        %1917 = vmatprep.subr.mxu0 0.0
        %1918 = vmatpush1.msra.mxu0 0.0
        %1919 = vmatprep.subr.mxu0 0.0
        %1920 = vmatpush1.msra.mxu0 0.0
        %1921 = vmatprep.subr.mxu0 0.0
        %1922 = vmatpush1.msra.mxu0 0.0
        %1923 = vmatprep.subr.mxu0 0.0
        %1924 = vmatpush1.msra.mxu0 0.0
        %1925 = vmatprep.subr.mxu0 0.0
        %1926 = vmatpush1.msra.mxu0 0.0
        %1927 = vmatprep.subr.mxu0 0.0
        %1928 = vmatpush1.msra.mxu0 0.0
        %1929 = vmatprep.subr.mxu0 0.0
        %1930 = vmatpush1.msra.mxu0 0.0
        %1931 = vmatprep.subr.mxu0 0.0
        %1932 = vmatpush1.msra.mxu0 0.0
        %1933 = vmatprep.subr.mxu0 0.0
        %1934 = vmatpush1.msra.mxu0 0.0
        %1935 = vmatprep.subr.mxu0 0.0
        %1936 = vmatpush1.msra.mxu0 0.0
        %1937 = vmatprep.subr.mxu0 0.0
        %1938 = vmatpush1.msra.mxu0 0.0
        %1939 = vmatprep.subr.mxu0 0.0
        %1940 = vmatpush1.msra.mxu0 0.0
        %1941 = vmatprep.subr.mxu0 0.0
        %1942 = vmatpush1.msra.mxu0 0.0
        %1943 = vmatprep.subr.mxu0 0.0
        %1944 = vmatpush1.msra.mxu0 0.0
        %1945 = vmatprep.subr.mxu0 0.0
        %1946 = vmatpush1.msra.mxu0 0.0
        %1947 = vmatprep.subr.mxu0 0.0
        %1948 = vmatpush1.msra.mxu0 0.0
        %1949 = vmatprep.subr.mxu0 0.0
        %1950 = vmatpush1.msra.mxu0 0.0
        %1951 = vmatprep.subr.mxu0 0.0
        %1952 = vmatpush1.msra.mxu0 0.0
        %1953 = vmatprep.subr.mxu0 0.0
        %1954 = vmatpush1.msra.mxu0 0.0
        %1955 = vmatprep.subr.mxu0 0.0
        %1956 = vmatpush1.msra.mxu0 0.0
        %1957 = vmatprep.subr.mxu0 0.0
        %1958 = vmatpush1.msra.mxu0 0.0
        %1959 = vmatprep.subr.mxu0 0.0
        %1960 = vmatpush1.msra.mxu0 0.0
        %1961 = vmatprep.subr.mxu0 0.0
        %1962 = vmatpush1.msra.mxu0 0.0
        %1963 = vmatprep.subr.mxu0 0.0
        %1964 = vmatpush1.msra.mxu0 0.0
        %1965 = vmatprep.subr.mxu0 0.0
        %1966 = vmatpush1.msra.mxu0 0.0
        %1967 = vmatprep.subr.mxu0 0.0
        %1968 = vmatpush1.msra.mxu0 0.0
        %1969 = vmatprep.subr.mxu0 0.0
        %1970 = vmatpush1.msra.mxu0 0.0
        %1971 = vmatprep.mubr.f32.mxu0 0.0
        %1972 = vmatmul.mubr.f32.gmra.mrb[0].mxu0 %v1905
        %v1973 = vpop.f32.mrb[0].mxu0
        %v1974 = vadd.f32 0.0, %v1973
        %v1975 = vpop.f32.mrb[0].mxu0
        %1976 = vdwg.mxu0
        %1978 = vrot.lane.b32.xlu0 %v765, 96
        %v1979 = vpop.permute.xlu0 %1978
        %v1982 = vsel %vm1106, %v1895, 0
        %1984 = vmatprep.subr.mxu0 0.0
        %1985 = vmatpush1.msra.mxu0 %v1979
        %1986 = vmatprep.subr.mxu0 0.0
        %1987 = vmatpush1.msra.mxu0 0.0
        %1988 = vmatprep.subr.mxu0 0.0
        %1989 = vmatpush1.msra.mxu0 0.0
        %1990 = vmatprep.subr.mxu0 0.0
        %1991 = vmatpush1.msra.mxu0 0.0
        %1992 = vmatprep.subr.mxu0 0.0
        %1993 = vmatpush1.msra.mxu0 0.0
        %1994 = vmatprep.subr.mxu0 0.0
        %1995 = vmatpush1.msra.mxu0 0.0
        %1996 = vmatprep.subr.mxu0 0.0
        %1997 = vmatpush1.msra.mxu0 0.0
        %1998 = vmatprep.subr.mxu0 0.0
        %1999 = vmatpush1.msra.mxu0 0.0
        %2000 = vmatprep.subr.mxu0 0.0
        %2001 = vmatpush1.msra.mxu0 0.0
        %2002 = vmatprep.subr.mxu0 0.0
        %2003 = vmatpush1.msra.mxu0 0.0
        %2004 = vmatprep.subr.mxu0 0.0
        %2005 = vmatpush1.msra.mxu0 0.0
        %2006 = vmatprep.subr.mxu0 0.0
        %2007 = vmatpush1.msra.mxu0 0.0
        %2008 = vmatprep.subr.mxu0 0.0
        %2009 = vmatpush1.msra.mxu0 0.0
        %2010 = vmatprep.subr.mxu0 0.0
        %2011 = vmatpush1.msra.mxu0 0.0
        %2012 = vmatprep.subr.mxu0 0.0
        %2013 = vmatpush1.msra.mxu0 0.0
        %2014 = vmatprep.subr.mxu0 0.0
        %2015 = vmatpush1.msra.mxu0 0.0
        %2016 = vmatprep.subr.mxu0 0.0
        %2017 = vmatpush1.msra.mxu0 0.0
        %2018 = vmatprep.subr.mxu0 0.0
        %2019 = vmatpush1.msra.mxu0 0.0
        %2020 = vmatprep.subr.mxu0 0.0
        %2021 = vmatpush1.msra.mxu0 0.0
        %2022 = vmatprep.subr.mxu0 0.0
        %2023 = vmatpush1.msra.mxu0 0.0
        %2024 = vmatprep.subr.mxu0 0.0
        %2025 = vmatpush1.msra.mxu0 0.0
        %2026 = vmatprep.subr.mxu0 0.0
        %2027 = vmatpush1.msra.mxu0 0.0
        %2028 = vmatprep.subr.mxu0 0.0
        %2029 = vmatpush1.msra.mxu0 0.0
        %2030 = vmatprep.subr.mxu0 0.0
        %2031 = vmatpush1.msra.mxu0 0.0
        %2032 = vmatprep.subr.mxu0 0.0
        %2033 = vmatpush1.msra.mxu0 0.0
        %2034 = vmatprep.subr.mxu0 0.0
        %2035 = vmatpush1.msra.mxu0 0.0
        %2036 = vmatprep.subr.mxu0 0.0
        %2037 = vmatpush1.msra.mxu0 0.0
        %2038 = vmatprep.subr.mxu0 0.0
        %2039 = vmatpush1.msra.mxu0 0.0
        %2040 = vmatprep.subr.mxu0 0.0
        %2041 = vmatpush1.msra.mxu0 0.0
        %2042 = vmatprep.subr.mxu0 0.0
        %2043 = vmatpush1.msra.mxu0 0.0
        %2044 = vmatprep.subr.mxu0 0.0
        %2045 = vmatpush1.msra.mxu0 0.0
        %2046 = vmatprep.subr.mxu0 0.0
        %2047 = vmatpush1.msra.mxu0 0.0
        %2048 = vmatprep.mubr.f32.mxu0 0.0
        %2049 = vmatmul.mubr.f32.gmra.mrb[0].mxu0 %v1982
        %v2050 = vpop.f32.mrb[0].mxu0
        %v2051 = vadd.f32 0.0, %v2050
        %v2052 = vpop.f32.mrb[0].mxu0
        %2053 = vdwg.mxu0
        %2055 = vrot.lane.b32.xlu0 %v770, 96
        %v2056 = vpop.permute.xlu0 %2055
        %v2059 = vsel %vm1106, %v1897, 0
        %2061 = vmatprep.subr.mxu0 0.0
        %2062 = vmatpush1.msra.mxu0 %v2056
        %2063 = vmatprep.subr.mxu0 0.0
        %2064 = vmatpush1.msra.mxu0 0.0
        %2065 = vmatprep.subr.mxu0 0.0
        %2066 = vmatpush1.msra.mxu0 0.0
        %2067 = vmatprep.subr.mxu0 0.0
        %2068 = vmatpush1.msra.mxu0 0.0
        %2069 = vmatprep.subr.mxu0 0.0
        %2070 = vmatpush1.msra.mxu0 0.0
        %2071 = vmatprep.subr.mxu0 0.0
        %2072 = vmatpush1.msra.mxu0 0.0
        %2073 = vmatprep.subr.mxu0 0.0
        %2074 = vmatpush1.msra.mxu0 0.0
        %2075 = vmatprep.subr.mxu0 0.0
        %2076 = vmatpush1.msra.mxu0 0.0
        %2077 = vmatprep.subr.mxu0 0.0
        %2078 = vmatpush1.msra.mxu0 0.0
        %2079 = vmatprep.subr.mxu0 0.0
        %2080 = vmatpush1.msra.mxu0 0.0
        %2081 = vmatprep.subr.mxu0 0.0
        %2082 = vmatpush1.msra.mxu0 0.0
        %2083 = vmatprep.subr.mxu0 0.0
        %2084 = vmatpush1.msra.mxu0 0.0
        %2085 = vmatprep.subr.mxu0 0.0
        %2086 = vmatpush1.msra.mxu0 0.0
        %2087 = vmatprep.subr.mxu0 0.0
        %2088 = vmatpush1.msra.mxu0 0.0
        %2089 = vmatprep.subr.mxu0 0.0
        %2090 = vmatpush1.msra.mxu0 0.0
        %2091 = vmatprep.subr.mxu0 0.0
        %2092 = vmatpush1.msra.mxu0 0.0
        %2093 = vmatprep.subr.mxu0 0.0
        %2094 = vmatpush1.msra.mxu0 0.0
        %2095 = vmatprep.subr.mxu0 0.0
        %2096 = vmatpush1.msra.mxu0 0.0
        %2097 = vmatprep.subr.mxu0 0.0
        %2098 = vmatpush1.msra.mxu0 0.0
        %2099 = vmatprep.subr.mxu0 0.0
        %2100 = vmatpush1.msra.mxu0 0.0
        %2101 = vmatprep.subr.mxu0 0.0
        %2102 = vmatpush1.msra.mxu0 0.0
        %2103 = vmatprep.subr.mxu0 0.0
        %2104 = vmatpush1.msra.mxu0 0.0
        %2105 = vmatprep.subr.mxu0 0.0
        %2106 = vmatpush1.msra.mxu0 0.0
        %2107 = vmatprep.subr.mxu0 0.0
        %2108 = vmatpush1.msra.mxu0 0.0
        %2109 = vmatprep.subr.mxu0 0.0
        %2110 = vmatpush1.msra.mxu0 0.0
        %2111 = vmatprep.subr.mxu0 0.0
        %2112 = vmatpush1.msra.mxu0 0.0
        %2113 = vmatprep.subr.mxu0 0.0
        %2114 = vmatpush1.msra.mxu0 0.0
        %2115 = vmatprep.subr.mxu0 0.0
        %2116 = vmatpush1.msra.mxu0 0.0
        %2117 = vmatprep.subr.mxu0 0.0
        %2118 = vmatpush1.msra.mxu0 0.0
        %2119 = vmatprep.subr.mxu0 0.0
        %2120 = vmatpush1.msra.mxu0 0.0
        %2121 = vmatprep.subr.mxu0 0.0
        %2122 = vmatpush1.msra.mxu0 0.0
        %2123 = vmatprep.subr.mxu0 0.0
        %2124 = vmatpush1.msra.mxu0 0.0
        %2125 = vmatprep.mubr.f32.mxu0 0.0
        %2126 = vmatmul.mubr.f32.gmra.mrb[0].mxu0 %v2059
        %v2127 = vpop.f32.mrb[0].mxu0
        %v2128 = vadd.f32 0.0, %v2127
        %v2129 = vpop.f32.mrb[0].mxu0
        %2130 = vdwg.mxu0
        %2132 = vrot.lane.b32.xlu0 %v775, 96
        %v2133 = vpop.permute.xlu0 %2132
        %v2136 = vsel %vm1106, %v1899, 0
        %2138 = vmatprep.subr.mxu0 0.0
        %2139 = vmatpush1.msra.mxu0 %v2133
        %2140 = vmatprep.subr.mxu0 0.0
        %2141 = vmatpush1.msra.mxu0 0.0
        %2142 = vmatprep.subr.mxu0 0.0
        %2143 = vmatpush1.msra.mxu0 0.0
        %2144 = vmatprep.subr.mxu0 0.0
        %2145 = vmatpush1.msra.mxu0 0.0
        %2146 = vmatprep.subr.mxu0 0.0
        %2147 = vmatpush1.msra.mxu0 0.0
        %2148 = vmatprep.subr.mxu0 0.0
        %2149 = vmatpush1.msra.mxu0 0.0
        %2150 = vmatprep.subr.mxu0 0.0
        %2151 = vmatpush1.msra.mxu0 0.0
        %2152 = vmatprep.subr.mxu0 0.0
        %2153 = vmatpush1.msra.mxu0 0.0
        %2154 = vmatprep.subr.mxu0 0.0
        %2155 = vmatpush1.msra.mxu0 0.0
        %2156 = vmatprep.subr.mxu0 0.0
        %2157 = vmatpush1.msra.mxu0 0.0
        %2158 = vmatprep.subr.mxu0 0.0
        %2159 = vmatpush1.msra.mxu0 0.0
        %2160 = vmatprep.subr.mxu0 0.0
        %2161 = vmatpush1.msra.mxu0 0.0
        %2162 = vmatprep.subr.mxu0 0.0
        %2163 = vmatpush1.msra.mxu0 0.0
        %2164 = vmatprep.subr.mxu0 0.0
        %2165 = vmatpush1.msra.mxu0 0.0
        %2166 = vmatprep.subr.mxu0 0.0
        %2167 = vmatpush1.msra.mxu0 0.0
        %2168 = vmatprep.subr.mxu0 0.0
        %2169 = vmatpush1.msra.mxu0 0.0
        %2170 = vmatprep.subr.mxu0 0.0
        %2171 = vmatpush1.msra.mxu0 0.0
        %2172 = vmatprep.subr.mxu0 0.0
        %2173 = vmatpush1.msra.mxu0 0.0
        %2174 = vmatprep.subr.mxu0 0.0
        %2175 = vmatpush1.msra.mxu0 0.0
        %2176 = vmatprep.subr.mxu0 0.0
        %2177 = vmatpush1.msra.mxu0 0.0
        %2178 = vmatprep.subr.mxu0 0.0
        %2179 = vmatpush1.msra.mxu0 0.0
        %2180 = vmatprep.subr.mxu0 0.0
        %2181 = vmatpush1.msra.mxu0 0.0
        %2182 = vmatprep.subr.mxu0 0.0
        %2183 = vmatpush1.msra.mxu0 0.0
        %2184 = vmatprep.subr.mxu0 0.0
        %2185 = vmatpush1.msra.mxu0 0.0
        %2186 = vmatprep.subr.mxu0 0.0
        %2187 = vmatpush1.msra.mxu0 0.0
        %2188 = vmatprep.subr.mxu0 0.0
        %2189 = vmatpush1.msra.mxu0 0.0
        %2190 = vmatprep.subr.mxu0 0.0
        %2191 = vmatpush1.msra.mxu0 0.0
        %2192 = vmatprep.subr.mxu0 0.0
        %2193 = vmatpush1.msra.mxu0 0.0
        %2194 = vmatprep.subr.mxu0 0.0
        %2195 = vmatpush1.msra.mxu0 0.0
        %2196 = vmatprep.subr.mxu0 0.0
        %2197 = vmatpush1.msra.mxu0 0.0
        %2198 = vmatprep.subr.mxu0 0.0
        %2199 = vmatpush1.msra.mxu0 0.0
        %2200 = vmatprep.subr.mxu0 0.0
        %2201 = vmatpush1.msra.mxu0 0.0
        %2202 = vmatprep.mubr.f32.mxu0 0.0
        %2203 = vmatmul.mubr.f32.gmra.mrb[0].mxu0 %v2136
        %v2204 = vpop.f32.mrb[0].mxu0
        %v2205 = vadd.f32 0.0, %v2204
        %v2206 = vpop.f32.mrb[0].mxu0
        %2207 = vdwg.mxu0
        %v2209 = vsel %vm801, %v1974, 0
        %v2212 = vsel %vm801, %v2051, 0
        %v2215 = vsel %vm801, %v2128, 0
        %v2218 = vsel %vm801, %v2205, 0
        %2220 = vmatprep.subr.mxu0 0.0
        %2221 = vmatpush1.msra.mxu0 %v782
        %2222 = vmatprep.subr.mxu0 0.0
        %2223 = vmatpush1.msra.mxu0 %v783
        %2224 = vmatprep.subr.mxu0 0.0
        %2225 = vmatpush1.msra.mxu0 %v784
        %2226 = vmatprep.subr.mxu0 0.0
        %2227 = vmatpush1.msra.mxu0 %v785
        %2228 = vmatprep.subr.mxu0 0.0
        %2229 = vmatpush1.msra.mxu0 0.0
        %2230 = vmatprep.subr.mxu0 0.0
        %2231 = vmatpush1.msra.mxu0 0.0
        %2232 = vmatprep.subr.mxu0 0.0
        %2233 = vmatpush1.msra.mxu0 0.0
        %2234 = vmatprep.subr.mxu0 0.0
        %2235 = vmatpush1.msra.mxu0 0.0
        %2236 = vmatprep.subr.mxu0 0.0
        %2237 = vmatpush1.msra.mxu0 0.0
        %2238 = vmatprep.subr.mxu0 0.0
        %2239 = vmatpush1.msra.mxu0 0.0
        %2240 = vmatprep.subr.mxu0 0.0
        %2241 = vmatpush1.msra.mxu0 0.0
        %2242 = vmatprep.subr.mxu0 0.0
        %2243 = vmatpush1.msra.mxu0 0.0
        %2244 = vmatprep.subr.mxu0 0.0
        %2245 = vmatpush1.msra.mxu0 0.0
        %2246 = vmatprep.subr.mxu0 0.0
        %2247 = vmatpush1.msra.mxu0 0.0
        %2248 = vmatprep.subr.mxu0 0.0
        %2249 = vmatpush1.msra.mxu0 0.0
        %2250 = vmatprep.subr.mxu0 0.0
        %2251 = vmatpush1.msra.mxu0 0.0
        %2252 = vmatprep.subr.mxu0 0.0
        %2253 = vmatpush1.msra.mxu0 0.0
        %2254 = vmatprep.subr.mxu0 0.0
        %2255 = vmatpush1.msra.mxu0 0.0
        %2256 = vmatprep.subr.mxu0 0.0
        %2257 = vmatpush1.msra.mxu0 0.0
        %2258 = vmatprep.subr.mxu0 0.0
        %2259 = vmatpush1.msra.mxu0 0.0
        %2260 = vmatprep.subr.mxu0 0.0
        %2261 = vmatpush1.msra.mxu0 0.0
        %2262 = vmatprep.subr.mxu0 0.0
        %2263 = vmatpush1.msra.mxu0 0.0
        %2264 = vmatprep.subr.mxu0 0.0
        %2265 = vmatpush1.msra.mxu0 0.0
        %2266 = vmatprep.subr.mxu0 0.0
        %2267 = vmatpush1.msra.mxu0 0.0
        %2268 = vmatprep.subr.mxu0 0.0
        %2269 = vmatpush1.msra.mxu0 0.0
        %2270 = vmatprep.subr.mxu0 0.0
        %2271 = vmatpush1.msra.mxu0 0.0
        %2272 = vmatprep.subr.mxu0 0.0
        %2273 = vmatpush1.msra.mxu0 0.0
        %2274 = vmatprep.subr.mxu0 0.0
        %2275 = vmatpush1.msra.mxu0 0.0
        %2276 = vmatprep.subr.mxu0 0.0
        %2277 = vmatpush1.msra.mxu0 0.0
        %2278 = vmatprep.subr.mxu0 0.0
        %2279 = vmatpush1.msra.mxu0 0.0
        %2280 = vmatprep.subr.mxu0 0.0
        %2281 = vmatpush1.msra.mxu0 0.0
        %2282 = vmatprep.subr.mxu0 0.0
        %2283 = vmatpush1.msra.mxu0 0.0
        %2284 = vmatprep.mubr.f32.mxu0 0.0
        %2285 = vmatmul.mubr.f32.gmra.mrb[0].mxu0 %v2209
        %v2286 = vpop.f32.mrb[0].mxu0
        %v2287 = vadd.f32 0.0, %v2286
        %v2288 = vpop.f32.mrb[0].mxu0
        %2289 = vmatprep.mubr.f32.mxu0 0.0
        %2290 = vmatmul.mubr.f32.gmra.mrb[0].mxu0 %v2212
        %v2291 = vpop.f32.mrb[0].mxu0
        %v2292 = vadd.f32 0.0, %v2291
        %v2293 = vpop.f32.mrb[0].mxu0
        %2294 = vmatprep.mubr.f32.mxu0 0.0
        %2295 = vmatmul.mubr.f32.gmra.mrb[0].mxu0 %v2215
        %v2296 = vpop.f32.mrb[0].mxu0
        %v2297 = vadd.f32 0.0, %v2296
        %v2298 = vpop.f32.mrb[0].mxu0
        %2299 = vmatprep.mubr.f32.mxu0 0.0
        %2300 = vmatmul.mubr.f32.gmra.mrb[0].mxu0 %v2218
        %v2301 = vpop.f32.mrb[0].mxu0
        %v2302 = vadd.f32 0.0, %v2301
        %v2303 = vpop.f32.mrb[0].mxu0
        %2304 = vdwg.mxu0
        %v2305 = vadd.f32 %v1540, %v2287
        %v2306 = vadd.f32 %v1541, %v2292
        %v2307 = vadd.f32 %v1542, %v2297
        %v2308 = vadd.f32 %v1543, %v2302
        %2309 = vrot.lane.b32.xlu0 %v550, 64
        %v2310 = vpop.permute.xlu0 %2309
        %2311 = vrot.lane.b32.xlu0 %v655, 64
        %v2312 = vpop.permute.xlu0 %2311
        %v2313 = vsel %vm801, %v2310, 0
        %v2315 = vsel %vm801, %v2312, 0
        %2317 = vmatprep.subr.mxu0 0.0
        %2318 = vmatpush1.xpose.msra.mxu0 %v2315
        %2319 = vmatprep.subr.mxu0 0.0
        %2320 = vmatpush1.xpose.msra.mxu0 0.0
        %2321 = vmatprep.subr.mxu0 0.0
        %2322 = vmatpush1.xpose.msra.mxu0 0.0
        %2323 = vmatprep.subr.mxu0 0.0
        %2324 = vmatpush1.xpose.msra.mxu0 0.0
        %2325 = vmatprep.subr.mxu0 0.0
        %2326 = vmatpush1.xpose.msra.mxu0 0.0
        %2327 = vmatprep.subr.mxu0 0.0
        %2328 = vmatpush1.xpose.msra.mxu0 0.0
        %2329 = vmatprep.subr.mxu0 0.0
        %2330 = vmatpush1.xpose.msra.mxu0 0.0
        %2331 = vmatprep.subr.mxu0 0.0
        %2332 = vmatpush1.xpose.msra.mxu0 0.0
        %2333 = vmatprep.subr.mxu0 0.0
        %2334 = vmatpush1.xpose.msra.mxu0 0.0
        %2335 = vmatprep.subr.mxu0 0.0
        %2336 = vmatpush1.xpose.msra.mxu0 0.0
        %2337 = vmatprep.subr.mxu0 0.0
        %2338 = vmatpush1.xpose.msra.mxu0 0.0
        %2339 = vmatprep.subr.mxu0 0.0
        %2340 = vmatpush1.xpose.msra.mxu0 0.0
        %2341 = vmatprep.subr.mxu0 0.0
        %2342 = vmatpush1.xpose.msra.mxu0 0.0
        %2343 = vmatprep.subr.mxu0 0.0
        %2344 = vmatpush1.xpose.msra.mxu0 0.0
        %2345 = vmatprep.subr.mxu0 0.0
        %2346 = vmatpush1.xpose.msra.mxu0 0.0
        %2347 = vmatprep.subr.mxu0 0.0
        %2348 = vmatpush1.xpose.msra.mxu0 0.0
        %2349 = vmatprep.subr.mxu0 0.0
        %2350 = vmatpush1.xpose.msra.mxu0 0.0
        %2351 = vmatprep.subr.mxu0 0.0
        %2352 = vmatpush1.xpose.msra.mxu0 0.0
        %2353 = vmatprep.subr.mxu0 0.0
        %2354 = vmatpush1.xpose.msra.mxu0 0.0
        %2355 = vmatprep.subr.mxu0 0.0
        %2356 = vmatpush1.xpose.msra.mxu0 0.0
        %2357 = vmatprep.subr.mxu0 0.0
        %2358 = vmatpush1.xpose.msra.mxu0 0.0
        %2359 = vmatprep.subr.mxu0 0.0
        %2360 = vmatpush1.xpose.msra.mxu0 0.0
        %2361 = vmatprep.subr.mxu0 0.0
        %2362 = vmatpush1.xpose.msra.mxu0 0.0
        %2363 = vmatprep.subr.mxu0 0.0
        %2364 = vmatpush1.xpose.msra.mxu0 0.0
        %2365 = vmatprep.subr.mxu0 0.0
        %2366 = vmatpush1.xpose.msra.mxu0 0.0
        %2367 = vmatprep.subr.mxu0 0.0
        %2368 = vmatpush1.xpose.msra.mxu0 0.0
        %2369 = vmatprep.subr.mxu0 0.0
        %2370 = vmatpush1.xpose.msra.mxu0 0.0
        %2371 = vmatprep.subr.mxu0 0.0
        %2372 = vmatpush1.xpose.msra.mxu0 0.0
        %2373 = vmatprep.subr.mxu0 0.0
        %2374 = vmatpush1.xpose.msra.mxu0 0.0
        %2375 = vmatprep.subr.mxu0 0.0
        %2376 = vmatpush1.xpose.msra.mxu0 0.0
        %2377 = vmatprep.subr.mxu0 0.0
        %2378 = vmatpush1.xpose.msra.mxu0 0.0
        %2379 = vmatprep.subr.mxu0 0.0
        %2380 = vmatpush1.xpose.msra.mxu0 0.0
        %2381 = vmatprep.mubr.f32.mxu0 0.0
        %2382 = vmatmul.mubr.f32.gmra.mrb[0].mxu0 %v2313
        %v2383 = vpop.f32.mrb[0].mxu0
        %v2384 = vadd.f32 0.0, %v2383
        %v2385 = vpop.f32.mrb[0].mxu0
        %2386 = vdwg.mxu0
        %2387 = vrot.lane.b32.xlu0 %v555, 64
        %v2388 = vpop.permute.xlu0 %2387
        %2389 = vrot.lane.b32.xlu0 %v660, 64
        %v2390 = vpop.permute.xlu0 %2389
        %v2391 = vsel %vm801, %v2388, 0
        %v2393 = vsel %vm801, %v2390, 0
        %2395 = vmatprep.subr.mxu0 0.0
        %2396 = vmatpush1.xpose.msra.mxu0 %v2393
        %2397 = vmatprep.subr.mxu0 0.0
        %2398 = vmatpush1.xpose.msra.mxu0 0.0
        %2399 = vmatprep.subr.mxu0 0.0
        %2400 = vmatpush1.xpose.msra.mxu0 0.0
        %2401 = vmatprep.subr.mxu0 0.0
        %2402 = vmatpush1.xpose.msra.mxu0 0.0
        %2403 = vmatprep.subr.mxu0 0.0
        %2404 = vmatpush1.xpose.msra.mxu0 0.0
        %2405 = vmatprep.subr.mxu0 0.0
        %2406 = vmatpush1.xpose.msra.mxu0 0.0
        %2407 = vmatprep.subr.mxu0 0.0
        %2408 = vmatpush1.xpose.msra.mxu0 0.0
        %2409 = vmatprep.subr.mxu0 0.0
        %2410 = vmatpush1.xpose.msra.mxu0 0.0
        %2411 = vmatprep.subr.mxu0 0.0
        %2412 = vmatpush1.xpose.msra.mxu0 0.0
        %2413 = vmatprep.subr.mxu0 0.0
        %2414 = vmatpush1.xpose.msra.mxu0 0.0
        %2415 = vmatprep.subr.mxu0 0.0
        %2416 = vmatpush1.xpose.msra.mxu0 0.0
        %2417 = vmatprep.subr.mxu0 0.0
        %2418 = vmatpush1.xpose.msra.mxu0 0.0
        %2419 = vmatprep.subr.mxu0 0.0
        %2420 = vmatpush1.xpose.msra.mxu0 0.0
        %2421 = vmatprep.subr.mxu0 0.0
        %2422 = vmatpush1.xpose.msra.mxu0 0.0
        %2423 = vmatprep.subr.mxu0 0.0
        %2424 = vmatpush1.xpose.msra.mxu0 0.0
        %2425 = vmatprep.subr.mxu0 0.0
        %2426 = vmatpush1.xpose.msra.mxu0 0.0
        %2427 = vmatprep.subr.mxu0 0.0
        %2428 = vmatpush1.xpose.msra.mxu0 0.0
        %2429 = vmatprep.subr.mxu0 0.0
        %2430 = vmatpush1.xpose.msra.mxu0 0.0
        %2431 = vmatprep.subr.mxu0 0.0
        %2432 = vmatpush1.xpose.msra.mxu0 0.0
        %2433 = vmatprep.subr.mxu0 0.0
        %2434 = vmatpush1.xpose.msra.mxu0 0.0
        %2435 = vmatprep.subr.mxu0 0.0
        %2436 = vmatpush1.xpose.msra.mxu0 0.0
        %2437 = vmatprep.subr.mxu0 0.0
        %2438 = vmatpush1.xpose.msra.mxu0 0.0
        %2439 = vmatprep.subr.mxu0 0.0
        %2440 = vmatpush1.xpose.msra.mxu0 0.0
        %2441 = vmatprep.subr.mxu0 0.0
        %2442 = vmatpush1.xpose.msra.mxu0 0.0
        %2443 = vmatprep.subr.mxu0 0.0
        %2444 = vmatpush1.xpose.msra.mxu0 0.0
        %2445 = vmatprep.subr.mxu0 0.0
        %2446 = vmatpush1.xpose.msra.mxu0 0.0
        %2447 = vmatprep.subr.mxu0 0.0
        %2448 = vmatpush1.xpose.msra.mxu0 0.0
        %2449 = vmatprep.subr.mxu0 0.0
        %2450 = vmatpush1.xpose.msra.mxu0 0.0
        %2451 = vmatprep.subr.mxu0 0.0
        %2452 = vmatpush1.xpose.msra.mxu0 0.0
        %2453 = vmatprep.subr.mxu0 0.0
        %2454 = vmatpush1.xpose.msra.mxu0 0.0
        %2455 = vmatprep.subr.mxu0 0.0
        %2456 = vmatpush1.xpose.msra.mxu0 0.0
        %2457 = vmatprep.subr.mxu0 0.0
        %2458 = vmatpush1.xpose.msra.mxu0 0.0
        %2459 = vmatprep.mubr.f32.mxu0 0.0
        %2460 = vmatmul.mubr.f32.gmra.mrb[0].mxu0 %v2391
        %v2461 = vpop.f32.mrb[0].mxu0
        %v2462 = vadd.f32 0.0, %v2461
        %v2463 = vpop.f32.mrb[0].mxu0
        %2464 = vdwg.mxu0
        %2465 = vrot.lane.b32.xlu0 %v560, 64
        %v2466 = vpop.permute.xlu0 %2465
        %2467 = vrot.lane.b32.xlu0 %v665, 64
        %v2468 = vpop.permute.xlu0 %2467
        %v2469 = vsel %vm801, %v2466, 0
        %v2471 = vsel %vm801, %v2468, 0
        %2473 = vmatprep.subr.mxu0 0.0
        %2474 = vmatpush1.xpose.msra.mxu0 %v2471
        %2475 = vmatprep.subr.mxu0 0.0
        %2476 = vmatpush1.xpose.msra.mxu0 0.0
        %2477 = vmatprep.subr.mxu0 0.0
        %2478 = vmatpush1.xpose.msra.mxu0 0.0
        %2479 = vmatprep.subr.mxu0 0.0
        %2480 = vmatpush1.xpose.msra.mxu0 0.0
        %2481 = vmatprep.subr.mxu0 0.0
        %2482 = vmatpush1.xpose.msra.mxu0 0.0
        %2483 = vmatprep.subr.mxu0 0.0
        %2484 = vmatpush1.xpose.msra.mxu0 0.0
        %2485 = vmatprep.subr.mxu0 0.0
        %2486 = vmatpush1.xpose.msra.mxu0 0.0
        %2487 = vmatprep.subr.mxu0 0.0
        %2488 = vmatpush1.xpose.msra.mxu0 0.0
        %2489 = vmatprep.subr.mxu0 0.0
        %2490 = vmatpush1.xpose.msra.mxu0 0.0
        %2491 = vmatprep.subr.mxu0 0.0
        %2492 = vmatpush1.xpose.msra.mxu0 0.0
        %2493 = vmatprep.subr.mxu0 0.0
        %2494 = vmatpush1.xpose.msra.mxu0 0.0
        %2495 = vmatprep.subr.mxu0 0.0
        %2496 = vmatpush1.xpose.msra.mxu0 0.0
        %2497 = vmatprep.subr.mxu0 0.0
        %2498 = vmatpush1.xpose.msra.mxu0 0.0
        %2499 = vmatprep.subr.mxu0 0.0
        %2500 = vmatpush1.xpose.msra.mxu0 0.0
        %2501 = vmatprep.subr.mxu0 0.0
        %2502 = vmatpush1.xpose.msra.mxu0 0.0
        %2503 = vmatprep.subr.mxu0 0.0
        %2504 = vmatpush1.xpose.msra.mxu0 0.0
        %2505 = vmatprep.subr.mxu0 0.0
        %2506 = vmatpush1.xpose.msra.mxu0 0.0
        %2507 = vmatprep.subr.mxu0 0.0
        %2508 = vmatpush1.xpose.msra.mxu0 0.0
        %2509 = vmatprep.subr.mxu0 0.0
        %2510 = vmatpush1.xpose.msra.mxu0 0.0
        %2511 = vmatprep.subr.mxu0 0.0
        %2512 = vmatpush1.xpose.msra.mxu0 0.0
        %2513 = vmatprep.subr.mxu0 0.0
        %2514 = vmatpush1.xpose.msra.mxu0 0.0
        %2515 = vmatprep.subr.mxu0 0.0
        %2516 = vmatpush1.xpose.msra.mxu0 0.0
        %2517 = vmatprep.subr.mxu0 0.0
        %2518 = vmatpush1.xpose.msra.mxu0 0.0
        %2519 = vmatprep.subr.mxu0 0.0
        %2520 = vmatpush1.xpose.msra.mxu0 0.0
        %2521 = vmatprep.subr.mxu0 0.0
        %2522 = vmatpush1.xpose.msra.mxu0 0.0
        %2523 = vmatprep.subr.mxu0 0.0
        %2524 = vmatpush1.xpose.msra.mxu0 0.0
        %2525 = vmatprep.subr.mxu0 0.0
        %2526 = vmatpush1.xpose.msra.mxu0 0.0
        %2527 = vmatprep.subr.mxu0 0.0
        %2528 = vmatpush1.xpose.msra.mxu0 0.0
        %2529 = vmatprep.subr.mxu0 0.0
        %2530 = vmatpush1.xpose.msra.mxu0 0.0
        %2531 = vmatprep.subr.mxu0 0.0
        %2532 = vmatpush1.xpose.msra.mxu0 0.0
        %2533 = vmatprep.subr.mxu0 0.0
        %2534 = vmatpush1.xpose.msra.mxu0 0.0
        %2535 = vmatprep.subr.mxu0 0.0
        %2536 = vmatpush1.xpose.msra.mxu0 0.0
        %2537 = vmatprep.mubr.f32.mxu0 0.0
        %2538 = vmatmul.mubr.f32.gmra.mrb[0].mxu0 %v2469
        %v2539 = vpop.f32.mrb[0].mxu0
        %v2540 = vadd.f32 0.0, %v2539
        %v2541 = vpop.f32.mrb[0].mxu0
        %2542 = vdwg.mxu0
        %2543 = vrot.lane.b32.xlu0 %v565, 64
        %v2544 = vpop.permute.xlu0 %2543
        %2545 = vrot.lane.b32.xlu0 %v670, 64
        %v2546 = vpop.permute.xlu0 %2545
        %v2547 = vsel %vm801, %v2544, 0
        %v2549 = vsel %vm801, %v2546, 0
        %2551 = vmatprep.subr.mxu0 0.0
        %2552 = vmatpush1.xpose.msra.mxu0 %v2549
        %2553 = vmatprep.subr.mxu0 0.0
        %2554 = vmatpush1.xpose.msra.mxu0 0.0
        %2555 = vmatprep.subr.mxu0 0.0
        %2556 = vmatpush1.xpose.msra.mxu0 0.0
        %2557 = vmatprep.subr.mxu0 0.0
        %2558 = vmatpush1.xpose.msra.mxu0 0.0
        %2559 = vmatprep.subr.mxu0 0.0
        %2560 = vmatpush1.xpose.msra.mxu0 0.0
        %2561 = vmatprep.subr.mxu0 0.0
        %2562 = vmatpush1.xpose.msra.mxu0 0.0
        %2563 = vmatprep.subr.mxu0 0.0
        %2564 = vmatpush1.xpose.msra.mxu0 0.0
        %2565 = vmatprep.subr.mxu0 0.0
        %2566 = vmatpush1.xpose.msra.mxu0 0.0
        %2567 = vmatprep.subr.mxu0 0.0
        %2568 = vmatpush1.xpose.msra.mxu0 0.0
        %2569 = vmatprep.subr.mxu0 0.0
        %2570 = vmatpush1.xpose.msra.mxu0 0.0
        %2571 = vmatprep.subr.mxu0 0.0
        %2572 = vmatpush1.xpose.msra.mxu0 0.0
        %2573 = vmatprep.subr.mxu0 0.0
        %2574 = vmatpush1.xpose.msra.mxu0 0.0
        %2575 = vmatprep.subr.mxu0 0.0
        %2576 = vmatpush1.xpose.msra.mxu0 0.0
        %2577 = vmatprep.subr.mxu0 0.0
        %2578 = vmatpush1.xpose.msra.mxu0 0.0
        %2579 = vmatprep.subr.mxu0 0.0
        %2580 = vmatpush1.xpose.msra.mxu0 0.0
        %2581 = vmatprep.subr.mxu0 0.0
        %2582 = vmatpush1.xpose.msra.mxu0 0.0
        %2583 = vmatprep.subr.mxu0 0.0
        %2584 = vmatpush1.xpose.msra.mxu0 0.0
        %2585 = vmatprep.subr.mxu0 0.0
        %2586 = vmatpush1.xpose.msra.mxu0 0.0
        %2587 = vmatprep.subr.mxu0 0.0
        %2588 = vmatpush1.xpose.msra.mxu0 0.0
        %2589 = vmatprep.subr.mxu0 0.0
        %2590 = vmatpush1.xpose.msra.mxu0 0.0
        %2591 = vmatprep.subr.mxu0 0.0
        %2592 = vmatpush1.xpose.msra.mxu0 0.0
        %2593 = vmatprep.subr.mxu0 0.0
        %2594 = vmatpush1.xpose.msra.mxu0 0.0
        %2595 = vmatprep.subr.mxu0 0.0
        %2596 = vmatpush1.xpose.msra.mxu0 0.0
        %2597 = vmatprep.subr.mxu0 0.0
        %2598 = vmatpush1.xpose.msra.mxu0 0.0
        %2599 = vmatprep.subr.mxu0 0.0
        %2600 = vmatpush1.xpose.msra.mxu0 0.0
        %2601 = vmatprep.subr.mxu0 0.0
        %2602 = vmatpush1.xpose.msra.mxu0 0.0
        %2603 = vmatprep.subr.mxu0 0.0
        %2604 = vmatpush1.xpose.msra.mxu0 0.0
        %2605 = vmatprep.subr.mxu0 0.0
        %2606 = vmatpush1.xpose.msra.mxu0 0.0
        %2607 = vmatprep.subr.mxu0 0.0
        %2608 = vmatpush1.xpose.msra.mxu0 0.0
        %2609 = vmatprep.subr.mxu0 0.0
        %2610 = vmatpush1.xpose.msra.mxu0 0.0
        %2611 = vmatprep.subr.mxu0 0.0
        %2612 = vmatpush1.xpose.msra.mxu0 0.0
        %2613 = vmatprep.subr.mxu0 0.0
        %2614 = vmatpush1.xpose.msra.mxu0 0.0
        %2615 = vmatprep.mubr.f32.mxu0 0.0
        %2616 = vmatmul.mubr.f32.gmra.mrb[0].mxu0 %v2547
        %v2617 = vpop.f32.mrb[0].mxu0
        %v2618 = vadd.f32 0.0, %v2617
        %v2619 = vpop.f32.mrb[0].mxu0
        %2620 = vdwg.mxu0
        %v2621 = vsel %vm1106, %v2384, -inf
        %2622 = vmax.xlane.f32.xlu0 %v2621
        %v2623 = vpop.xlane.xlu0 %2622
        %v2624 = vsel %vm1106, %v2462, -inf
        %2625 = vmax.xlane.f32.xlu0 %v2624
        %v2626 = vpop.xlane.xlu0 %2625
        %v2627 = vsel %vm1106, %v2540, -inf
        %2628 = vmax.xlane.f32.xlu0 %v2627
        %v2629 = vpop.xlane.xlu0 %2628
        %v2630 = vsel %vm1106, %v2618, -inf
        %2631 = vmax.xlane.f32.xlu0 %v2630
        %v2632 = vpop.xlane.xlu0 %2631
        %v2633 = vsub.f32 %v2384, %v2623
        %v2634 = vsub.f32 %v2462, %v2626
        %v2635 = vsub.f32 %v2540, %v2629
        %v2636 = vsub.f32 %v2618, %v2632
        %v2637 = vmul.f32 %v2633, 1.442695
        %v2638 = vpow.pop %v2637
        %v2639 = vmul.f32 %v2634, 1.442695
        %v2640 = vpow.pop %v2639
        %v2641 = vmul.f32 %v2635, 1.442695
        %v2642 = vpow.pop %v2641
        %v2643 = vmul.f32 %v2636, 1.442695
        %v2644 = vpow.pop %v2643
        %v2645 = vsel %vm1106, %v2638, 0.0
        %2646 = vadd.xlane.f32.xlu0 %v2645
        %v2647 = vpop.xlane.xlu0 %2646
        %v2648 = vsel %vm1106, %v2640, 0.0
        %2649 = vadd.xlane.f32.xlu0 %v2648
        %v2650 = vpop.xlane.xlu0 %2649
        %v2651 = vsel %vm1106, %v2642, 0.0
        %2652 = vadd.xlane.f32.xlu0 %v2651
        %v2653 = vpop.xlane.xlu0 %2652
        %v2654 = vsel %vm1106, %v2644, 0.0
        %2655 = vadd.xlane.f32.xlu0 %v2654
        %v2656 = vpop.xlane.xlu0 %2655
        %v2657 = vrcp.pop %v2647
        %v2658 = vmul.f32 %v2638, %v2657
        %v2659 = vrcp.pop %v2650
        %v2660 = vmul.f32 %v2640, %v2659
        %v2661 = vrcp.pop %v2653
        %v2662 = vmul.f32 %v2642, %v2661
        %v2663 = vrcp.pop %v2656
        %v2664 = vmul.f32 %v2644, %v2663
        %2665 = vrot.lane.b32.xlu0 %v760, 64
        %v2666 = vpop.permute.xlu0 %2665
        %v2669 = vsel %vm1106, %v2658, 0
        %2671 = vmatprep.subr.mxu0 0.0
        %2672 = vmatpush1.msra.mxu0 %v2666
        %2673 = vmatprep.subr.mxu0 0.0
        %2674 = vmatpush1.msra.mxu0 0.0
        %2675 = vmatprep.subr.mxu0 0.0
        %2676 = vmatpush1.msra.mxu0 0.0
        %2677 = vmatprep.subr.mxu0 0.0
        %2678 = vmatpush1.msra.mxu0 0.0
        %2679 = vmatprep.subr.mxu0 0.0
        %2680 = vmatpush1.msra.mxu0 0.0
        %2681 = vmatprep.subr.mxu0 0.0
        %2682 = vmatpush1.msra.mxu0 0.0
        %2683 = vmatprep.subr.mxu0 0.0
        %2684 = vmatpush1.msra.mxu0 0.0
        %2685 = vmatprep.subr.mxu0 0.0
        %2686 = vmatpush1.msra.mxu0 0.0
        %2687 = vmatprep.subr.mxu0 0.0
        %2688 = vmatpush1.msra.mxu0 0.0
        %2689 = vmatprep.subr.mxu0 0.0
        %2690 = vmatpush1.msra.mxu0 0.0
        %2691 = vmatprep.subr.mxu0 0.0
        %2692 = vmatpush1.msra.mxu0 0.0
        %2693 = vmatprep.subr.mxu0 0.0
        %2694 = vmatpush1.msra.mxu0 0.0
        %2695 = vmatprep.subr.mxu0 0.0
        %2696 = vmatpush1.msra.mxu0 0.0
        %2697 = vmatprep.subr.mxu0 0.0
        %2698 = vmatpush1.msra.mxu0 0.0
        %2699 = vmatprep.subr.mxu0 0.0
        %2700 = vmatpush1.msra.mxu0 0.0
        %2701 = vmatprep.subr.mxu0 0.0
        %2702 = vmatpush1.msra.mxu0 0.0
        %2703 = vmatprep.subr.mxu0 0.0
        %2704 = vmatpush1.msra.mxu0 0.0
        %2705 = vmatprep.subr.mxu0 0.0
        %2706 = vmatpush1.msra.mxu0 0.0
        %2707 = vmatprep.subr.mxu0 0.0
        %2708 = vmatpush1.msra.mxu0 0.0
        %2709 = vmatprep.subr.mxu0 0.0
        %2710 = vmatpush1.msra.mxu0 0.0
        %2711 = vmatprep.subr.mxu0 0.0
        %2712 = vmatpush1.msra.mxu0 0.0
        %2713 = vmatprep.subr.mxu0 0.0
        %2714 = vmatpush1.msra.mxu0 0.0
        %2715 = vmatprep.subr.mxu0 0.0
        %2716 = vmatpush1.msra.mxu0 0.0
        %2717 = vmatprep.subr.mxu0 0.0
        %2718 = vmatpush1.msra.mxu0 0.0
        %2719 = vmatprep.subr.mxu0 0.0
        %2720 = vmatpush1.msra.mxu0 0.0
        %2721 = vmatprep.subr.mxu0 0.0
        %2722 = vmatpush1.msra.mxu0 0.0
        %2723 = vmatprep.subr.mxu0 0.0
        %2724 = vmatpush1.msra.mxu0 0.0
        %2725 = vmatprep.subr.mxu0 0.0
        %2726 = vmatpush1.msra.mxu0 0.0
        %2727 = vmatprep.subr.mxu0 0.0
        %2728 = vmatpush1.msra.mxu0 0.0
        %2729 = vmatprep.subr.mxu0 0.0
        %2730 = vmatpush1.msra.mxu0 0.0
        %2731 = vmatprep.subr.mxu0 0.0
        %2732 = vmatpush1.msra.mxu0 0.0
        %2733 = vmatprep.subr.mxu0 0.0
        %2734 = vmatpush1.msra.mxu0 0.0
        %2735 = vmatprep.mubr.f32.mxu0 0.0
        %2736 = vmatmul.mubr.f32.gmra.mrb[0].mxu0 %v2669
        %v2737 = vpop.f32.mrb[0].mxu0
        %v2738 = vadd.f32 0.0, %v2737
        %v2739 = vpop.f32.mrb[0].mxu0
        %2740 = vdwg.mxu0
        %2741 = vrot.lane.b32.xlu0 %v765, 64
        %v2742 = vpop.permute.xlu0 %2741
        %v2745 = vsel %vm1106, %v2660, 0
        %2747 = vmatprep.subr.mxu0 0.0
        %2748 = vmatpush1.msra.mxu0 %v2742
        %2749 = vmatprep.subr.mxu0 0.0
        %2750 = vmatpush1.msra.mxu0 0.0
        %2751 = vmatprep.subr.mxu0 0.0
        %2752 = vmatpush1.msra.mxu0 0.0
        %2753 = vmatprep.subr.mxu0 0.0
        %2754 = vmatpush1.msra.mxu0 0.0
        %2755 = vmatprep.subr.mxu0 0.0
        %2756 = vmatpush1.msra.mxu0 0.0
        %2757 = vmatprep.subr.mxu0 0.0
        %2758 = vmatpush1.msra.mxu0 0.0
        %2759 = vmatprep.subr.mxu0 0.0
        %2760 = vmatpush1.msra.mxu0 0.0
        %2761 = vmatprep.subr.mxu0 0.0
        %2762 = vmatpush1.msra.mxu0 0.0
        %2763 = vmatprep.subr.mxu0 0.0
        %2764 = vmatpush1.msra.mxu0 0.0
        %2765 = vmatprep.subr.mxu0 0.0
        %2766 = vmatpush1.msra.mxu0 0.0
        %2767 = vmatprep.subr.mxu0 0.0
        %2768 = vmatpush1.msra.mxu0 0.0
        %2769 = vmatprep.subr.mxu0 0.0
        %2770 = vmatpush1.msra.mxu0 0.0
        %2771 = vmatprep.subr.mxu0 0.0
        %2772 = vmatpush1.msra.mxu0 0.0
        %2773 = vmatprep.subr.mxu0 0.0
        %2774 = vmatpush1.msra.mxu0 0.0
        %2775 = vmatprep.subr.mxu0 0.0
        %2776 = vmatpush1.msra.mxu0 0.0
        %2777 = vmatprep.subr.mxu0 0.0
        %2778 = vmatpush1.msra.mxu0 0.0
        %2779 = vmatprep.subr.mxu0 0.0
        %2780 = vmatpush1.msra.mxu0 0.0
        %2781 = vmatprep.subr.mxu0 0.0
        %2782 = vmatpush1.msra.mxu0 0.0
        %2783 = vmatprep.subr.mxu0 0.0
        %2784 = vmatpush1.msra.mxu0 0.0
        %2785 = vmatprep.subr.mxu0 0.0
        %2786 = vmatpush1.msra.mxu0 0.0
        %2787 = vmatprep.subr.mxu0 0.0
        %2788 = vmatpush1.msra.mxu0 0.0
        %2789 = vmatprep.subr.mxu0 0.0
        %2790 = vmatpush1.msra.mxu0 0.0
        %2791 = vmatprep.subr.mxu0 0.0
        %2792 = vmatpush1.msra.mxu0 0.0
        %2793 = vmatprep.subr.mxu0 0.0
        %2794 = vmatpush1.msra.mxu0 0.0
        %2795 = vmatprep.subr.mxu0 0.0
        %2796 = vmatpush1.msra.mxu0 0.0
        %2797 = vmatprep.subr.mxu0 0.0
        %2798 = vmatpush1.msra.mxu0 0.0
        %2799 = vmatprep.subr.mxu0 0.0
        %2800 = vmatpush1.msra.mxu0 0.0
        %2801 = vmatprep.subr.mxu0 0.0
        %2802 = vmatpush1.msra.mxu0 0.0
        %2803 = vmatprep.subr.mxu0 0.0
        %2804 = vmatpush1.msra.mxu0 0.0
        %2805 = vmatprep.subr.mxu0 0.0
        %2806 = vmatpush1.msra.mxu0 0.0
        %2807 = vmatprep.subr.mxu0 0.0
        %2808 = vmatpush1.msra.mxu0 0.0
        %2809 = vmatprep.subr.mxu0 0.0
        %2810 = vmatpush1.msra.mxu0 0.0
        %2811 = vmatprep.mubr.f32.mxu0 0.0
        %2812 = vmatmul.mubr.f32.gmra.mrb[0].mxu0 %v2745
        %v2813 = vpop.f32.mrb[0].mxu0
        %v2814 = vadd.f32 0.0, %v2813
        %v2815 = vpop.f32.mrb[0].mxu0
        %2816 = vdwg.mxu0
        %2817 = vrot.lane.b32.xlu0 %v770, 64
        %v2818 = vpop.permute.xlu0 %2817
        %v2821 = vsel %vm1106, %v2662, 0
        %2823 = vmatprep.subr.mxu0 0.0
        %2824 = vmatpush1.msra.mxu0 %v2818
        %2825 = vmatprep.subr.mxu0 0.0
        %2826 = vmatpush1.msra.mxu0 0.0
        %2827 = vmatprep.subr.mxu0 0.0
        %2828 = vmatpush1.msra.mxu0 0.0
        %2829 = vmatprep.subr.mxu0 0.0
        %2830 = vmatpush1.msra.mxu0 0.0
        %2831 = vmatprep.subr.mxu0 0.0
        %2832 = vmatpush1.msra.mxu0 0.0
        %2833 = vmatprep.subr.mxu0 0.0
        %2834 = vmatpush1.msra.mxu0 0.0
        %2835 = vmatprep.subr.mxu0 0.0
        %2836 = vmatpush1.msra.mxu0 0.0
        %2837 = vmatprep.subr.mxu0 0.0
        %2838 = vmatpush1.msra.mxu0 0.0
        %2839 = vmatprep.subr.mxu0 0.0
        %2840 = vmatpush1.msra.mxu0 0.0
        %2841 = vmatprep.subr.mxu0 0.0
        %2842 = vmatpush1.msra.mxu0 0.0
        %2843 = vmatprep.subr.mxu0 0.0
        %2844 = vmatpush1.msra.mxu0 0.0
        %2845 = vmatprep.subr.mxu0 0.0
        %2846 = vmatpush1.msra.mxu0 0.0
        %2847 = vmatprep.subr.mxu0 0.0
        %2848 = vmatpush1.msra.mxu0 0.0
        %2849 = vmatprep.subr.mxu0 0.0
        %2850 = vmatpush1.msra.mxu0 0.0
        %2851 = vmatprep.subr.mxu0 0.0
        %2852 = vmatpush1.msra.mxu0 0.0
        %2853 = vmatprep.subr.mxu0 0.0
        %2854 = vmatpush1.msra.mxu0 0.0
        %2855 = vmatprep.subr.mxu0 0.0
        %2856 = vmatpush1.msra.mxu0 0.0
        %2857 = vmatprep.subr.mxu0 0.0
        %2858 = vmatpush1.msra.mxu0 0.0
        %2859 = vmatprep.subr.mxu0 0.0
        %2860 = vmatpush1.msra.mxu0 0.0
        %2861 = vmatprep.subr.mxu0 0.0
        %2862 = vmatpush1.msra.mxu0 0.0
        %2863 = vmatprep.subr.mxu0 0.0
        %2864 = vmatpush1.msra.mxu0 0.0
        %2865 = vmatprep.subr.mxu0 0.0
        %2866 = vmatpush1.msra.mxu0 0.0
        %2867 = vmatprep.subr.mxu0 0.0
        %2868 = vmatpush1.msra.mxu0 0.0
        %2869 = vmatprep.subr.mxu0 0.0
        %2870 = vmatpush1.msra.mxu0 0.0
        %2871 = vmatprep.subr.mxu0 0.0
        %2872 = vmatpush1.msra.mxu0 0.0
        %2873 = vmatprep.subr.mxu0 0.0
        %2874 = vmatpush1.msra.mxu0 0.0
        %2875 = vmatprep.subr.mxu0 0.0
        %2876 = vmatpush1.msra.mxu0 0.0
        %2877 = vmatprep.subr.mxu0 0.0
        %2878 = vmatpush1.msra.mxu0 0.0
        %2879 = vmatprep.subr.mxu0 0.0
        %2880 = vmatpush1.msra.mxu0 0.0
        %2881 = vmatprep.subr.mxu0 0.0
        %2882 = vmatpush1.msra.mxu0 0.0
        %2883 = vmatprep.subr.mxu0 0.0
        %2884 = vmatpush1.msra.mxu0 0.0
        %2885 = vmatprep.subr.mxu0 0.0
        %2886 = vmatpush1.msra.mxu0 0.0
        %2887 = vmatprep.mubr.f32.mxu0 0.0
        %2888 = vmatmul.mubr.f32.gmra.mrb[0].mxu0 %v2821
        %v2889 = vpop.f32.mrb[0].mxu0
        %v2890 = vadd.f32 0.0, %v2889
        %v2891 = vpop.f32.mrb[0].mxu0
        %2892 = vdwg.mxu0
        %2893 = vrot.lane.b32.xlu0 %v775, 64
        %v2894 = vpop.permute.xlu0 %2893
        %v2897 = vsel %vm1106, %v2664, 0
        %2899 = vmatprep.subr.mxu0 0.0
        %2900 = vmatpush1.msra.mxu0 %v2894
        %2901 = vmatprep.subr.mxu0 0.0
        %2902 = vmatpush1.msra.mxu0 0.0
        %2903 = vmatprep.subr.mxu0 0.0
        %2904 = vmatpush1.msra.mxu0 0.0
        %2905 = vmatprep.subr.mxu0 0.0
        %2906 = vmatpush1.msra.mxu0 0.0
        %2907 = vmatprep.subr.mxu0 0.0
        %2908 = vmatpush1.msra.mxu0 0.0
        %2909 = vmatprep.subr.mxu0 0.0
        %2910 = vmatpush1.msra.mxu0 0.0
        %2911 = vmatprep.subr.mxu0 0.0
        %2912 = vmatpush1.msra.mxu0 0.0
        %2913 = vmatprep.subr.mxu0 0.0
        %2914 = vmatpush1.msra.mxu0 0.0
        %2915 = vmatprep.subr.mxu0 0.0
        %2916 = vmatpush1.msra.mxu0 0.0
        %2917 = vmatprep.subr.mxu0 0.0
        %2918 = vmatpush1.msra.mxu0 0.0
        %2919 = vmatprep.subr.mxu0 0.0
        %2920 = vmatpush1.msra.mxu0 0.0
        %2921 = vmatprep.subr.mxu0 0.0
        %2922 = vmatpush1.msra.mxu0 0.0
        %2923 = vmatprep.subr.mxu0 0.0
        %2924 = vmatpush1.msra.mxu0 0.0
        %2925 = vmatprep.subr.mxu0 0.0
        %2926 = vmatpush1.msra.mxu0 0.0
        %2927 = vmatprep.subr.mxu0 0.0
        %2928 = vmatpush1.msra.mxu0 0.0
        %2929 = vmatprep.subr.mxu0 0.0
        %2930 = vmatpush1.msra.mxu0 0.0
        %2931 = vmatprep.subr.mxu0 0.0
        %2932 = vmatpush1.msra.mxu0 0.0
        %2933 = vmatprep.subr.mxu0 0.0
        %2934 = vmatpush1.msra.mxu0 0.0
        %2935 = vmatprep.subr.mxu0 0.0
        %2936 = vmatpush1.msra.mxu0 0.0
        %2937 = vmatprep.subr.mxu0 0.0
        %2938 = vmatpush1.msra.mxu0 0.0
        %2939 = vmatprep.subr.mxu0 0.0
        %2940 = vmatpush1.msra.mxu0 0.0
        %2941 = vmatprep.subr.mxu0 0.0
        %2942 = vmatpush1.msra.mxu0 0.0
        %2943 = vmatprep.subr.mxu0 0.0
        %2944 = vmatpush1.msra.mxu0 0.0
        %2945 = vmatprep.subr.mxu0 0.0
        %2946 = vmatpush1.msra.mxu0 0.0
        %2947 = vmatprep.subr.mxu0 0.0
        %2948 = vmatpush1.msra.mxu0 0.0
        %2949 = vmatprep.subr.mxu0 0.0
        %2950 = vmatpush1.msra.mxu0 0.0
        %2951 = vmatprep.subr.mxu0 0.0
        %2952 = vmatpush1.msra.mxu0 0.0
        %2953 = vmatprep.subr.mxu0 0.0
        %2954 = vmatpush1.msra.mxu0 0.0
        %2955 = vmatprep.subr.mxu0 0.0
        %2956 = vmatpush1.msra.mxu0 0.0
        %2957 = vmatprep.subr.mxu0 0.0
        %2958 = vmatpush1.msra.mxu0 0.0
        %2959 = vmatprep.subr.mxu0 0.0
        %2960 = vmatpush1.msra.mxu0 0.0
        %2961 = vmatprep.subr.mxu0 0.0
        %2962 = vmatpush1.msra.mxu0 0.0
        %2963 = vmatprep.mubr.f32.mxu0 0.0
        %2964 = vmatmul.mubr.f32.gmra.mrb[0].mxu0 %v2897
        %v2965 = vpop.f32.mrb[0].mxu0
        %v2966 = vadd.f32 0.0, %v2965
        %v2967 = vpop.f32.mrb[0].mxu0
        %2968 = vdwg.mxu0
        %v2970 = vsel %vm801, %v2738, 0
        %v2973 = vsel %vm801, %v2814, 0
        %v2976 = vsel %vm801, %v2890, 0
        %v2979 = vsel %vm801, %v2966, 0
        %2981 = vmatprep.subr.mxu0 0.0
        %2982 = vmatpush1.msra.mxu0 %v786
        %2983 = vmatprep.subr.mxu0 0.0
        %2984 = vmatpush1.msra.mxu0 %v787
        %2985 = vmatprep.subr.mxu0 0.0
        %2986 = vmatpush1.msra.mxu0 %v788
        %2987 = vmatprep.subr.mxu0 0.0
        %2988 = vmatpush1.msra.mxu0 %v789
        %2989 = vmatprep.subr.mxu0 0.0
        %2990 = vmatpush1.msra.mxu0 0.0
        %2991 = vmatprep.subr.mxu0 0.0
        %2992 = vmatpush1.msra.mxu0 0.0
        %2993 = vmatprep.subr.mxu0 0.0
        %2994 = vmatpush1.msra.mxu0 0.0
        %2995 = vmatprep.subr.mxu0 0.0
        %2996 = vmatpush1.msra.mxu0 0.0
        %2997 = vmatprep.subr.mxu0 0.0
        %2998 = vmatpush1.msra.mxu0 0.0
        %2999 = vmatprep.subr.mxu0 0.0
        %3000 = vmatpush1.msra.mxu0 0.0
        %3001 = vmatprep.subr.mxu0 0.0
        %3002 = vmatpush1.msra.mxu0 0.0
        %3003 = vmatprep.subr.mxu0 0.0
        %3004 = vmatpush1.msra.mxu0 0.0
        %3005 = vmatprep.subr.mxu0 0.0
        %3006 = vmatpush1.msra.mxu0 0.0
        %3007 = vmatprep.subr.mxu0 0.0
        %3008 = vmatpush1.msra.mxu0 0.0
        %3009 = vmatprep.subr.mxu0 0.0
        %3010 = vmatpush1.msra.mxu0 0.0
        %3011 = vmatprep.subr.mxu0 0.0
        %3012 = vmatpush1.msra.mxu0 0.0
        %3013 = vmatprep.subr.mxu0 0.0
        %3014 = vmatpush1.msra.mxu0 0.0
        %3015 = vmatprep.subr.mxu0 0.0
        %3016 = vmatpush1.msra.mxu0 0.0
        %3017 = vmatprep.subr.mxu0 0.0
        %3018 = vmatpush1.msra.mxu0 0.0
        %3019 = vmatprep.subr.mxu0 0.0
        %3020 = vmatpush1.msra.mxu0 0.0
        %3021 = vmatprep.subr.mxu0 0.0
        %3022 = vmatpush1.msra.mxu0 0.0
        %3023 = vmatprep.subr.mxu0 0.0
        %3024 = vmatpush1.msra.mxu0 0.0
        %3025 = vmatprep.subr.mxu0 0.0
        %3026 = vmatpush1.msra.mxu0 0.0
        %3027 = vmatprep.subr.mxu0 0.0
        %3028 = vmatpush1.msra.mxu0 0.0
        %3029 = vmatprep.subr.mxu0 0.0
        %3030 = vmatpush1.msra.mxu0 0.0
        %3031 = vmatprep.subr.mxu0 0.0
        %3032 = vmatpush1.msra.mxu0 0.0
        %3033 = vmatprep.subr.mxu0 0.0
        %3034 = vmatpush1.msra.mxu0 0.0
        %3035 = vmatprep.subr.mxu0 0.0
        %3036 = vmatpush1.msra.mxu0 0.0
        %3037 = vmatprep.subr.mxu0 0.0
        %3038 = vmatpush1.msra.mxu0 0.0
        %3039 = vmatprep.subr.mxu0 0.0
        %3040 = vmatpush1.msra.mxu0 0.0
        %3041 = vmatprep.subr.mxu0 0.0
        %3042 = vmatpush1.msra.mxu0 0.0
        %3043 = vmatprep.subr.mxu0 0.0
        %3044 = vmatpush1.msra.mxu0 0.0
        %3045 = vmatprep.mubr.f32.mxu0 0.0
        %3046 = vmatmul.mubr.f32.gmra.mrb[0].mxu0 %v2970
        %v3047 = vpop.f32.mrb[0].mxu0
        %v3048 = vadd.f32 0.0, %v3047
        %v3049 = vpop.f32.mrb[0].mxu0
        %3050 = vmatprep.mubr.f32.mxu0 0.0
        %3051 = vmatmul.mubr.f32.gmra.mrb[0].mxu0 %v2973
        %v3052 = vpop.f32.mrb[0].mxu0
        %v3053 = vadd.f32 0.0, %v3052
        %v3054 = vpop.f32.mrb[0].mxu0
        %3055 = vmatprep.mubr.f32.mxu0 0.0
        %3056 = vmatmul.mubr.f32.gmra.mrb[0].mxu0 %v2976
        %v3057 = vpop.f32.mrb[0].mxu0
        %v3058 = vadd.f32 0.0, %v3057
        %v3059 = vpop.f32.mrb[0].mxu0
        %3060 = vmatprep.mubr.f32.mxu0 0.0
        %3061 = vmatmul.mubr.f32.gmra.mrb[0].mxu0 %v2979
        %v3062 = vpop.f32.mrb[0].mxu0
        %v3063 = vadd.f32 0.0, %v3062
        %v3064 = vpop.f32.mrb[0].mxu0
        %3065 = vdwg.mxu0
        %v3066 = vadd.f32 %v2305, %v3048
        %v3067 = vadd.f32 %v2306, %v3053
        %v3068 = vadd.f32 %v2307, %v3058
        %v3069 = vadd.f32 %v2308, %v3063
        %3070 = vrot.lane.b32.xlu0 %v550, 32
        %v3071 = vpop.permute.xlu0 %3070
        %3072 = vrot.lane.b32.xlu0 %v655, 32
        %v3073 = vpop.permute.xlu0 %3072
        %v3074 = vsel %vm801, %v3071, 0
        %v3076 = vsel %vm801, %v3073, 0
        %3078 = vmatprep.subr.mxu0 0.0
        %3079 = vmatpush1.xpose.msra.mxu0 %v3076
        %3080 = vmatprep.subr.mxu0 0.0
        %3081 = vmatpush1.xpose.msra.mxu0 0.0
        %3082 = vmatprep.subr.mxu0 0.0
        %3083 = vmatpush1.xpose.msra.mxu0 0.0
        %3084 = vmatprep.subr.mxu0 0.0
        %3085 = vmatpush1.xpose.msra.mxu0 0.0
        %3086 = vmatprep.subr.mxu0 0.0
        %3087 = vmatpush1.xpose.msra.mxu0 0.0
        %3088 = vmatprep.subr.mxu0 0.0
        %3089 = vmatpush1.xpose.msra.mxu0 0.0
        %3090 = vmatprep.subr.mxu0 0.0
        %3091 = vmatpush1.xpose.msra.mxu0 0.0
        %3092 = vmatprep.subr.mxu0 0.0
        %3093 = vmatpush1.xpose.msra.mxu0 0.0
        %3094 = vmatprep.subr.mxu0 0.0
        %3095 = vmatpush1.xpose.msra.mxu0 0.0
        %3096 = vmatprep.subr.mxu0 0.0
        %3097 = vmatpush1.xpose.msra.mxu0 0.0
        %3098 = vmatprep.subr.mxu0 0.0
        %3099 = vmatpush1.xpose.msra.mxu0 0.0
        %3100 = vmatprep.subr.mxu0 0.0
        %3101 = vmatpush1.xpose.msra.mxu0 0.0
        %3102 = vmatprep.subr.mxu0 0.0
        %3103 = vmatpush1.xpose.msra.mxu0 0.0
        %3104 = vmatprep.subr.mxu0 0.0
        %3105 = vmatpush1.xpose.msra.mxu0 0.0
        %3106 = vmatprep.subr.mxu0 0.0
        %3107 = vmatpush1.xpose.msra.mxu0 0.0
        %3108 = vmatprep.subr.mxu0 0.0
        %3109 = vmatpush1.xpose.msra.mxu0 0.0
        %3110 = vmatprep.subr.mxu0 0.0
        %3111 = vmatpush1.xpose.msra.mxu0 0.0
        %3112 = vmatprep.subr.mxu0 0.0
        %3113 = vmatpush1.xpose.msra.mxu0 0.0
        %3114 = vmatprep.subr.mxu0 0.0
        %3115 = vmatpush1.xpose.msra.mxu0 0.0
        %3116 = vmatprep.subr.mxu0 0.0
        %3117 = vmatpush1.xpose.msra.mxu0 0.0
        %3118 = vmatprep.subr.mxu0 0.0
        %3119 = vmatpush1.xpose.msra.mxu0 0.0
        %3120 = vmatprep.subr.mxu0 0.0
        %3121 = vmatpush1.xpose.msra.mxu0 0.0
        %3122 = vmatprep.subr.mxu0 0.0
        %3123 = vmatpush1.xpose.msra.mxu0 0.0
        %3124 = vmatprep.subr.mxu0 0.0
        %3125 = vmatpush1.xpose.msra.mxu0 0.0
        %3126 = vmatprep.subr.mxu0 0.0
        %3127 = vmatpush1.xpose.msra.mxu0 0.0
        %3128 = vmatprep.subr.mxu0 0.0
        %3129 = vmatpush1.xpose.msra.mxu0 0.0
        %3130 = vmatprep.subr.mxu0 0.0
        %3131 = vmatpush1.xpose.msra.mxu0 0.0
        %3132 = vmatprep.subr.mxu0 0.0
        %3133 = vmatpush1.xpose.msra.mxu0 0.0
        %3134 = vmatprep.subr.mxu0 0.0
        %3135 = vmatpush1.xpose.msra.mxu0 0.0
        %3136 = vmatprep.subr.mxu0 0.0
        %3137 = vmatpush1.xpose.msra.mxu0 0.0
        %3138 = vmatprep.subr.mxu0 0.0
        %3139 = vmatpush1.xpose.msra.mxu0 0.0
        %3140 = vmatprep.subr.mxu0 0.0
        %3141 = vmatpush1.xpose.msra.mxu0 0.0
        %3142 = vmatprep.mubr.f32.mxu0 0.0
        %3143 = vmatmul.mubr.f32.gmra.mrb[0].mxu0 %v3074
        %v3144 = vpop.f32.mrb[0].mxu0
        %v3145 = vadd.f32 0.0, %v3144
        %v3146 = vpop.f32.mrb[0].mxu0
        %3147 = vdwg.mxu0
        %3148 = vrot.lane.b32.xlu0 %v555, 32
        %v3149 = vpop.permute.xlu0 %3148
        %3150 = vrot.lane.b32.xlu0 %v660, 32
        %v3151 = vpop.permute.xlu0 %3150
        %v3152 = vsel %vm801, %v3149, 0
        %v3154 = vsel %vm801, %v3151, 0
        %3156 = vmatprep.subr.mxu0 0.0
        %3157 = vmatpush1.xpose.msra.mxu0 %v3154
        %3158 = vmatprep.subr.mxu0 0.0
        %3159 = vmatpush1.xpose.msra.mxu0 0.0
        %3160 = vmatprep.subr.mxu0 0.0
        %3161 = vmatpush1.xpose.msra.mxu0 0.0
        %3162 = vmatprep.subr.mxu0 0.0
        %3163 = vmatpush1.xpose.msra.mxu0 0.0
        %3164 = vmatprep.subr.mxu0 0.0
        %3165 = vmatpush1.xpose.msra.mxu0 0.0
        %3166 = vmatprep.subr.mxu0 0.0
        %3167 = vmatpush1.xpose.msra.mxu0 0.0
        %3168 = vmatprep.subr.mxu0 0.0
        %3169 = vmatpush1.xpose.msra.mxu0 0.0
        %3170 = vmatprep.subr.mxu0 0.0
        %3171 = vmatpush1.xpose.msra.mxu0 0.0
        %3172 = vmatprep.subr.mxu0 0.0
        %3173 = vmatpush1.xpose.msra.mxu0 0.0
        %3174 = vmatprep.subr.mxu0 0.0
        %3175 = vmatpush1.xpose.msra.mxu0 0.0
        %3176 = vmatprep.subr.mxu0 0.0
        %3177 = vmatpush1.xpose.msra.mxu0 0.0
        %3178 = vmatprep.subr.mxu0 0.0
        %3179 = vmatpush1.xpose.msra.mxu0 0.0
        %3180 = vmatprep.subr.mxu0 0.0
        %3181 = vmatpush1.xpose.msra.mxu0 0.0
        %3182 = vmatprep.subr.mxu0 0.0
        %3183 = vmatpush1.xpose.msra.mxu0 0.0
        %3184 = vmatprep.subr.mxu0 0.0
        %3185 = vmatpush1.xpose.msra.mxu0 0.0
        %3186 = vmatprep.subr.mxu0 0.0
        %3187 = vmatpush1.xpose.msra.mxu0 0.0
        %3188 = vmatprep.subr.mxu0 0.0
        %3189 = vmatpush1.xpose.msra.mxu0 0.0
        %3190 = vmatprep.subr.mxu0 0.0
        %3191 = vmatpush1.xpose.msra.mxu0 0.0
        %3192 = vmatprep.subr.mxu0 0.0
        %3193 = vmatpush1.xpose.msra.mxu0 0.0
        %3194 = vmatprep.subr.mxu0 0.0
        %3195 = vmatpush1.xpose.msra.mxu0 0.0
        %3196 = vmatprep.subr.mxu0 0.0
        %3197 = vmatpush1.xpose.msra.mxu0 0.0
        %3198 = vmatprep.subr.mxu0 0.0
        %3199 = vmatpush1.xpose.msra.mxu0 0.0
        %3200 = vmatprep.subr.mxu0 0.0
        %3201 = vmatpush1.xpose.msra.mxu0 0.0
        %3202 = vmatprep.subr.mxu0 0.0
        %3203 = vmatpush1.xpose.msra.mxu0 0.0
        %3204 = vmatprep.subr.mxu0 0.0
        %3205 = vmatpush1.xpose.msra.mxu0 0.0
        %3206 = vmatprep.subr.mxu0 0.0
        %3207 = vmatpush1.xpose.msra.mxu0 0.0
        %3208 = vmatprep.subr.mxu0 0.0
        %3209 = vmatpush1.xpose.msra.mxu0 0.0
        %3210 = vmatprep.subr.mxu0 0.0
        %3211 = vmatpush1.xpose.msra.mxu0 0.0
        %3212 = vmatprep.subr.mxu0 0.0
        %3213 = vmatpush1.xpose.msra.mxu0 0.0
        %3214 = vmatprep.subr.mxu0 0.0
        %3215 = vmatpush1.xpose.msra.mxu0 0.0
        %3216 = vmatprep.subr.mxu0 0.0
        %3217 = vmatpush1.xpose.msra.mxu0 0.0
        %3218 = vmatprep.subr.mxu0 0.0
        %3219 = vmatpush1.xpose.msra.mxu0 0.0
        %3220 = vmatprep.mubr.f32.mxu0 0.0
        %3221 = vmatmul.mubr.f32.gmra.mrb[0].mxu0 %v3152
        %v3222 = vpop.f32.mrb[0].mxu0
        %v3223 = vadd.f32 0.0, %v3222
        %v3224 = vpop.f32.mrb[0].mxu0
        %3225 = vdwg.mxu0
        %3226 = vrot.lane.b32.xlu0 %v560, 32
        %v3227 = vpop.permute.xlu0 %3226
        %3228 = vrot.lane.b32.xlu0 %v665, 32
        %v3229 = vpop.permute.xlu0 %3228
        %v3230 = vsel %vm801, %v3227, 0
        %v3232 = vsel %vm801, %v3229, 0
        %3234 = vmatprep.subr.mxu0 0.0
        %3235 = vmatpush1.xpose.msra.mxu0 %v3232
        %3236 = vmatprep.subr.mxu0 0.0
        %3237 = vmatpush1.xpose.msra.mxu0 0.0
        %3238 = vmatprep.subr.mxu0 0.0
        %3239 = vmatpush1.xpose.msra.mxu0 0.0
        %3240 = vmatprep.subr.mxu0 0.0
        %3241 = vmatpush1.xpose.msra.mxu0 0.0
        %3242 = vmatprep.subr.mxu0 0.0
        %3243 = vmatpush1.xpose.msra.mxu0 0.0
        %3244 = vmatprep.subr.mxu0 0.0
        %3245 = vmatpush1.xpose.msra.mxu0 0.0
        %3246 = vmatprep.subr.mxu0 0.0
        %3247 = vmatpush1.xpose.msra.mxu0 0.0
        %3248 = vmatprep.subr.mxu0 0.0
        %3249 = vmatpush1.xpose.msra.mxu0 0.0
        %3250 = vmatprep.subr.mxu0 0.0
        %3251 = vmatpush1.xpose.msra.mxu0 0.0
        %3252 = vmatprep.subr.mxu0 0.0
        %3253 = vmatpush1.xpose.msra.mxu0 0.0
        %3254 = vmatprep.subr.mxu0 0.0
        %3255 = vmatpush1.xpose.msra.mxu0 0.0
        %3256 = vmatprep.subr.mxu0 0.0
        %3257 = vmatpush1.xpose.msra.mxu0 0.0
        %3258 = vmatprep.subr.mxu0 0.0
        %3259 = vmatpush1.xpose.msra.mxu0 0.0
        %3260 = vmatprep.subr.mxu0 0.0
        %3261 = vmatpush1.xpose.msra.mxu0 0.0
        %3262 = vmatprep.subr.mxu0 0.0
        %3263 = vmatpush1.xpose.msra.mxu0 0.0
        %3264 = vmatprep.subr.mxu0 0.0
        %3265 = vmatpush1.xpose.msra.mxu0 0.0
        %3266 = vmatprep.subr.mxu0 0.0
        %3267 = vmatpush1.xpose.msra.mxu0 0.0
        %3268 = vmatprep.subr.mxu0 0.0
        %3269 = vmatpush1.xpose.msra.mxu0 0.0
        %3270 = vmatprep.subr.mxu0 0.0
        %3271 = vmatpush1.xpose.msra.mxu0 0.0
        %3272 = vmatprep.subr.mxu0 0.0
        %3273 = vmatpush1.xpose.msra.mxu0 0.0
        %3274 = vmatprep.subr.mxu0 0.0
        %3275 = vmatpush1.xpose.msra.mxu0 0.0
        %3276 = vmatprep.subr.mxu0 0.0
        %3277 = vmatpush1.xpose.msra.mxu0 0.0
        %3278 = vmatprep.subr.mxu0 0.0
        %3279 = vmatpush1.xpose.msra.mxu0 0.0
        %3280 = vmatprep.subr.mxu0 0.0
        %3281 = vmatpush1.xpose.msra.mxu0 0.0
        %3282 = vmatprep.subr.mxu0 0.0
        %3283 = vmatpush1.xpose.msra.mxu0 0.0
        %3284 = vmatprep.subr.mxu0 0.0
        %3285 = vmatpush1.xpose.msra.mxu0 0.0
        %3286 = vmatprep.subr.mxu0 0.0
        %3287 = vmatpush1.xpose.msra.mxu0 0.0
        %3288 = vmatprep.subr.mxu0 0.0
        %3289 = vmatpush1.xpose.msra.mxu0 0.0
        %3290 = vmatprep.subr.mxu0 0.0
        %3291 = vmatpush1.xpose.msra.mxu0 0.0
        %3292 = vmatprep.subr.mxu0 0.0
        %3293 = vmatpush1.xpose.msra.mxu0 0.0
        %3294 = vmatprep.subr.mxu0 0.0
        %3295 = vmatpush1.xpose.msra.mxu0 0.0
        %3296 = vmatprep.subr.mxu0 0.0
        %3297 = vmatpush1.xpose.msra.mxu0 0.0
        %3298 = vmatprep.mubr.f32.mxu0 0.0
        %3299 = vmatmul.mubr.f32.gmra.mrb[0].mxu0 %v3230
        %v3300 = vpop.f32.mrb[0].mxu0
        %v3301 = vadd.f32 0.0, %v3300
        %v3302 = vpop.f32.mrb[0].mxu0
        %3303 = vdwg.mxu0
        %3304 = vrot.lane.b32.xlu0 %v565, 32
        %v3305 = vpop.permute.xlu0 %3304
        %3306 = vrot.lane.b32.xlu0 %v670, 32
        %v3307 = vpop.permute.xlu0 %3306
        %v3308 = vsel %vm801, %v3305, 0
        %v3310 = vsel %vm801, %v3307, 0
        %3312 = vmatprep.subr.mxu0 0.0
        %3313 = vmatpush1.xpose.msra.mxu0 %v3310
        %3314 = vmatprep.subr.mxu0 0.0
        %3315 = vmatpush1.xpose.msra.mxu0 0.0
        %3316 = vmatprep.subr.mxu0 0.0
        %3317 = vmatpush1.xpose.msra.mxu0 0.0
        %3318 = vmatprep.subr.mxu0 0.0
        %3319 = vmatpush1.xpose.msra.mxu0 0.0
        %3320 = vmatprep.subr.mxu0 0.0
        %3321 = vmatpush1.xpose.msra.mxu0 0.0
        %3322 = vmatprep.subr.mxu0 0.0
        %3323 = vmatpush1.xpose.msra.mxu0 0.0
        %3324 = vmatprep.subr.mxu0 0.0
        %3325 = vmatpush1.xpose.msra.mxu0 0.0
        %3326 = vmatprep.subr.mxu0 0.0
        %3327 = vmatpush1.xpose.msra.mxu0 0.0
        %3328 = vmatprep.subr.mxu0 0.0
        %3329 = vmatpush1.xpose.msra.mxu0 0.0
        %3330 = vmatprep.subr.mxu0 0.0
        %3331 = vmatpush1.xpose.msra.mxu0 0.0
        %3332 = vmatprep.subr.mxu0 0.0
        %3333 = vmatpush1.xpose.msra.mxu0 0.0
        %3334 = vmatprep.subr.mxu0 0.0
        %3335 = vmatpush1.xpose.msra.mxu0 0.0
        %3336 = vmatprep.subr.mxu0 0.0
        %3337 = vmatpush1.xpose.msra.mxu0 0.0
        %3338 = vmatprep.subr.mxu0 0.0
        %3339 = vmatpush1.xpose.msra.mxu0 0.0
        %3340 = vmatprep.subr.mxu0 0.0
        %3341 = vmatpush1.xpose.msra.mxu0 0.0
        %3342 = vmatprep.subr.mxu0 0.0
        %3343 = vmatpush1.xpose.msra.mxu0 0.0
        %3344 = vmatprep.subr.mxu0 0.0
        %3345 = vmatpush1.xpose.msra.mxu0 0.0
        %3346 = vmatprep.subr.mxu0 0.0
        %3347 = vmatpush1.xpose.msra.mxu0 0.0
        %3348 = vmatprep.subr.mxu0 0.0
        %3349 = vmatpush1.xpose.msra.mxu0 0.0
        %3350 = vmatprep.subr.mxu0 0.0
        %3351 = vmatpush1.xpose.msra.mxu0 0.0
        %3352 = vmatprep.subr.mxu0 0.0
        %3353 = vmatpush1.xpose.msra.mxu0 0.0
        %3354 = vmatprep.subr.mxu0 0.0
        %3355 = vmatpush1.xpose.msra.mxu0 0.0
        %3356 = vmatprep.subr.mxu0 0.0
        %3357 = vmatpush1.xpose.msra.mxu0 0.0
        %3358 = vmatprep.subr.mxu0 0.0
        %3359 = vmatpush1.xpose.msra.mxu0 0.0
        %3360 = vmatprep.subr.mxu0 0.0
        %3361 = vmatpush1.xpose.msra.mxu0 0.0
        %3362 = vmatprep.subr.mxu0 0.0
        %3363 = vmatpush1.xpose.msra.mxu0 0.0
        %3364 = vmatprep.subr.mxu0 0.0
        %3365 = vmatpush1.xpose.msra.mxu0 0.0
        %3366 = vmatprep.subr.mxu0 0.0
        %3367 = vmatpush1.xpose.msra.mxu0 0.0
        %3368 = vmatprep.subr.mxu0 0.0
        %3369 = vmatpush1.xpose.msra.mxu0 0.0
        %3370 = vmatprep.subr.mxu0 0.0
        %3371 = vmatpush1.xpose.msra.mxu0 0.0
        %3372 = vmatprep.subr.mxu0 0.0
        %3373 = vmatpush1.xpose.msra.mxu0 0.0
        %3374 = vmatprep.subr.mxu0 0.0
        %3375 = vmatpush1.xpose.msra.mxu0 0.0
        %3376 = vmatprep.mubr.f32.mxu0 0.0
        %3377 = vmatmul.mubr.f32.gmra.mrb[0].mxu0 %v3308
        %v3378 = vpop.f32.mrb[0].mxu0
        %v3379 = vadd.f32 0.0, %v3378
        %v3380 = vpop.f32.mrb[0].mxu0
        %3381 = vdwg.mxu0
        %v3382 = vsel %vm1106, %v3145, -inf
        %3383 = vmax.xlane.f32.xlu0 %v3382
        %v3384 = vpop.xlane.xlu0 %3383
        %v3385 = vsel %vm1106, %v3223, -inf
        %3386 = vmax.xlane.f32.xlu0 %v3385
        %v3387 = vpop.xlane.xlu0 %3386
        %v3388 = vsel %vm1106, %v3301, -inf
        %3389 = vmax.xlane.f32.xlu0 %v3388
        %v3390 = vpop.xlane.xlu0 %3389
        %v3391 = vsel %vm1106, %v3379, -inf
        %3392 = vmax.xlane.f32.xlu0 %v3391
        %v3393 = vpop.xlane.xlu0 %3392
        %v3394 = vsub.f32 %v3145, %v3384
        %v3395 = vsub.f32 %v3223, %v3387
        %v3396 = vsub.f32 %v3301, %v3390
        %v3397 = vsub.f32 %v3379, %v3393
        %v3398 = vmul.f32 %v3394, 1.442695
        %v3399 = vpow.pop %v3398
        %v3400 = vmul.f32 %v3395, 1.442695
        %v3401 = vpow.pop %v3400
        %v3402 = vmul.f32 %v3396, 1.442695
        %v3403 = vpow.pop %v3402
        %v3404 = vmul.f32 %v3397, 1.442695
        %v3405 = vpow.pop %v3404
        %v3406 = vsel %vm1106, %v3399, 0.0
        %3407 = vadd.xlane.f32.xlu0 %v3406
        %v3408 = vpop.xlane.xlu0 %3407
        %v3409 = vsel %vm1106, %v3401, 0.0
        %3410 = vadd.xlane.f32.xlu0 %v3409
        %v3411 = vpop.xlane.xlu0 %3410
        %v3412 = vsel %vm1106, %v3403, 0.0
        %3413 = vadd.xlane.f32.xlu0 %v3412
        %v3414 = vpop.xlane.xlu0 %3413
        %v3415 = vsel %vm1106, %v3405, 0.0
        %3416 = vadd.xlane.f32.xlu0 %v3415
        %v3417 = vpop.xlane.xlu0 %3416
        %v3418 = vrcp.pop %v3408
        %v3419 = vmul.f32 %v3399, %v3418
        %v3420 = vrcp.pop %v3411
        %v3421 = vmul.f32 %v3401, %v3420
        %v3422 = vrcp.pop %v3414
        %v3423 = vmul.f32 %v3403, %v3422
        %v3424 = vrcp.pop %v3417
        %v3425 = vmul.f32 %v3405, %v3424
        %3426 = vrot.lane.b32.xlu0 %v760, 32
        %v3427 = vpop.permute.xlu0 %3426
        %v3430 = vsel %vm1106, %v3419, 0
        %3432 = vmatprep.subr.mxu0 0.0
        %3433 = vmatpush1.msra.mxu0 %v3427
        %3434 = vmatprep.subr.mxu0 0.0
        %3435 = vmatpush1.msra.mxu0 0.0
        %3436 = vmatprep.subr.mxu0 0.0
        %3437 = vmatpush1.msra.mxu0 0.0
        %3438 = vmatprep.subr.mxu0 0.0
        %3439 = vmatpush1.msra.mxu0 0.0
        %3440 = vmatprep.subr.mxu0 0.0
        %3441 = vmatpush1.msra.mxu0 0.0
        %3442 = vmatprep.subr.mxu0 0.0
        %3443 = vmatpush1.msra.mxu0 0.0
        %3444 = vmatprep.subr.mxu0 0.0
        %3445 = vmatpush1.msra.mxu0 0.0
        %3446 = vmatprep.subr.mxu0 0.0
        %3447 = vmatpush1.msra.mxu0 0.0
        %3448 = vmatprep.subr.mxu0 0.0
        %3449 = vmatpush1.msra.mxu0 0.0
        %3450 = vmatprep.subr.mxu0 0.0
        %3451 = vmatpush1.msra.mxu0 0.0
        %3452 = vmatprep.subr.mxu0 0.0
        %3453 = vmatpush1.msra.mxu0 0.0
        %3454 = vmatprep.subr.mxu0 0.0
        %3455 = vmatpush1.msra.mxu0 0.0
        %3456 = vmatprep.subr.mxu0 0.0
        %3457 = vmatpush1.msra.mxu0 0.0
        %3458 = vmatprep.subr.mxu0 0.0
        %3459 = vmatpush1.msra.mxu0 0.0
        %3460 = vmatprep.subr.mxu0 0.0
        %3461 = vmatpush1.msra.mxu0 0.0
        %3462 = vmatprep.subr.mxu0 0.0
        %3463 = vmatpush1.msra.mxu0 0.0
        %3464 = vmatprep.subr.mxu0 0.0
        %3465 = vmatpush1.msra.mxu0 0.0
        %3466 = vmatprep.subr.mxu0 0.0
        %3467 = vmatpush1.msra.mxu0 0.0
        %3468 = vmatprep.subr.mxu0 0.0
        %3469 = vmatpush1.msra.mxu0 0.0
        %3470 = vmatprep.subr.mxu0 0.0
        %3471 = vmatpush1.msra.mxu0 0.0
        %3472 = vmatprep.subr.mxu0 0.0
        %3473 = vmatpush1.msra.mxu0 0.0
        %3474 = vmatprep.subr.mxu0 0.0
        %3475 = vmatpush1.msra.mxu0 0.0
        %3476 = vmatprep.subr.mxu0 0.0
        %3477 = vmatpush1.msra.mxu0 0.0
        %3478 = vmatprep.subr.mxu0 0.0
        %3479 = vmatpush1.msra.mxu0 0.0
        %3480 = vmatprep.subr.mxu0 0.0
        %3481 = vmatpush1.msra.mxu0 0.0
        %3482 = vmatprep.subr.mxu0 0.0
        %3483 = vmatpush1.msra.mxu0 0.0
        %3484 = vmatprep.subr.mxu0 0.0
        %3485 = vmatpush1.msra.mxu0 0.0
        %3486 = vmatprep.subr.mxu0 0.0
        %3487 = vmatpush1.msra.mxu0 0.0
        %3488 = vmatprep.subr.mxu0 0.0
        %3489 = vmatpush1.msra.mxu0 0.0
        %3490 = vmatprep.subr.mxu0 0.0
        %3491 = vmatpush1.msra.mxu0 0.0
        %3492 = vmatprep.subr.mxu0 0.0
        %3493 = vmatpush1.msra.mxu0 0.0
        %3494 = vmatprep.subr.mxu0 0.0
        %3495 = vmatpush1.msra.mxu0 0.0
        %3496 = vmatprep.mubr.f32.mxu0 0.0
        %3497 = vmatmul.mubr.f32.gmra.mrb[0].mxu0 %v3430
        %v3498 = vpop.f32.mrb[0].mxu0
        %v3499 = vadd.f32 0.0, %v3498
        %v3500 = vpop.f32.mrb[0].mxu0
        %3501 = vdwg.mxu0
        %3502 = vrot.lane.b32.xlu0 %v765, 32
        %v3503 = vpop.permute.xlu0 %3502
        %v3506 = vsel %vm1106, %v3421, 0
        %3508 = vmatprep.subr.mxu0 0.0
        %3509 = vmatpush1.msra.mxu0 %v3503
        %3510 = vmatprep.subr.mxu0 0.0
        %3511 = vmatpush1.msra.mxu0 0.0
        %3512 = vmatprep.subr.mxu0 0.0
        %3513 = vmatpush1.msra.mxu0 0.0
        %3514 = vmatprep.subr.mxu0 0.0
        %3515 = vmatpush1.msra.mxu0 0.0
        %3516 = vmatprep.subr.mxu0 0.0
        %3517 = vmatpush1.msra.mxu0 0.0
        %3518 = vmatprep.subr.mxu0 0.0
        %3519 = vmatpush1.msra.mxu0 0.0
        %3520 = vmatprep.subr.mxu0 0.0
        %3521 = vmatpush1.msra.mxu0 0.0
        %3522 = vmatprep.subr.mxu0 0.0
        %3523 = vmatpush1.msra.mxu0 0.0
        %3524 = vmatprep.subr.mxu0 0.0
        %3525 = vmatpush1.msra.mxu0 0.0
        %3526 = vmatprep.subr.mxu0 0.0
        %3527 = vmatpush1.msra.mxu0 0.0
        %3528 = vmatprep.subr.mxu0 0.0
        %3529 = vmatpush1.msra.mxu0 0.0
        %3530 = vmatprep.subr.mxu0 0.0
        %3531 = vmatpush1.msra.mxu0 0.0
        %3532 = vmatprep.subr.mxu0 0.0
        %3533 = vmatpush1.msra.mxu0 0.0
        %3534 = vmatprep.subr.mxu0 0.0
        %3535 = vmatpush1.msra.mxu0 0.0
        %3536 = vmatprep.subr.mxu0 0.0
        %3537 = vmatpush1.msra.mxu0 0.0
        %3538 = vmatprep.subr.mxu0 0.0
        %3539 = vmatpush1.msra.mxu0 0.0
        %3540 = vmatprep.subr.mxu0 0.0
        %3541 = vmatpush1.msra.mxu0 0.0
        %3542 = vmatprep.subr.mxu0 0.0
        %3543 = vmatpush1.msra.mxu0 0.0
        %3544 = vmatprep.subr.mxu0 0.0
        %3545 = vmatpush1.msra.mxu0 0.0
        %3546 = vmatprep.subr.mxu0 0.0
        %3547 = vmatpush1.msra.mxu0 0.0
        %3548 = vmatprep.subr.mxu0 0.0
        %3549 = vmatpush1.msra.mxu0 0.0
        %3550 = vmatprep.subr.mxu0 0.0
        %3551 = vmatpush1.msra.mxu0 0.0
        %3552 = vmatprep.subr.mxu0 0.0
        %3553 = vmatpush1.msra.mxu0 0.0
        %3554 = vmatprep.subr.mxu0 0.0
        %3555 = vmatpush1.msra.mxu0 0.0
        %3556 = vmatprep.subr.mxu0 0.0
        %3557 = vmatpush1.msra.mxu0 0.0
        %3558 = vmatprep.subr.mxu0 0.0
        %3559 = vmatpush1.msra.mxu0 0.0
        %3560 = vmatprep.subr.mxu0 0.0
        %3561 = vmatpush1.msra.mxu0 0.0
        %3562 = vmatprep.subr.mxu0 0.0
        %3563 = vmatpush1.msra.mxu0 0.0
        %3564 = vmatprep.subr.mxu0 0.0
        %3565 = vmatpush1.msra.mxu0 0.0
        %3566 = vmatprep.subr.mxu0 0.0
        %3567 = vmatpush1.msra.mxu0 0.0
        %3568 = vmatprep.subr.mxu0 0.0
        %3569 = vmatpush1.msra.mxu0 0.0
        %3570 = vmatprep.subr.mxu0 0.0
        %3571 = vmatpush1.msra.mxu0 0.0
        %3572 = vmatprep.mubr.f32.mxu0 0.0
        %3573 = vmatmul.mubr.f32.gmra.mrb[0].mxu0 %v3506
        %v3574 = vpop.f32.mrb[0].mxu0
        %v3575 = vadd.f32 0.0, %v3574
        %v3576 = vpop.f32.mrb[0].mxu0
        %3577 = vdwg.mxu0
        %3578 = vrot.lane.b32.xlu0 %v770, 32
        %v3579 = vpop.permute.xlu0 %3578
        %v3582 = vsel %vm1106, %v3423, 0
        %3584 = vmatprep.subr.mxu0 0.0
        %3585 = vmatpush1.msra.mxu0 %v3579
        %3586 = vmatprep.subr.mxu0 0.0
        %3587 = vmatpush1.msra.mxu0 0.0
        %3588 = vmatprep.subr.mxu0 0.0
        %3589 = vmatpush1.msra.mxu0 0.0
        %3590 = vmatprep.subr.mxu0 0.0
        %3591 = vmatpush1.msra.mxu0 0.0
        %3592 = vmatprep.subr.mxu0 0.0
        %3593 = vmatpush1.msra.mxu0 0.0
        %3594 = vmatprep.subr.mxu0 0.0
        %3595 = vmatpush1.msra.mxu0 0.0
        %3596 = vmatprep.subr.mxu0 0.0
        %3597 = vmatpush1.msra.mxu0 0.0
        %3598 = vmatprep.subr.mxu0 0.0
        %3599 = vmatpush1.msra.mxu0 0.0
        %3600 = vmatprep.subr.mxu0 0.0
        %3601 = vmatpush1.msra.mxu0 0.0
        %3602 = vmatprep.subr.mxu0 0.0
        %3603 = vmatpush1.msra.mxu0 0.0
        %3604 = vmatprep.subr.mxu0 0.0
        %3605 = vmatpush1.msra.mxu0 0.0
        %3606 = vmatprep.subr.mxu0 0.0
        %3607 = vmatpush1.msra.mxu0 0.0
        %3608 = vmatprep.subr.mxu0 0.0
        %3609 = vmatpush1.msra.mxu0 0.0
        %3610 = vmatprep.subr.mxu0 0.0
        %3611 = vmatpush1.msra.mxu0 0.0
        %3612 = vmatprep.subr.mxu0 0.0
        %3613 = vmatpush1.msra.mxu0 0.0
        %3614 = vmatprep.subr.mxu0 0.0
        %3615 = vmatpush1.msra.mxu0 0.0
        %3616 = vmatprep.subr.mxu0 0.0
        %3617 = vmatpush1.msra.mxu0 0.0
        %3618 = vmatprep.subr.mxu0 0.0
        %3619 = vmatpush1.msra.mxu0 0.0
        %3620 = vmatprep.subr.mxu0 0.0
        %3621 = vmatpush1.msra.mxu0 0.0
        %3622 = vmatprep.subr.mxu0 0.0
        %3623 = vmatpush1.msra.mxu0 0.0
        %3624 = vmatprep.subr.mxu0 0.0
        %3625 = vmatpush1.msra.mxu0 0.0
        %3626 = vmatprep.subr.mxu0 0.0
        %3627 = vmatpush1.msra.mxu0 0.0
        %3628 = vmatprep.subr.mxu0 0.0
        %3629 = vmatpush1.msra.mxu0 0.0
        %3630 = vmatprep.subr.mxu0 0.0
        %3631 = vmatpush1.msra.mxu0 0.0
        %3632 = vmatprep.subr.mxu0 0.0
        %3633 = vmatpush1.msra.mxu0 0.0
        %3634 = vmatprep.subr.mxu0 0.0
        %3635 = vmatpush1.msra.mxu0 0.0
        %3636 = vmatprep.subr.mxu0 0.0
        %3637 = vmatpush1.msra.mxu0 0.0
        %3638 = vmatprep.subr.mxu0 0.0
        %3639 = vmatpush1.msra.mxu0 0.0
        %3640 = vmatprep.subr.mxu0 0.0
        %3641 = vmatpush1.msra.mxu0 0.0
        %3642 = vmatprep.subr.mxu0 0.0
        %3643 = vmatpush1.msra.mxu0 0.0
        %3644 = vmatprep.subr.mxu0 0.0
        %3645 = vmatpush1.msra.mxu0 0.0
        %3646 = vmatprep.subr.mxu0 0.0
        %3647 = vmatpush1.msra.mxu0 0.0
        %3648 = vmatprep.mubr.f32.mxu0 0.0
        %3649 = vmatmul.mubr.f32.gmra.mrb[0].mxu0 %v3582
        %v3650 = vpop.f32.mrb[0].mxu0
        %v3651 = vadd.f32 0.0, %v3650
        %v3652 = vpop.f32.mrb[0].mxu0
        %3653 = vdwg.mxu0
        %3654 = vrot.lane.b32.xlu0 %v775, 32
        %v3655 = vpop.permute.xlu0 %3654
        %v3658 = vsel %vm1106, %v3425, 0
        %3660 = vmatprep.subr.mxu0 0.0
        %3661 = vmatpush1.msra.mxu0 %v3655
        %3662 = vmatprep.subr.mxu0 0.0
        %3663 = vmatpush1.msra.mxu0 0.0
        %3664 = vmatprep.subr.mxu0 0.0
        %3665 = vmatpush1.msra.mxu0 0.0
        %3666 = vmatprep.subr.mxu0 0.0
        %3667 = vmatpush1.msra.mxu0 0.0
        %3668 = vmatprep.subr.mxu0 0.0
        %3669 = vmatpush1.msra.mxu0 0.0
        %3670 = vmatprep.subr.mxu0 0.0
        %3671 = vmatpush1.msra.mxu0 0.0
        %3672 = vmatprep.subr.mxu0 0.0
        %3673 = vmatpush1.msra.mxu0 0.0
        %3674 = vmatprep.subr.mxu0 0.0
        %3675 = vmatpush1.msra.mxu0 0.0
        %3676 = vmatprep.subr.mxu0 0.0
        %3677 = vmatpush1.msra.mxu0 0.0
        %3678 = vmatprep.subr.mxu0 0.0
        %3679 = vmatpush1.msra.mxu0 0.0
        %3680 = vmatprep.subr.mxu0 0.0
        %3681 = vmatpush1.msra.mxu0 0.0
        %3682 = vmatprep.subr.mxu0 0.0
        %3683 = vmatpush1.msra.mxu0 0.0
        %3684 = vmatprep.subr.mxu0 0.0
        %3685 = vmatpush1.msra.mxu0 0.0
        %3686 = vmatprep.subr.mxu0 0.0
        %3687 = vmatpush1.msra.mxu0 0.0
        %3688 = vmatprep.subr.mxu0 0.0
        %3689 = vmatpush1.msra.mxu0 0.0
        %3690 = vmatprep.subr.mxu0 0.0
        %3691 = vmatpush1.msra.mxu0 0.0
        %3692 = vmatprep.subr.mxu0 0.0
        %3693 = vmatpush1.msra.mxu0 0.0
        %3694 = vmatprep.subr.mxu0 0.0
        %3695 = vmatpush1.msra.mxu0 0.0
        %3696 = vmatprep.subr.mxu0 0.0
        %3697 = vmatpush1.msra.mxu0 0.0
        %3698 = vmatprep.subr.mxu0 0.0
        %3699 = vmatpush1.msra.mxu0 0.0
        %3700 = vmatprep.subr.mxu0 0.0
        %3701 = vmatpush1.msra.mxu0 0.0
        %3702 = vmatprep.subr.mxu0 0.0
        %3703 = vmatpush1.msra.mxu0 0.0
        %3704 = vmatprep.subr.mxu0 0.0
        %3705 = vmatpush1.msra.mxu0 0.0
        %3706 = vmatprep.subr.mxu0 0.0
        %3707 = vmatpush1.msra.mxu0 0.0
        %3708 = vmatprep.subr.mxu0 0.0
        %3709 = vmatpush1.msra.mxu0 0.0
        %3710 = vmatprep.subr.mxu0 0.0
        %3711 = vmatpush1.msra.mxu0 0.0
        %3712 = vmatprep.subr.mxu0 0.0
        %3713 = vmatpush1.msra.mxu0 0.0
        %3714 = vmatprep.subr.mxu0 0.0
        %3715 = vmatpush1.msra.mxu0 0.0
        %3716 = vmatprep.subr.mxu0 0.0
        %3717 = vmatpush1.msra.mxu0 0.0
        %3718 = vmatprep.subr.mxu0 0.0
        %3719 = vmatpush1.msra.mxu0 0.0
        %3720 = vmatprep.subr.mxu0 0.0
        %3721 = vmatpush1.msra.mxu0 0.0
        %3722 = vmatprep.subr.mxu0 0.0
        %3723 = vmatpush1.msra.mxu0 0.0
        %3724 = vmatprep.mubr.f32.mxu0 0.0
        %3725 = vmatmul.mubr.f32.gmra.mrb[0].mxu0 %v3658
        %v3726 = vpop.f32.mrb[0].mxu0
        %v3727 = vadd.f32 0.0, %v3726
        %v3728 = vpop.f32.mrb[0].mxu0
        %3729 = vdwg.mxu0
        %v3731 = vsel %vm801, %v3499, 0
        %v3734 = vsel %vm801, %v3575, 0
        %v3737 = vsel %vm801, %v3651, 0
        %v3740 = vsel %vm801, %v3727, 0
        %3742 = vmatprep.subr.mxu0 0.0
        %3743 = vmatpush1.msra.mxu0 %v790
        %3744 = vmatprep.subr.mxu0 0.0
        %3745 = vmatpush1.msra.mxu0 %v791
        %3746 = vmatprep.subr.mxu0 0.0
        %3747 = vmatpush1.msra.mxu0 %v792
        %3748 = vmatprep.subr.mxu0 0.0
        %3749 = vmatpush1.msra.mxu0 %v793
        %3750 = vmatprep.subr.mxu0 0.0
        %3751 = vmatpush1.msra.mxu0 0.0
        %3752 = vmatprep.subr.mxu0 0.0
        %3753 = vmatpush1.msra.mxu0 0.0
        %3754 = vmatprep.subr.mxu0 0.0
        %3755 = vmatpush1.msra.mxu0 0.0
        %3756 = vmatprep.subr.mxu0 0.0
        %3757 = vmatpush1.msra.mxu0 0.0
        %3758 = vmatprep.subr.mxu0 0.0
        %3759 = vmatpush1.msra.mxu0 0.0
        %3760 = vmatprep.subr.mxu0 0.0
        %3761 = vmatpush1.msra.mxu0 0.0
        %3762 = vmatprep.subr.mxu0 0.0
        %3763 = vmatpush1.msra.mxu0 0.0
        %3764 = vmatprep.subr.mxu0 0.0
        %3765 = vmatpush1.msra.mxu0 0.0
        %3766 = vmatprep.subr.mxu0 0.0
        %3767 = vmatpush1.msra.mxu0 0.0
        %3768 = vmatprep.subr.mxu0 0.0
        %3769 = vmatpush1.msra.mxu0 0.0
        %3770 = vmatprep.subr.mxu0 0.0
        %3771 = vmatpush1.msra.mxu0 0.0
        %3772 = vmatprep.subr.mxu0 0.0
        %3773 = vmatpush1.msra.mxu0 0.0
        %3774 = vmatprep.subr.mxu0 0.0
        %3775 = vmatpush1.msra.mxu0 0.0
        %3776 = vmatprep.subr.mxu0 0.0
        %3777 = vmatpush1.msra.mxu0 0.0
        %3778 = vmatprep.subr.mxu0 0.0
        %3779 = vmatpush1.msra.mxu0 0.0
        %3780 = vmatprep.subr.mxu0 0.0
        %3781 = vmatpush1.msra.mxu0 0.0
        %3782 = vmatprep.subr.mxu0 0.0
        %3783 = vmatpush1.msra.mxu0 0.0
        %3784 = vmatprep.subr.mxu0 0.0
        %3785 = vmatpush1.msra.mxu0 0.0
        %3786 = vmatprep.subr.mxu0 0.0
        %3787 = vmatpush1.msra.mxu0 0.0
        %3788 = vmatprep.subr.mxu0 0.0
        %3789 = vmatpush1.msra.mxu0 0.0
        %3790 = vmatprep.subr.mxu0 0.0
        %3791 = vmatpush1.msra.mxu0 0.0
        %3792 = vmatprep.subr.mxu0 0.0
        %3793 = vmatpush1.msra.mxu0 0.0
        %3794 = vmatprep.subr.mxu0 0.0
        %3795 = vmatpush1.msra.mxu0 0.0
        %3796 = vmatprep.subr.mxu0 0.0
        %3797 = vmatpush1.msra.mxu0 0.0
        %3798 = vmatprep.subr.mxu0 0.0
        %3799 = vmatpush1.msra.mxu0 0.0
        %3800 = vmatprep.subr.mxu0 0.0
        %3801 = vmatpush1.msra.mxu0 0.0
        %3802 = vmatprep.subr.mxu0 0.0
        %3803 = vmatpush1.msra.mxu0 0.0
        %3804 = vmatprep.subr.mxu0 0.0
        %3805 = vmatpush1.msra.mxu0 0.0
        %3806 = vmatprep.mubr.f32.mxu0 0.0
        %3807 = vmatmul.mubr.f32.gmra.mrb[0].mxu0 %v3731
        %v3808 = vpop.f32.mrb[0].mxu0
        %v3809 = vadd.f32 0.0, %v3808
        %v3810 = vpop.f32.mrb[0].mxu0
        %3811 = vmatprep.mubr.f32.mxu0 0.0
        %3812 = vmatmul.mubr.f32.gmra.mrb[0].mxu0 %v3734
        %v3813 = vpop.f32.mrb[0].mxu0
        %v3814 = vadd.f32 0.0, %v3813
        %v3815 = vpop.f32.mrb[0].mxu0
        %3816 = vmatprep.mubr.f32.mxu0 0.0
        %3817 = vmatmul.mubr.f32.gmra.mrb[0].mxu0 %v3737
        %v3818 = vpop.f32.mrb[0].mxu0
        %v3819 = vadd.f32 0.0, %v3818
        %v3820 = vpop.f32.mrb[0].mxu0
        %3821 = vmatprep.mubr.f32.mxu0 0.0
        %3822 = vmatmul.mubr.f32.gmra.mrb[0].mxu0 %v3740
        %v3823 = vpop.f32.mrb[0].mxu0
        %v3824 = vadd.f32 0.0, %v3823
        %v3825 = vpop.f32.mrb[0].mxu0
        %3826 = vdwg.mxu0
        %v3827 = vadd.f32 %v3066, %v3809
        %v3828 = vadd.f32 %v3067, %v3814
        %v3829 = vadd.f32 %v3068, %v3819
        %v3830 = vadd.f32 %v3069, %v3824
        %3831 = vst [vmem:[%s458] sm:$0xff] %v3827
        %3832 = vst [vmem:[%s458 + $0x8] sm:$0xff] %v3828
        %3833 = vst [vmem:[%s458 + $0x10] sm:$0xff] %v3829
        %3834 = vst [vmem:[%s458 + $0x18] sm:$0xff] %v3830
        %s3835 = sand.u32 %s221, 1
        %s3836 = scalar_lea.sflag [#allocation4], %s3835
        %s3837 = sand.u32 %s221, 1
        %s3838 = smul.addr %s3837, 32
        %s3839 = scalar_lea.vmem [#allocation14], %s3838
        // Predicated region
        $region81: #{tpu_custom_call.1} parent=51 // pred_check
          %p3840 = pneg %p231
        $region82: #{tpu_custom_call.1} parent=51 // pred_check_branch
          %3842 = sbr.rel (%p3840) target = $region84
        $region83: #{tpu_custom_call.1} parent=51 // pred_region
          %s3843 = smul.u32 4, %s30
          %s3845 = ssub.s32 512, 512
          %3846 = vsyncadd %s3836, %s3845
          %s3847 = smul.addr %s3843, 128
          %s3848 = scalar_lea.hbm %s8, %s3847
          %s3849 = sshll.u32 %s3839, 4
          %s3850 = int_to_ptr.vmem [resolvable:$true] %s3849
          %3855 = dma.vmem_to_hbm [thread:$0]  %s3850, 512, %s3848, %s3836, 128, 128, 8
        $region84: #{tpu_custom_call.1} parent=51 // pred_fallthru
          _
      $region52: #{tpu_custom_call.1} parent=5 // pred_fallthru
        _
      %p3856 = scmp.le.s32.totalorder 2, %s25
      // Predicated region
      $region85: #{tpu_custom_call.1} parent=5 // pred_check
        %p3857 = pneg %p3856
      $region86: #{tpu_custom_call.1} parent=5 // pred_check_branch
        %3859 = sbr.rel (%p3857) target = $region88
      $region87: #{tpu_custom_call.1} parent=5 // pred_region
        %s3860 = ssub.s32 %s25, 2
        // Predicated region
        $region89: #{tpu_custom_call.1} parent=87 // pred_check
          %p3861 = pneg %p237
        $region90: #{tpu_custom_call.1} parent=87 // pred_check_branch
          %3863 = sbr.rel (%p3861) target = $region92
        $region91: #{tpu_custom_call.1} parent=87 // pred_region
          %s3864 = sand.u32 %s222, 1
          %s3865 = scalar_lea.sflag [#allocation4], %s3864
          %s3866 = sand.u32 %s222, 1
          %s3867 = smul.addr %s3866, 32
          %s3868 = scalar_lea.vmem [#allocation14], %s3867
          %3869 = dma.done %s3865, 512
        $region92: #{tpu_custom_call.1} parent=87 // pred_fallthru
          _
      $region88: #{tpu_custom_call.1} parent=5 // pred_fallthru
        _
    $region6: #{tpu_custom_call.1} parent=1 // loop_footer
      %s29 = sadd.s32 1, %s25
    $region7: #{tpu_custom_call.1} parent=1 // loop_footer_branch
      %24 = sbr.rel target = $region3
    $region8: #{tpu_custom_call.1} parent=1 // loop_exit
      _
    %3870 = vsyncpa [#allocation3], 1
    %s3871 = scalar_lea.sflag [#allocation3], 1
    %3872 = vsyncpa %s3871, 1
    %3873 = vsyncpa [#allocation6], 1
    %s3874 = scalar_lea.sflag [#allocation6], 1
    %3875 = vsyncpa %s3874, 1
    %3876 = vsyncpa [#allocation9], 1
    %3877 = vsyncpa [#allocation12], 1
    %3878 = vsyncpa [#allocation4], 1
    %s3879 = scalar_lea.sflag [#allocation4], 1
    %3880 = vsyncpa %s3879, 1

</llo_original>
